<compile_context>
chip_gen: v7x
topology: tpu7x:2x2x1
jax: 0.10.0
libtpu: 0.0.40
codegen_flags: <defaults>
</compile_context>

<pallas_src>
import math
from functools import partial

import jax
import jax.numpy as jnp
from jax.experimental import pallas as pl
from jax.experimental.pallas import tpu as pltpu


# ----------------------------------------------------------------------------
# Tiling helper
# ----------------------------------------------------------------------------
def _pick_tile(dim, cap, step):
    """Largest divisor of `dim` that is a multiple of `step` and <= cap, else full dim."""
    if dim <= cap:
        return dim
    t = (cap // step) * step
    while t >= step:
        if dim % t == 0:
            return t
        t -= step
    return dim


# ----------------------------------------------------------------------------
# Linear: tiled matmul + bias (+ optional fused LayerNorm prologue / residual)
# bf16 operands on the MXU, f32 accumulation, bf16 output.
# ----------------------------------------------------------------------------
def _linear_kernel(*refs, nk, has_residual, has_norm, eps):
    idx = 0
    x_ref = refs[idx]; idx += 1
    w_ref = refs[idx]; idx += 1
    b_ref = refs[idx]; idx += 1
    g_ref = bt_ref = r_ref = None
    if has_norm:
        g_ref = refs[idx]; idx += 1
        bt_ref = refs[idx]; idx += 1
    if has_residual:
        r_ref = refs[idx]; idx += 1
    o_ref = refs[idx]
    acc_ref = refs[idx + 1]

    k_id = pl.program_id(2)

    if has_norm:
        # OpenNMT LayerNorm: (x - mean) / (std + eps) * g + b, unbiased std.
        x = x_ref[...].astype(jnp.float32)
        d = x.shape[-1]
        mu = jnp.mean(x, axis=-1, keepdims=True)
        c = x - mu
        var = jnp.sum(c * c, axis=-1, keepdims=True) * (1.0 / (d - 1))
        inv = pl.reciprocal(jnp.sqrt(var) + eps)
        xin = (g_ref[...] * c * inv + bt_ref[...]).astype(jnp.bfloat16)
    else:
        xin = x_ref[...]

    part = jnp.dot(xin, w_ref[...], preferred_element_type=jnp.float32)

    def _finish(acc):
        y = acc + b_ref[...]
        if has_residual:
            y = y + r_ref[...].astype(jnp.float32)
        o_ref[...] = y.astype(o_ref.dtype)

    if nk == 1:
        _finish(part)
    else:
        @pl.when(k_id == 0)
        def _():
            acc_ref[...] = jnp.zeros_like(acc_ref)

        acc_ref[...] += part

        @pl.when(k_id == nk - 1)
        def _():
            _finish(acc_ref[...])


def linear(x, w, b, residual=None, norm=None, eps=1e-6):
    """x:[M,K] bf16 @ w:[K,N] bf16 + b:[N] f32 (+opt LN(x), +opt residual) -> [M,N] bf16."""
    M, K = x.shape
    N = w.shape[1]
    tm = _pick_tile(M, 256, 8)
    tn = _pick_tile(N, 512, 128)
    tk = K if norm is not None else _pick_tile(K, 512, 128)   # LN needs full rows
    nm, nn, nk = M // tm, N // tn, K // tk

    args = [x, w, b.reshape(1, N)]
    in_specs = [
        pl.BlockSpec((tm, tk), lambda i, j, k: (i, k)),
        pl.BlockSpec((tk, tn), lambda i, j, k: (k, j)),
        pl.BlockSpec((1, tn), lambda i, j, k: (0, j)),
    ]
    if norm is not None:
        g, bt = norm
        args += [g.reshape(1, K), bt.reshape(1, K)]
        in_specs += [pl.BlockSpec((1, K), lambda i, j, k: (0, 0)),
                     pl.BlockSpec((1, K), lambda i, j, k: (0, 0))]
    if residual is not None:
        args.append(residual)
        in_specs.append(pl.BlockSpec((tm, tn), lambda i, j, k: (i, j)))

    return pl.pallas_call(
        partial(_linear_kernel, nk=nk, has_residual=residual is not None,
                has_norm=norm is not None, eps=eps),
        out_shape=jax.ShapeDtypeStruct((M, N), jnp.bfloat16),
        grid=(nm, nn, nk),
        in_specs=in_specs,
        out_specs=pl.BlockSpec((tm, tn), lambda i, j, k: (i, j)),
        scratch_shapes=[pltpu.VMEM((tm, tn), jnp.float32)],
        compiler_params=pltpu.CompilerParams(
            dimension_semantics=("parallel", "parallel", "arbitrary")),
        cost_estimate=pl.CostEstimate(
            flops=2 * M * N * K, transcendentals=0,
            bytes_accessed=2 * (M * K + K * N + 2 * M * N)),
    )(*args)


# ----------------------------------------------------------------------------
# Standalone LayerNorm (only used for the final decoder norm), f32 output.
# ----------------------------------------------------------------------------
def _layernorm_kernel(x_ref, g_ref, b_ref, o_ref, *, eps):
    x = x_ref[...].astype(jnp.float32)
    d = x.shape[-1]
    mu = jnp.mean(x, axis=-1, keepdims=True)
    c = x - mu
    var = jnp.sum(c * c, axis=-1, keepdims=True) * (1.0 / (d - 1))  # unbiased
    inv = pl.reciprocal(jnp.sqrt(var) + eps)
    o_ref[...] = (g_ref[...] * c * inv + b_ref[...]).astype(o_ref.dtype)


def layer_norm(x, gamma, beta, eps=1e-6):
    shape = x.shape
    D = shape[-1]
    x2 = x.reshape(-1, D)
    M = x2.shape[0]
    tm = _pick_tile(M, 256, 8)
    out = pl.pallas_call(
        partial(_layernorm_kernel, eps=eps),
        out_shape=jax.ShapeDtypeStruct((M, D), jnp.float32),
        grid=(M // tm,),
        in_specs=[
            pl.BlockSpec((tm, D), lambda i: (i, 0)),
            pl.BlockSpec((1, D), lambda i: (0, 0)),
            pl.BlockSpec((1, D), lambda i: (0, 0)),
        ],
        out_specs=pl.BlockSpec((tm, D), lambda i: (i, 0)),
        compiler_params=pltpu.CompilerParams(dimension_semantics=("parallel",)),
    )(x2, gamma.reshape(1, D), beta.reshape(1, D))
    return out.reshape(shape)


# ----------------------------------------------------------------------------
# Multi-head attention: grid (B, Lq//tq), mask built in-kernel from pad vector,
# per-head MXU matmuls, single lane-dense [tq, D] bf16 context store.
# ----------------------------------------------------------------------------
def _attention_core(q, k, v, masked, heads, scale, a_ref):
    """q:[tq,D] k/v:[Lk,D] bf16, masked:[tq,Lk] bool -> ctx [tq,D] f32."""
    D = q.shape[-1]
    Dh = D // heads
    ctxs = []
    for h in range(heads):
        lo = h * Dh
        s = jax.lax.dot_general(
            q[:, lo:lo + Dh], k[:, lo:lo + Dh],
            (((1,), (1,)), ((), ())),
            preferred_element_type=jnp.float32) * scale
        s = jnp.where(masked, jnp.float32(-1e18), s)         # masked_fill
        smax = jnp.max(s, axis=-1, keepdims=True)
        p = jnp.exp(s - smax)
        denom = jnp.sum(p, axis=-1, keepdims=True)
        attn = p * pl.reciprocal(denom, approx=True)
        if h == 0 and a_ref is not None:
            a_ref[0] = attn                                   # head-0 probs (module output)
        ctxs.append(jnp.dot(attn.astype(v.dtype), v[:, lo:lo + Dh],
                            preferred_element_type=jnp.float32))
    return jnp.concatenate(ctxs, axis=-1)                     # [tq, D] lane-dense


def _mha_self_kernel(q_ref, k_ref, v_ref, pad_ref, o_ref, *, heads, scale):
    tq = q_ref.shape[1]
    Lk = k_ref.shape[1]
    q_off = pl.program_id(1) * tq
    kk = jax.lax.broadcasted_iota(jnp.int32, (tq, Lk), 1)
    qq = jax.lax.broadcasted_iota(jnp.int32, (tq, Lk), 0) + q_off
    pad = jnp.broadcast_to(pad_ref[0] > 0.0, (tq, Lk))        # tgt pad keys
    masked = jnp.logical_or(kk > qq, pad)                     # causal + pad, in-VMEM
    ctx = _attention_core(q_ref[0], k_ref[0], v_ref[0], masked, heads, scale, None)
    o_ref[0] = ctx.astype(o_ref.dtype)


def _mha_ctx_kernel(q_ref, k_ref, v_ref, pad_ref, o_ref, a_ref, *, heads, scale):
    tq = q_ref.shape[1]
    Lk = k_ref.shape[1]
    masked = jnp.broadcast_to(pad_ref[0] > 0.0, (tq, Lk))     # src pad keys only
    ctx = _attention_core(q_ref[0], k_ref[0], v_ref[0], masked, heads, scale, a_ref)
    o_ref[0] = ctx.astype(o_ref.dtype)


def _mha_cost(B, heads, Lq, Lk, D):
    return pl.CostEstimate(
        flops=4 * B * Lq * Lk * D,
        transcendentals=B * heads * Lq * Lk,
        bytes_accessed=2 * B * (2 * Lq * D + 2 * Lk * D) + 4 * B * Lq * Lk)


def self_mha(p, x, tgt_pad, heads, residual, ln):
    """Self-attention block: LN1 fused into QKV proj, residual fused into W_o proj."""
    B, L, D = x.shape
    scale = 1.0 / math.sqrt(D // heads)
    qkv = linear(x.reshape(B * L, D), p["wqkv"], p["bqkv"], norm=ln).reshape(B, L, 3 * D)
    tq = _pick_tile(L, 256, 8)
    ctx = pl.pallas_call(
        partial(_mha_self_kernel, heads=heads, scale=scale),
        out_shape=jax.ShapeDtypeStruct((B, L, D), jnp.bfloat16),
        grid=(B, L // tq),
        in_specs=[
            pl.BlockSpec((1, tq, D), lambda b, qi: (b, qi, 0)),   # Q cols [0, D)
            pl.BlockSpec((1, L, D), lambda b, qi: (b, 0, 1)),     # K cols [D, 2D), once per b
            pl.BlockSpec((1, L, D), lambda b, qi: (b, 0, 2)),     # V cols [2D, 3D), once per b
            pl.BlockSpec((1, 1, L), lambda b, qi: (b, 0, 0)),     # tgt pad vector
        ],
        out_specs=pl.BlockSpec((1, tq, D), lambda b, qi: (b, qi, 0)),
        compiler_params=pltpu.CompilerParams(
            dimension_semantics=("parallel", "parallel")),
        cost_estimate=_mha_cost(B, heads, L, L, D),
    )(qkv, qkv, qkv, tgt_pad)
    out = linear(ctx.reshape(B * L, D), p["wo"], p["bo"],
                 residual=residual.reshape(B * L, D)).reshape(B, L, D)
    return out


def ctx_mha(p, memory, query, src_pad, heads, residual, ln):
    """Context attention: LN2 fused into Q proj, residual fused into W_o proj."""
    B, Lk, D = memory.shape
    Lq = query.shape[1]
    scale = 1.0 / math.sqrt(D // heads)
    kv = linear(memory.reshape(B * Lk, D), p["wkv"], p["bkv"]).reshape(B, Lk, 2 * D)
    q = linear(query.reshape(B * Lq, D), p["wq"], p["bq"], norm=ln).reshape(B, Lq, D)
    tq = _pick_tile(Lq, 256, 8)
    ctx, attn0 = pl.pallas_call(
        partial(_mha_ctx_kernel, heads=heads, scale=scale),
        out_shape=(jax.ShapeDtypeStruct((B, Lq, D), jnp.bfloat16),
                   jax.ShapeDtypeStruct((B, Lq, Lk), jnp.float32)),
        grid=(B, Lq // tq),
        in_specs=[
            pl.BlockSpec((1, tq, D), lambda b, qi: (b, qi, 0)),   # Q tile
            pl.BlockSpec((1, Lk, D), lambda b, qi: (b, 0, 0)),    # K cols [0, D)
            pl.BlockSpec((1, Lk, D), lambda b, qi: (b, 0, 1)),    # V cols [D, 2D)
            pl.BlockSpec((1, 1, Lk), lambda b, qi: (b, 0, 0)),    # src pad vector
        ],
        out_specs=(pl.BlockSpec((1, tq, D), lambda b, qi: (b, qi, 0)),
                   pl.BlockSpec((1, tq, Lk), lambda b, qi: (b, qi, 0))),
        compiler_params=pltpu.CompilerParams(
            dimension_semantics=("parallel", "parallel")),
        cost_estimate=_mha_cost(B, heads, Lq, Lk, D),
    )(q, kv, kv, src_pad)
    out = linear(ctx.reshape(B * Lq, D), p["wo"], p["bo"],
                 residual=residual.reshape(B * Lq, D)).reshape(B, Lq, D)
    return out, attn0


# ----------------------------------------------------------------------------
# Fused FFN: LN(x) -> relu(@w1+b1) -> @w2 + b2 + residual.
# Normalized x and the f32 accumulator live in VMEM scratch across d_ff tiles.
# ----------------------------------------------------------------------------
def _ffn_kernel(x_ref, w1_ref, b1_ref, w2_ref, b2_ref, g_ref, bt_ref, r_ref,
                o_ref, acc_ref, xn_ref, *, nf, eps):
    f = pl.program_id(1)

    def _norm():
        x = x_ref[...].astype(jnp.float32)
        d = x.shape[-1]
        mu = jnp.mean(x, axis=-1, keepdims=True)
        c = x - mu
        var = jnp.sum(c * c, axis=-1, keepdims=True) * (1.0 / (d - 1))
        inv = pl.reciprocal(jnp.sqrt(var) + eps)
        return (g_ref[...] * c * inv + bt_ref[...]).astype(jnp.bfloat16)

    def _second(inter, acc_in):
        inter = jnp.maximum(inter, 0.0)
        return acc_in + jnp.dot(inter.astype(jnp.bfloat16), w2_ref[...],
                                preferred_element_type=jnp.float32)

    def _epilogue(acc):
        o_ref[...] = (acc + b2_ref[...] + r_ref[...].astype(jnp.float32)
                      ).astype(o_ref.dtype)

    if nf == 1:
        xn = _norm()
        inter = jnp.dot(xn, w1_ref[...], preferred_element_type=jnp.float32) + b1_ref[...]
        _epilogue(_second(inter, 0.0))
    else:
        @pl.when(f == 0)
        def _():
            xn_ref[...] = _norm()
            acc_ref[...] = jnp.zeros_like(acc_ref)

        inter = jnp.dot(xn_ref[...], w1_ref[...],
                        preferred_element_type=jnp.float32) + b1_ref[...]
        acc_ref[...] = _second(inter, acc_ref[...])

        @pl.when(f == nf - 1)
        def _():
            _epilogue(acc_ref[...])


def ffn(x, w1, b1, w2, b2, ln_g, ln_b, residual, eps=1e-6):
    B, L, D = x.shape
    d_ff = w1.shape[1]
    M = B * L
    tm = _pick_tile(M, 256, 8)
    tf = _pick_tile(d_ff, 512, 128)
    nm, nf = M // tm, d_ff // tf
    out = pl.pallas_call(
        partial(_ffn_kernel, nf=nf, eps=eps),
        out_shape=jax.ShapeDtypeStruct((M, D), jnp.bfloat16),
        grid=(nm, nf),
        in_specs=[
            pl.BlockSpec((tm, D), lambda i, f: (i, 0)),    # x
            pl.BlockSpec((D, tf), lambda i, f: (0, f)),    # w1
            pl.BlockSpec((1, tf), lambda i, f: (0, f)),    # b1
            pl.BlockSpec((tf, D), lambda i, f: (f, 0)),    # w2
            pl.BlockSpec((1, D), lambda i, f: (0, 0)),     # b2
            pl.BlockSpec((1, D), lambda i, f: (0, 0)),     # LN gamma
            pl.BlockSpec((1, D), lambda i, f: (0, 0)),     # LN beta
            pl.BlockSpec((tm, D), lambda i, f: (i, 0)),    # residual
        ],
        out_specs=pl.BlockSpec((tm, D), lambda i, f: (i, 0)),
        scratch_shapes=[pltpu.VMEM((tm, D), jnp.float32),
                        pltpu.VMEM((tm, D), jnp.bfloat16)],
        compiler_params=pltpu.CompilerParams(
            dimension_semantics=("parallel", "arbitrary")),
        cost_estimate=pl.CostEstimate(
            flops=4 * M * D * d_ff, transcendentals=0,
            bytes_accessed=2 * (3 * M * D + 2 * D * d_ff)),
    )(x.reshape(M, D), w1, b1.reshape(1, d_ff), w2, b2.reshape(1, D),
      ln_g.reshape(1, D), ln_b.reshape(1, D), residual.reshape(M, D))
    return out.reshape(B, L, D)


# ----------------------------------------------------------------------------
# Decoder layer / full decoder
# ----------------------------------------------------------------------------
def decoder_layer(p, inputs, memory_bank, src_pad, tgt_pad, heads):
    """TransformerDecoderLayer.forward (no layer_input / layer_cache, eval dropout)."""
    # LN1 fused into the QKV projection; K=V=Q=LN1(inputs); residual = inputs.
    query = self_mha(p["self_attn"], inputs, tgt_pad, heads,
                     residual=inputs, ln=(p["ln1_g"], p["ln1_b"]))
    # LN2 fused into the context-attention Q projection; residual = query.
    x, ctx_attn = ctx_mha(p["ctx_attn"], memory_bank, query, src_pad, heads,
                          residual=query, ln=(p["ln2_g"], p["ln2_b"]))
    # PositionwiseFeedForward: w_2(relu(w_1(LN(x)))) + x  (single fused kernel)
    out = ffn(x, p["w1"], p["b1"], p["w2"], p["b2"],
              p["ffn_ln_g"], p["ffn_ln_b"], residual=x)
    return out, ctx_attn


def sinusoidal_pe(length, dim):
    pos = jnp.arange(length, dtype=jnp.float32)[:, None]
    div = jnp.exp(jnp.arange(0, dim, 2, dtype=jnp.float32) * -(math.log(10000.0) / dim))
    pe = jnp.zeros((length, dim), jnp.float32)
    pe = pe.at[:, 0::2].set(jnp.sin(pos * div))
    pe = pe.at[:, 1::2].set(jnp.cos(pos * div))
    return pe


def embeddings_forward(params, tgt):
    """tgt: [Lt, B] int -> [Lt, B, D] f32 (word lut * sqrt(D) + sinusoidal PE)."""
    D = params["emb"].shape[1]
    emb = jnp.take(params["emb"], tgt, axis=0) * jnp.sqrt(jnp.float32(D))
    pe = sinusoidal_pe(tgt.shape[0], D)
    return emb + pe[:, None, :]


def transformer_decoder_forward(params, src, tgt, memory_bank, *, heads, padding_idx=1):
    """Mirror of TransformerDecoder.forward (step=None, state_cache=None, nonreactive_mask=None)."""
    src_words = src.T                        # [B, Ls]
    tgt_words = tgt.T                        # [B, Lt]

    emb = embeddings_forward(params, tgt)                                      # [Lt, B, D]
    output = jnp.transpose(emb, (1, 0, 2)).astype(jnp.bfloat16)                # [B, Lt, D]
    src_memory_bank = jnp.transpose(memory_bank, (1, 0, 2)).astype(jnp.bfloat16)

    # Only tiny per-key pad vectors are materialized; the [Lq, Lk] masks are
    # constructed inside the attention kernels (causal part via iota).
    src_pad = (src_words == padding_idx).astype(jnp.float32)[:, None, :]       # [B, 1, Ls]
    tgt_pad = (tgt_words == padding_idx).astype(jnp.float32)[:, None, :]       # [B, 1, Lt]

    top_context_attns = []
    for lp in params["layers"]:
        output, ctx_attn = decoder_layer(lp, output, src_memory_bank,
                                         src_pad, tgt_pad, heads)
        top_context_attns.append(ctx_attn)

    output = layer_norm(output, params["ln_f_g"], params["ln_f_b"])            # f32
    outputs = jnp.transpose(output, (1, 0, 2))                                 # [Lt, B, D]
    return outputs, top_context_attns


# ----------------------------------------------------------------------------
# Deterministic parameter init (fused QKV / KV layouts, bf16 matmul weights)
# ----------------------------------------------------------------------------
def init_params(key, num_layers, d_model, heads, d_ff, vocab_size, padding_idx=1):
    def dense(k, shape, scale=0.02):
        return (scale * jax.random.normal(k, shape, jnp.float32)).astype(jnp.bfloat16)

    keys = jax.random.split(key, num_layers + 1)
    emb = jax.random.normal(keys[0], (vocab_size, d_model), jnp.float32)
    emb = emb.at[padding_idx].set(0.0)       # padding_idx row zeroed like nn.Embedding

    def self_attn_params(ks):
        wq, wk, wv = (dense(ks[0], (d_model, d_model)),
                      dense(ks[1], (d_model, d_model)),
                      dense(ks[2], (d_model, d_model)))
        return {"wqkv": jnp.concatenate([wq, wk, wv], axis=1),
                "bqkv": jnp.zeros((3 * d_model,), jnp.float32),
                "wo": dense(ks[3], (d_model, d_model)),
                "bo": jnp.zeros((d_model,), jnp.float32)}

    def ctx_attn_params(ks):
        wk, wv = dense(ks[1], (d_model, d_model)), dense(ks[2], (d_model, d_model))
        return {"wq": dense(ks[0], (d_model, d_model)),
                "bq": jnp.zeros((d_model,), jnp.float32),
                "wkv": jnp.concatenate([wk, wv], axis=1),
                "bkv": jnp.zeros((2 * d_model,), jnp.float32),
                "wo": dense(ks[3], (d_model, d_model)),
                "bo": jnp.zeros((d_model,), jnp.float32)}

    layers = []
    for i in range(num_layers):
        lk = jax.random.split(keys[1 + i], 10)
        layers.append({
            "self_attn": self_attn_params(lk[0:4]),
            "ctx_attn": ctx_attn_params(lk[4:8]),
            "ln1_g": jnp.ones((d_model,), jnp.float32), "ln1_b": jnp.zeros((d_model,), jnp.float32),
            "ln2_g": jnp.ones((d_model,), jnp.float32), "ln2_b": jnp.zeros((d_model,), jnp.float32),
            "ffn_ln_g": jnp.ones((d_model,), jnp.float32), "ffn_ln_b": jnp.zeros((d_model,), jnp.float32),
            "w1": dense(lk[8], (d_model, d_ff)), "b1": jnp.zeros((d_ff,), jnp.float32),
            "w2": dense(lk[9], (d_ff, d_model)), "b2": jnp.zeros((d_model,), jnp.float32),
        })
    return {"emb": emb, "layers": layers,
            "ln_f_g": jnp.ones((d_model,), jnp.float32),
            "ln_f_b": jnp.zeros((d_model,), jnp.float32)}


# ----------------------------------------------------------------------------
if __name__ == "__main__":
    # d_model chosen as a multiple of 128 so the packed QKV/KV column blocks are
    # lane-aligned (production d_model=512 also satisfies this).
    num_layers, d_model, heads, d_ff, vocab = 2, 128, 4, 256, 50
    B, src_len, tgt_len = 2, 8, 8
    padding_idx = 1

    key = jax.random.PRNGKey(0)
    pkey, skey, tkey, mkey = jax.random.split(key, 4)
    params = init_params(pkey, num_layers, d_model, heads, d_ff, vocab, padding_idx)

    src = jax.random.randint(skey, (src_len, B), 2, vocab).astype(jnp.int32)
    tgt = jax.random.randint(tkey, (tgt_len, B), 2, vocab).astype(jnp.int32)
    src = src.at[-1, 0].set(padding_idx)     # exercise src pad mask
    tgt = tgt.at[-1, 1].set(padding_idx)     # exercise tgt pad mask
    memory_bank = jax.random.normal(mkey, (src_len, B, d_model), jnp.float32)

    fwd = jax.jit(partial(transformer_decoder_forward, heads=heads, padding_idx=padding_idx))
    outputs, ctx_attns = fwd(params, src, tgt, memory_bank)
    outputs = jax.block_until_ready(outputs)
    ctx_attns = [jax.block_until_ready(a) for a in ctx_attns]

    assert outputs.shape == (tgt_len, B, d_model)
    assert outputs.dtype == jnp.float32
    assert len(ctx_attns) == num_layers
    assert all(a.shape == (B, tgt_len, src_len) for a in ctx_attns)
    assert bool(jnp.all(jnp.isfinite(outputs)))
    assert all(bool(jnp.all(jnp.isfinite(a))) for a in ctx_attns)
    print("KERNEL_OK")
</pallas_src>

<mosaic_0001>
module attributes {stable_mosaic.version = 11 : i64} {
  func.func @_linear_kernel(%arg0: i32, %arg1: i32, %arg2: i32, %arg3: memref<16x128xbf16, #tpu.memory_space<vmem>>, %arg4: memref<128x384xbf16, #tpu.memory_space<vmem>>, %arg5: memref<1x384xf32, #tpu.memory_space<vmem>>, %arg6: memref<1x128xf32, #tpu.memory_space<vmem>>, %arg7: memref<1x128xf32, #tpu.memory_space<vmem>>, %arg8: memref<16x384xbf16, #tpu.memory_space<vmem>>, %arg9: memref<16x384xf32, #tpu.memory_space<vmem>>) attributes {dimension_semantics = [#tpu.dimension_semantics<parallel>, #tpu.dimension_semantics<parallel>, #tpu.dimension_semantics<arbitrary>], iteration_bounds = array<i64: 1, 1, 1>, scalar_prefetch = 0 : i64, scratch_operands = 1 : i64, tpu.core_type = #tpu.core_type<tc>, window_params = [{transform_indices = @transform_0, window_bounds = array<i64: 16, 128>}, {transform_indices = @transform_1, window_bounds = array<i64: 128, 384>}, {transform_indices = @transform_2, window_bounds = array<i64: 1, 384>}, {pipeline_mode = #tpu.pipeline_mode<synchronous>, transform_indices = @transform_3, window_bounds = array<i64: 1, 128>}, {pipeline_mode = #tpu.pipeline_mode<synchronous>, transform_indices = @transform_4, window_bounds = array<i64: 1, 128>}, {transform_indices = @transform_5, window_bounds = array<i64: 16, 384>}]} {
    %c0 = arith.constant 0 : index
    %c0_0 = arith.constant 0 : index
    %0 = vector.load %arg3[%c0, %c0_0] : memref<16x128xbf16, #tpu.memory_space<vmem>>, vector<16x128xbf16>
    %1 = arith.extf %0 : vector<16x128xbf16> to vector<16x128xf32>
    %cst = arith.constant dense<0.000000e+00> : vector<16xf32>
    %2 = vector.multi_reduction <add>, %1, %cst [1] : vector<16x128xf32> to vector<16xf32>
    %3 = vector.shape_cast %2 : vector<16xf32> to vector<16x1xf32>
    %cst_1 = arith.constant 1.280000e+02 : f32
    %4 = vector.broadcast %cst_1 : f32 to vector<16x1xf32>
    %5 = arith.divf %3, %4 : vector<16x1xf32>
    %6 = vector.broadcast %5 : vector<16x1xf32> to vector<16x128xf32>
    %7 = arith.subf %1, %6 : vector<16x128xf32>
    %8 = arith.mulf %7, %7 : vector<16x128xf32>
    %cst_2 = arith.constant dense<0.000000e+00> : vector<16xf32>
    %9 = vector.multi_reduction <add>, %8, %cst_2 [1] : vector<16x128xf32> to vector<16xf32>
    %10 = vector.shape_cast %9 : vector<16xf32> to vector<16x1xf32>
    %cst_3 = arith.constant 0.00787401571 : f32
    %11 = vector.broadcast %cst_3 : f32 to vector<16x1xf32>
    %12 = arith.mulf %10, %11 : vector<16x1xf32>
    %13 = math.sqrt %12 : vector<16x1xf32>
    %cst_4 = arith.constant 9.99999997E-7 : f32
    %14 = vector.broadcast %cst_4 : f32 to vector<16x1xf32>
    %15 = arith.addf %13, %14 : vector<16x1xf32>
    %16 = tpu.reciprocal %15 : vector<16x1xf32> -> vector<16x1xf32>
    %c0_5 = arith.constant 0 : index
    %c0_6 = arith.constant 0 : index
    %17 = vector.load %arg6[%c0_5, %c0_6] : memref<1x128xf32, #tpu.memory_space<vmem>>, vector<1x128xf32>
    %18 = vector.broadcast %17 : vector<1x128xf32> to vector<16x128xf32>
    %19 = arith.mulf %18, %7 : vector<16x128xf32>
    %20 = vector.broadcast %16 : vector<16x1xf32> to vector<16x128xf32>
    %21 = arith.mulf %19, %20 : vector<16x128xf32>
    %c0_7 = arith.constant 0 : index
    %c0_8 = arith.constant 0 : index
    %22 = vector.load %arg7[%c0_7, %c0_8] : memref<1x128xf32, #tpu.memory_space<vmem>>, vector<1x128xf32>
    %23 = vector.broadcast %22 : vector<1x128xf32> to vector<16x128xf32>
    %24 = arith.addf %21, %23 : vector<16x128xf32>
    %25 = arith.truncf %24 : vector<16x128xf32> to vector<16x128xbf16>
    %c0_9 = arith.constant 0 : index
    %c0_10 = arith.constant 0 : index
    %26 = vector.load %arg4[%c0_9, %c0_10] : memref<128x384xbf16, #tpu.memory_space<vmem>>, vector<128x384xbf16>
    %cst_11 = arith.constant dense<0.000000e+00> : vector<16x384xf32>
    %27 = tpu.matmul %25, %26, %cst_11 {dimension_numbers = #tpu.dot_dimension_numbers<[1], [0], [0], [1], [0, 0, 1, 1], [], []>} : vector<16x128xbf16>, vector<128x384xbf16>, vector<16x384xf32> -> vector<16x384xf32>
    %c0_12 = arith.constant 0 : index
    %c0_13 = arith.constant 0 : index
    %28 = vector.load %arg5[%c0_12, %c0_13] : memref<1x384xf32, #tpu.memory_space<vmem>>, vector<1x384xf32>
    %29 = vector.broadcast %28 : vector<1x384xf32> to vector<16x384xf32>
    %30 = arith.addf %27, %29 : vector<16x384xf32>
    %31 = arith.truncf %30 : vector<16x384xf32> to vector<16x384xbf16>
    %c0_14 = arith.constant 0 : index
    %c0_15 = arith.constant 0 : index
    %32 = vector.load %arg8[%c0_14, %c0_15] : memref<16x384xbf16, #tpu.memory_space<vmem>>, vector<16x384xbf16>
    tpu.vector_store %arg8[%c0_14, %c0_15], %31 {strides = array<i32>} : memref<16x384xbf16, #tpu.memory_space<vmem>>, vector<16x384xbf16>,
    return
  }
  func.func @transform_0(%arg0: i32, %arg1: i32, %arg2: i32) -> (i32, i32) {
    %c0_i32 = arith.constant 0 : i32
    return %arg0, %arg2 : i32, i32
  }
  func.func @transform_1(%arg0: i32, %arg1: i32, %arg2: i32) -> (i32, i32) {
    %c0_i32 = arith.constant 0 : i32
    return %arg2, %arg1 : i32, i32
  }
  func.func @transform_2(%arg0: i32, %arg1: i32, %arg2: i32) -> (i32, i32) {
    %c0_i32 = arith.constant 0 : i32
    %c0_i32_0 = arith.constant 0 : i32
    return %c0_i32, %arg1 : i32, i32
  }
  func.func @transform_3(%arg0: i32, %arg1: i32, %arg2: i32) -> (i32, i32) {
    %c0_i32 = arith.constant 0 : i32
    %c0_i32_0 = arith.constant 0 : i32
    %c0_i32_1 = arith.constant 0 : i32
    return %c0_i32, %c0_i32_0 : i32, i32
  }
  func.func @transform_4(%arg0: i32, %arg1: i32, %arg2: i32) -> (i32, i32) {
    %c0_i32 = arith.constant 0 : i32
    %c0_i32_0 = arith.constant 0 : i32
    %c0_i32_1 = arith.constant 0 : i32
    return %c0_i32, %c0_i32_0 : i32, i32
  }
  func.func @transform_5(%arg0: i32, %arg1: i32, %arg2: i32) -> (i32, i32) {
    %c0_i32 = arith.constant 0 : i32
    return %arg0, %arg1 : i32, i32
  }
}

module attributes {stable_mosaic.version = 11 : i64} {
  func.func @_mha_self_kernel(%arg0: i32, %arg1: i32, %arg2: memref<1x8x128xbf16, #tpu.memory_space<vmem>>, %arg3: memref<1x8x128xbf16, #tpu.memory_space<vmem>>, %arg4: memref<1x8x128xbf16, #tpu.memory_space<vmem>>, %arg5: memref<1x1x8xf32, #tpu.memory_space<vmem>>, %arg6: memref<1x8x128xbf16, #tpu.memory_space<vmem>>) attributes {dimension_semantics = [#tpu.dimension_semantics<parallel>, #tpu.dimension_semantics<parallel>], iteration_bounds = array<i64: 2, 1>, scalar_prefetch = 0 : i64, scratch_operands = 0 : i64, tpu.core_type = #tpu.core_type<tc>, window_params = [{transform_indices = @transform_0, window_bounds = array<i64: 1, 8, 128>}, {transform_indices = @transform_1, window_bounds = array<i64: 1, 8, 128>}, {transform_indices = @transform_2, window_bounds = array<i64: 1, 8, 128>}, {transform_indices = @transform_3, window_bounds = array<i64: 1, 1, 8>}, {transform_indices = @transform_4, window_bounds = array<i64: 1, 8, 128>}]} {
    %c8_i32 = arith.constant 8 : i32
    %0 = arith.muli %arg1, %c8_i32 : i32
    %1 = tpu.iota {dimensions = array<i32: 1>} : vector<8x8xi32>
    %2 = tpu.iota {dimensions = array<i32: 0>} : vector<8x8xi32>
    %3 = vector.broadcast %0 : i32 to vector<8x8xi32>
    %4 = arith.addi %2, %3 : vector<8x8xi32>
    %c0 = arith.constant 0 : index
    %c0_0 = arith.constant 0 : index
    %c0_1 = arith.constant 0 : index
    %5 = vector.load %arg5[%c0, %c0_0, %c0_1] : memref<1x1x8xf32, #tpu.memory_space<vmem>>, vector<1x1x8xf32>
    %6 = vector.shape_cast %5 : vector<1x1x8xf32> to vector<1x8xf32>
    %cst = arith.constant 0.000000e+00 : f32
    %7 = vector.broadcast %cst : f32 to vector<1x8xf32>
    %8 = arith.cmpf ogt, %6, %7 : vector<1x8xf32>
    %9 = vector.shape_cast %8 : vector<1x8xi1> to vector<1x8xi1>
    %10 = vector.broadcast %9 : vector<1x8xi1> to vector<8x8xi1>
    %11 = arith.cmpi sgt, %1, %4 : vector<8x8xi32>
    %12 = arith.ori %11, %10 : vector<8x8xi1>
    %c0_2 = arith.constant 0 : index
    %c0_3 = arith.constant 0 : index
    %c0_4 = arith.constant 0 : index
    %13 = vector.load %arg2[%c0_2, %c0_3, %c0_4] : memref<1x8x128xbf16, #tpu.memory_space<vmem>>, vector<1x8x128xbf16>
    %14 = vector.shape_cast %13 : vector<1x8x128xbf16> to vector<8x128xbf16>
    %c0_5 = arith.constant 0 : index
    %c0_6 = arith.constant 0 : index
    %c0_7 = arith.constant 0 : index
    %15 = vector.load %arg3[%c0_5, %c0_6, %c0_7] : memref<1x8x128xbf16, #tpu.memory_space<vmem>>, vector<1x8x128xbf16>
    %16 = vector.shape_cast %15 : vector<1x8x128xbf16> to vector<8x128xbf16>
    %c0_8 = arith.constant 0 : index
    %c0_9 = arith.constant 0 : index
    %c0_10 = arith.constant 0 : index
    %17 = vector.load %arg4[%c0_8, %c0_9, %c0_10] : memref<1x8x128xbf16, #tpu.memory_space<vmem>>, vector<1x8x128xbf16>
    %18 = vector.shape_cast %17 : vector<1x8x128xbf16> to vector<8x128xbf16>
    %19 = vector.extract_strided_slice %14 {offsets = [0, 0], sizes = [8, 32], strides = [1, 1]} : vector<8x128xbf16> to vector<8x32xbf16>
    %20 = vector.extract_strided_slice %16 {offsets = [0, 0], sizes = [8, 32], strides = [1, 1]} : vector<8x128xbf16> to vector<8x32xbf16>
    %cst_11 = arith.constant dense<0.000000e+00> : vector<8x8xf32>
    %21 = tpu.matmul %19, %20, %cst_11 {dimension_numbers = #tpu.dot_dimension_numbers<[1], [1], [0], [0], [0, 0, 1, 0], [], []>} : vector<8x32xbf16>, vector<8x32xbf16>, vector<8x8xf32> -> vector<8x8xf32>
    %cst_12 = arith.constant 0.176776692 : f32
    %22 = vector.broadcast %cst_12 : f32 to vector<8x8xf32>
    %23 = arith.mulf %21, %22 : vector<8x8xf32>
    %cst_13 = arith.constant -9.99999984E+17 : f32
    %24 = vector.broadcast %cst_13 : f32 to vector<8x8xf32>
    %25 = arith.select %12, %24, %23 : vector<8x8xi1>, vector<8x8xf32>
    %cst_14 = arith.constant dense<0xFF800000> : vector<8xf32>
    %26 = vector.multi_reduction <maximumf>, %25, %cst_14 [1] : vector<8x8xf32> to vector<8xf32>
    %27 = vector.shape_cast %26 : vector<8xf32> to vector<8x1xf32>
    %28 = vector.broadcast %27 : vector<8x1xf32> to vector<8x8xf32>
    %29 = arith.subf %25, %28 : vector<8x8xf32>
    %30 = math.exp %29 : vector<8x8xf32>
    %cst_15 = arith.constant dense<0.000000e+00> : vector<8xf32>
    %31 = vector.multi_reduction <add>, %30, %cst_15 [1] : vector<8x8xf32> to vector<8xf32>
    %32 = vector.shape_cast %31 : vector<8xf32> to vector<8x1xf32>
    %33 = tpu.reciprocal %32 {approx = true} : vector<8x1xf32> -> vector<8x1xf32>
    %34 = vector.broadcast %33 : vector<8x1xf32> to vector<8x8xf32>
    %35 = arith.mulf %30, %34 : vector<8x8xf32>
    %36 = arith.truncf %35 : vector<8x8xf32> to vector<8x8xbf16>
    %37 = vector.extract_strided_slice %18 {offsets = [0, 0], sizes = [8, 32], strides = [1, 1]} : vector<8x128xbf16> to vector<8x32xbf16>
    %cst_16 = arith.constant dense<0.000000e+00> : vector<8x32xf32>
    %38 = tpu.matmul %36, %37, %cst_16 {dimension_numbers = #tpu.dot_dimension_numbers<[1], [0], [0], [1], [0, 0, 1, 1], [], []>} : vector<8x8xbf16>, vector<8x32xbf16>, vector<8x32xf32> -> vector<8x32xf32>
    %39 = vector.extract_strided_slice %14 {offsets = [0, 32], sizes = [8, 32], strides = [1, 1]} : vector<8x128xbf16> to vector<8x32xbf16>
    %40 = vector.extract_strided_slice %16 {offsets = [0, 32], sizes = [8, 32], strides = [1, 1]} : vector<8x128xbf16> to vector<8x32xbf16>
    %cst_17 = arith.constant dense<0.000000e+00> : vector<8x8xf32>
    %41 = tpu.matmul %39, %40, %cst_17 {dimension_numbers = #tpu.dot_dimension_numbers<[1], [1], [0], [0], [0, 0, 1, 0], [], []>} : vector<8x32xbf16>, vector<8x32xbf16>, vector<8x8xf32> -> vector<8x8xf32>
    %cst_18 = arith.constant 0.176776692 : f32
    %42 = vector.broadcast %cst_18 : f32 to vector<8x8xf32>
    %43 = arith.mulf %41, %42 : vector<8x8xf32>
    %cst_19 = arith.constant -9.99999984E+17 : f32
    %44 = vector.broadcast %cst_19 : f32 to vector<8x8xf32>
    %45 = arith.select %12, %44, %43 : vector<8x8xi1>, vector<8x8xf32>
    %cst_20 = arith.constant dense<0xFF800000> : vector<8xf32>
    %46 = vector.multi_reduction <maximumf>, %45, %cst_20 [1] : vector<8x8xf32> to vector<8xf32>
    %47 = vector.shape_cast %46 : vector<8xf32> to vector<8x1xf32>
    %48 = vector.broadcast %47 : vector<8x1xf32> to vector<8x8xf32>
    %49 = arith.subf %45, %48 : vector<8x8xf32>
    %50 = math.exp %49 : vector<8x8xf32>
    %cst_21 = arith.constant dense<0.000000e+00> : vector<8xf32>
    %51 = vector.multi_reduction <add>, %50, %cst_21 [1] : vector<8x8xf32> to vector<8xf32>
    %52 = vector.shape_cast %51 : vector<8xf32> to vector<8x1xf32>
    %53 = tpu.reciprocal %52 {approx = true} : vector<8x1xf32> -> vector<8x1xf32>
    %54 = vector.broadcast %53 : vector<8x1xf32> to vector<8x8xf32>
    %55 = arith.mulf %50, %54 : vector<8x8xf32>
    %56 = arith.truncf %55 : vector<8x8xf32> to vector<8x8xbf16>
    %57 = vector.extract_strided_slice %18 {offsets = [0, 32], sizes = [8, 32], strides = [1, 1]} : vector<8x128xbf16> to vector<8x32xbf16>
    %cst_22 = arith.constant dense<0.000000e+00> : vector<8x32xf32>
    %58 = tpu.matmul %56, %57, %cst_22 {dimension_numbers = #tpu.dot_dimension_numbers<[1], [0], [0], [1], [0, 0, 1, 1], [], []>} : vector<8x8xbf16>, vector<8x32xbf16>, vector<8x32xf32> -> vector<8x32xf32>
    %59 = vector.extract_strided_slice %14 {offsets = [0, 64], sizes = [8, 32], strides = [1, 1]} : vector<8x128xbf16> to vector<8x32xbf16>
    %60 = vector.extract_strided_slice %16 {offsets = [0, 64], sizes = [8, 32], strides = [1, 1]} : vector<8x128xbf16> to vector<8x32xbf16>
    %cst_23 = arith.constant dense<0.000000e+00> : vector<8x8xf32>
    %61 = tpu.matmul %59, %60, %cst_23 {dimension_numbers = #tpu.dot_dimension_numbers<[1], [1], [0], [0], [0, 0, 1, 0], [], []>} : vector<8x32xbf16>, vector<8x32xbf16>, vector<8x8xf32> -> vector<8x8xf32>
    %cst_24 = arith.constant 0.176776692 : f32
    %62 = vector.broadcast %cst_24 : f32 to vector<8x8xf32>
    %63 = arith.mulf %61, %62 : vector<8x8xf32>
    %cst_25 = arith.constant -9.99999984E+17 : f32
    %64 = vector.broadcast %cst_25 : f32 to vector<8x8xf32>
    %65 = arith.select %12, %64, %63 : vector<8x8xi1>, vector<8x8xf32>
    %cst_26 = arith.constant dense<0xFF800000> : vector<8xf32>
    %66 = vector.multi_reduction <maximumf>, %65, %cst_26 [1] : vector<8x8xf32> to vector<8xf32>
    %67 = vector.shape_cast %66 : vector<8xf32> to vector<8x1xf32>
    %68 = vector.broadcast %67 : vector<8x1xf32> to vector<8x8xf32>
    %69 = arith.subf %65, %68 : vector<8x8xf32>
    %70 = math.exp %69 : vector<8x8xf32>
    %cst_27 = arith.constant dense<0.000000e+00> : vector<8xf32>
    %71 = vector.multi_reduction <add>, %70, %cst_27 [1] : vector<8x8xf32> to vector<8xf32>
    %72 = vector.shape_cast %71 : vector<8xf32> to vector<8x1xf32>
    %73 = tpu.reciprocal %72 {approx = true} : vector<8x1xf32> -> vector<8x1xf32>
    %74 = vector.broadcast %73 : vector<8x1xf32> to vector<8x8xf32>
    %75 = arith.mulf %70, %74 : vector<8x8xf32>
    %76 = arith.truncf %75 : vector<8x8xf32> to vector<8x8xbf16>
    %77 = vector.extract_strided_slice %18 {offsets = [0, 64], sizes = [8, 32], strides = [1, 1]} : vector<8x128xbf16> to vector<8x32xbf16>
    %cst_28 = arith.constant dense<0.000000e+00> : vector<8x32xf32>
    %78 = tpu.matmul %76, %77, %cst_28 {dimension_numbers = #tpu.dot_dimension_numbers<[1], [0], [0], [1], [0, 0, 1, 1], [], []>} : vector<8x8xbf16>, vector<8x32xbf16>, vector<8x32xf32> -> vector<8x32xf32>
    %79 = vector.extract_strided_slice %14 {offsets = [0, 96], sizes = [8, 32], strides = [1, 1]} : vector<8x128xbf16> to vector<8x32xbf16>
    %80 = vector.extract_strided_slice %16 {offsets = [0, 96], sizes = [8, 32], strides = [1, 1]} : vector<8x128xbf16> to vector<8x32xbf16>
    %cst_29 = arith.constant dense<0.000000e+00> : vector<8x8xf32>
    %81 = tpu.matmul %79, %80, %cst_29 {dimension_numbers = #tpu.dot_dimension_numbers<[1], [1], [0], [0], [0, 0, 1, 0], [], []>} : vector<8x32xbf16>, vector<8x32xbf16>, vector<8x8xf32> -> vector<8x8xf32>
    %cst_30 = arith.constant 0.176776692 : f32
    %82 = vector.broadcast %cst_30 : f32 to vector<8x8xf32>
    %83 = arith.mulf %81, %82 : vector<8x8xf32>
    %cst_31 = arith.constant -9.99999984E+17 : f32
    %84 = vector.broadcast %cst_31 : f32 to vector<8x8xf32>
    %85 = arith.select %12, %84, %83 : vector<8x8xi1>, vector<8x8xf32>
    %cst_32 = arith.constant dense<0xFF800000> : vector<8xf32>
    %86 = vector.multi_reduction <maximumf>, %85, %cst_32 [1] : vector<8x8xf32> to vector<8xf32>
    %87 = vector.shape_cast %86 : vector<8xf32> to vector<8x1xf32>
    %88 = vector.broadcast %87 : vector<8x1xf32> to vector<8x8xf32>
    %89 = arith.subf %85, %88 : vector<8x8xf32>
    %90 = math.exp %89 : vector<8x8xf32>
    %cst_33 = arith.constant dense<0.000000e+00> : vector<8xf32>
    %91 = vector.multi_reduction <add>, %90, %cst_33 [1] : vector<8x8xf32> to vector<8xf32>
    %92 = vector.shape_cast %91 : vector<8xf32> to vector<8x1xf32>
    %93 = tpu.reciprocal %92 {approx = true} : vector<8x1xf32> -> vector<8x1xf32>
    %94 = vector.broadcast %93 : vector<8x1xf32> to vector<8x8xf32>
    %95 = arith.mulf %90, %94 : vector<8x8xf32>
    %96 = arith.truncf %95 : vector<8x8xf32> to vector<8x8xbf16>
    %97 = vector.extract_strided_slice %18 {offsets = [0, 96], sizes = [8, 32], strides = [1, 1]} : vector<8x128xbf16> to vector<8x32xbf16>
    %cst_34 = arith.constant dense<0.000000e+00> : vector<8x32xf32>
    %98 = tpu.matmul %96, %97, %cst_34 {dimension_numbers = #tpu.dot_dimension_numbers<[1], [0], [0], [1], [0, 0, 1, 1], [], []>} : vector<8x8xbf16>, vector<8x32xbf16>, vector<8x32xf32> -> vector<8x32xf32>
    %99 = tpu.concatenate %38, %58, %78, %98 in 1 : vector<8x32xf32>, vector<8x32xf32>, vector<8x32xf32>, vector<8x32xf32> -> vector<8x128xf32>
    %100 = arith.truncf %99 : vector<8x128xf32> to vector<8x128xbf16>
    %c0_35 = arith.constant 0 : index
    %c0_36 = arith.constant 0 : index
    %c0_37 = arith.constant 0 : index
    %101 = vector.load %arg6[%c0_35, %c0_36, %c0_37] : memref<1x8x128xbf16, #tpu.memory_space<vmem>>, vector<1x8x128xbf16>
    %102 = vector.shape_cast %101 : vector<1x8x128xbf16> to vector<8x128xbf16>
    %103 = vector.shape_cast %100 : vector<8x128xbf16> to vector<1x8x128xbf16>
    tpu.vector_store %arg6[%c0_35, %c0_36, %c0_37], %103 {strides = array<i32>} : memref<1x8x128xbf16, #tpu.memory_space<vmem>>, vector<1x8x128xbf16>,
    return
  }
  func.func @transform_0(%arg0: i32, %arg1: i32) -> (i32, i32, i32) {
    %c0_i32 = arith.constant 0 : i32
    %c0_i32_0 = arith.constant 0 : i32
    return %arg0, %arg1, %c0_i32 : i32, i32, i32
  }
  func.func @transform_1(%arg0: i32, %arg1: i32) -> (i32, i32, i32) {
    %c0_i32 = arith.constant 0 : i32
    %c1_i32 = arith.constant 1 : i32
    %c0_i32_0 = arith.constant 0 : i32
    return %arg0, %c0_i32, %c1_i32 : i32, i32, i32
  }
  func.func @transform_2(%arg0: i32, %arg1: i32) -> (i32, i32, i32) {
    %c0_i32 = arith.constant 0 : i32
    %c2_i32 = arith.constant 2 : i32
    %c0_i32_0 = arith.constant 0 : i32
    return %arg0, %c0_i32, %c2_i32 : i32, i32, i32
  }
  func.func @transform_3(%arg0: i32, %arg1: i32) -> (i32, i32, i32) {
    %c0_i32 = arith.constant 0 : i32
    %c0_i32_0 = arith.constant 0 : i32
    %c0_i32_1 = arith.constant 0 : i32
    return %arg0, %c0_i32, %c0_i32_0 : i32, i32, i32
  }
  func.func @transform_4(%arg0: i32, %arg1: i32) -> (i32, i32, i32) {
    %c0_i32 = arith.constant 0 : i32
    %c0_i32_0 = arith.constant 0 : i32
    return %arg0, %arg1, %c0_i32 : i32, i32, i32
  }
}

module attributes {stable_mosaic.version = 11 : i64} {
  func.func @_linear_kernel(%arg0: i32, %arg1: i32, %arg2: i32, %arg3: memref<16x128xbf16, #tpu.memory_space<vmem>>, %arg4: memref<128x128xbf16, #tpu.memory_space<vmem>>, %arg5: memref<1x128xf32, #tpu.memory_space<vmem>>, %arg6: memref<16x128xbf16, #tpu.memory_space<vmem>>, %arg7: memref<16x128xbf16, #tpu.memory_space<vmem>>, %arg8: memref<16x128xf32, #tpu.memory_space<vmem>>) attributes {dimension_semantics = [#tpu.dimension_semantics<parallel>, #tpu.dimension_semantics<parallel>, #tpu.dimension_semantics<arbitrary>], iteration_bounds = array<i64: 1, 1, 1>, scalar_prefetch = 0 : i64, scratch_operands = 1 : i64, tpu.core_type = #tpu.core_type<tc>, window_params = [{transform_indices = @transform_0, window_bounds = array<i64: 16, 128>}, {transform_indices = @transform_1, window_bounds = array<i64: 128, 128>}, {transform_indices = @transform_2, window_bounds = array<i64: 1, 128>}, {transform_indices = @transform_3, window_bounds = array<i64: 16, 128>}, {transform_indices = @transform_4, window_bounds = array<i64: 16, 128>}]} {
    %c0 = arith.constant 0 : index
    %c0_0 = arith.constant 0 : index
    %0 = vector.load %arg3[%c0, %c0_0] : memref<16x128xbf16, #tpu.memory_space<vmem>>, vector<16x128xbf16>
    %c0_1 = arith.constant 0 : index
    %c0_2 = arith.constant 0 : index
    %1 = vector.load %arg4[%c0_1, %c0_2] : memref<128x128xbf16, #tpu.memory_space<vmem>>, vector<128x128xbf16>
    %cst = arith.constant dense<0.000000e+00> : vector<16x128xf32>
    %2 = tpu.matmul %0, %1, %cst {dimension_numbers = #tpu.dot_dimension_numbers<[1], [0], [0], [1], [0, 0, 1, 1], [], []>} : vector<16x128xbf16>, vector<128x128xbf16>, vector<16x128xf32> -> vector<16x128xf32>
    %c0_3 = arith.constant 0 : index
    %c0_4 = arith.constant 0 : index
    %3 = vector.load %arg5[%c0_3, %c0_4] : memref<1x128xf32, #tpu.memory_space<vmem>>, vector<1x128xf32>
    %4 = vector.broadcast %3 : vector<1x128xf32> to vector<16x128xf32>
    %5 = arith.addf %2, %4 : vector<16x128xf32>
    %c0_5 = arith.constant 0 : index
    %c0_6 = arith.constant 0 : index
    %6 = vector.load %arg6[%c0_5, %c0_6] : memref<16x128xbf16, #tpu.memory_space<vmem>>, vector<16x128xbf16>
    %7 = arith.extf %6 : vector<16x128xbf16> to vector<16x128xf32>
    %8 = arith.addf %5, %7 : vector<16x128xf32>
    %9 = arith.truncf %8 : vector<16x128xf32> to vector<16x128xbf16>
    %c0_7 = arith.constant 0 : index
    %c0_8 = arith.constant 0 : index
    %10 = vector.load %arg7[%c0_7, %c0_8] : memref<16x128xbf16, #tpu.memory_space<vmem>>, vector<16x128xbf16>
    tpu.vector_store %arg7[%c0_7, %c0_8], %9 {strides = array<i32>} : memref<16x128xbf16, #tpu.memory_space<vmem>>, vector<16x128xbf16>,
    return
  }
  func.func @transform_0(%arg0: i32, %arg1: i32, %arg2: i32) -> (i32, i32) {
    %c0_i32 = arith.constant 0 : i32
    return %arg0, %arg2 : i32, i32
  }
  func.func @transform_1(%arg0: i32, %arg1: i32, %arg2: i32) -> (i32, i32) {
    %c0_i32 = arith.constant 0 : i32
    return %arg2, %arg1 : i32, i32
  }
  func.func @transform_2(%arg0: i32, %arg1: i32, %arg2: i32) -> (i32, i32) {
    %c0_i32 = arith.constant 0 : i32
    %c0_i32_0 = arith.constant 0 : i32
    return %c0_i32, %arg1 : i32, i32
  }
  func.func @transform_3(%arg0: i32, %arg1: i32, %arg2: i32) -> (i32, i32) {
    %c0_i32 = arith.constant 0 : i32
    return %arg0, %arg1 : i32, i32
  }
  func.func @transform_4(%arg0: i32, %arg1: i32, %arg2: i32) -> (i32, i32) {
    %c0_i32 = arith.constant 0 : i32
    return %arg0, %arg1 : i32, i32
  }
}

module attributes {stable_mosaic.version = 11 : i64} {
  func.func @_linear_kernel(%arg0: i32, %arg1: i32, %arg2: i32, %arg3: memref<16x128xbf16, #tpu.memory_space<vmem>>, %arg4: memref<128x128xbf16, #tpu.memory_space<vmem>>, %arg5: memref<1x128xf32, #tpu.memory_space<vmem>>, %arg6: memref<1x128xf32, #tpu.memory_space<vmem>>, %arg7: memref<1x128xf32, #tpu.memory_space<vmem>>, %arg8: memref<16x128xbf16, #tpu.memory_space<vmem>>, %arg9: memref<16x128xf32, #tpu.memory_space<vmem>>) attributes {dimension_semantics = [#tpu.dimension_semantics<parallel>, #tpu.dimension_semantics<parallel>, #tpu.dimension_semantics<arbitrary>], iteration_bounds = array<i64: 1, 1, 1>, scalar_prefetch = 0 : i64, scratch_operands = 1 : i64, tpu.core_type = #tpu.core_type<tc>, window_params = [{transform_indices = @transform_0, window_bounds = array<i64: 16, 128>}, {transform_indices = @transform_1, window_bounds = array<i64: 128, 128>}, {transform_indices = @transform_2, window_bounds = array<i64: 1, 128>}, {pipeline_mode = #tpu.pipeline_mode<synchronous>, transform_indices = @transform_3, window_bounds = array<i64: 1, 128>}, {pipeline_mode = #tpu.pipeline_mode<synchronous>, transform_indices = @transform_4, window_bounds = array<i64: 1, 128>}, {transform_indices = @transform_5, window_bounds = array<i64: 16, 128>}]} {
    %c0 = arith.constant 0 : index
    %c0_0 = arith.constant 0 : index
    %0 = vector.load %arg3[%c0, %c0_0] : memref<16x128xbf16, #tpu.memory_space<vmem>>, vector<16x128xbf16>
    %1 = arith.extf %0 : vector<16x128xbf16> to vector<16x128xf32>
    %cst = arith.constant dense<0.000000e+00> : vector<16xf32>
    %2 = vector.multi_reduction <add>, %1, %cst [1] : vector<16x128xf32> to vector<16xf32>
    %3 = vector.shape_cast %2 : vector<16xf32> to vector<16x1xf32>
    %cst_1 = arith.constant 1.280000e+02 : f32
    %4 = vector.broadcast %cst_1 : f32 to vector<16x1xf32>
    %5 = arith.divf %3, %4 : vector<16x1xf32>
    %6 = vector.broadcast %5 : vector<16x1xf32> to vector<16x128xf32>
    %7 = arith.subf %1, %6 : vector<16x128xf32>
    %8 = arith.mulf %7, %7 : vector<16x128xf32>
    %cst_2 = arith.constant dense<0.000000e+00> : vector<16xf32>
    %9 = vector.multi_reduction <add>, %8, %cst_2 [1] : vector<16x128xf32> to vector<16xf32>
    %10 = vector.shape_cast %9 : vector<16xf32> to vector<16x1xf32>
    %cst_3 = arith.constant 0.00787401571 : f32
    %11 = vector.broadcast %cst_3 : f32 to vector<16x1xf32>
    %12 = arith.mulf %10, %11 : vector<16x1xf32>
    %13 = math.sqrt %12 : vector<16x1xf32>
    %cst_4 = arith.constant 9.99999997E-7 : f32
    %14 = vector.broadcast %cst_4 : f32 to vector<16x1xf32>
    %15 = arith.addf %13, %14 : vector<16x1xf32>
    %16 = tpu.reciprocal %15 : vector<16x1xf32> -> vector<16x1xf32>
    %c0_5 = arith.constant 0 : index
    %c0_6 = arith.constant 0 : index
    %17 = vector.load %arg6[%c0_5, %c0_6] : memref<1x128xf32, #tpu.memory_space<vmem>>, vector<1x128xf32>
    %18 = vector.broadcast %17 : vector<1x128xf32> to vector<16x128xf32>
    %19 = arith.mulf %18, %7 : vector<16x128xf32>
    %20 = vector.broadcast %16 : vector<16x1xf32> to vector<16x128xf32>
    %21 = arith.mulf %19, %20 : vector<16x128xf32>
    %c0_7 = arith.constant 0 : index
    %c0_8 = arith.constant 0 : index
    %22 = vector.load %arg7[%c0_7, %c0_8] : memref<1x128xf32, #tpu.memory_space<vmem>>, vector<1x128xf32>
    %23 = vector.broadcast %22 : vector<1x128xf32> to vector<16x128xf32>
    %24 = arith.addf %21, %23 : vector<16x128xf32>
    %25 = arith.truncf %24 : vector<16x128xf32> to vector<16x128xbf16>
    %c0_9 = arith.constant 0 : index
    %c0_10 = arith.constant 0 : index
    %26 = vector.load %arg4[%c0_9, %c0_10] : memref<128x128xbf16, #tpu.memory_space<vmem>>, vector<128x128xbf16>
    %cst_11 = arith.constant dense<0.000000e+00> : vector<16x128xf32>
    %27 = tpu.matmul %25, %26, %cst_11 {dimension_numbers = #tpu.dot_dimension_numbers<[1], [0], [0], [1], [0, 0, 1, 1], [], []>} : vector<16x128xbf16>, vector<128x128xbf16>, vector<16x128xf32> -> vector<16x128xf32>
    %c0_12 = arith.constant 0 : index
    %c0_13 = arith.constant 0 : index
    %28 = vector.load %arg5[%c0_12, %c0_13] : memref<1x128xf32, #tpu.memory_space<vmem>>, vector<1x128xf32>
    %29 = vector.broadcast %28 : vector<1x128xf32> to vector<16x128xf32>
    %30 = arith.addf %27, %29 : vector<16x128xf32>
    %31 = arith.truncf %30 : vector<16x128xf32> to vector<16x128xbf16>
    %c0_14 = arith.constant 0 : index
    %c0_15 = arith.constant 0 : index
    %32 = vector.load %arg8[%c0_14, %c0_15] : memref<16x128xbf16, #tpu.memory_space<vmem>>, vector<16x128xbf16>
    tpu.vector_store %arg8[%c0_14, %c0_15], %31 {strides = array<i32>} : memref<16x128xbf16, #tpu.memory_space<vmem>>, vector<16x128xbf16>,
    return
  }
  func.func @transform_0(%arg0: i32, %arg1: i32, %arg2: i32) -> (i32, i32) {
    %c0_i32 = arith.constant 0 : i32
    return %arg0, %arg2 : i32, i32
  }
  func.func @transform_1(%arg0: i32, %arg1: i32, %arg2: i32) -> (i32, i32) {
    %c0_i32 = arith.constant 0 : i32
    return %arg2, %arg1 : i32, i32
  }
  func.func @transform_2(%arg0: i32, %arg1: i32, %arg2: i32) -> (i32, i32) {
    %c0_i32 = arith.constant 0 : i32
    %c0_i32_0 = arith.constant 0 : i32
    return %c0_i32, %arg1 : i32, i32
  }
  func.func @transform_3(%arg0: i32, %arg1: i32, %arg2: i32) -> (i32, i32) {
    %c0_i32 = arith.constant 0 : i32
    %c0_i32_0 = arith.constant 0 : i32
    %c0_i32_1 = arith.constant 0 : i32
    return %c0_i32, %c0_i32_0 : i32, i32
  }
  func.func @transform_4(%arg0: i32, %arg1: i32, %arg2: i32) -> (i32, i32) {
    %c0_i32 = arith.constant 0 : i32
    %c0_i32_0 = arith.constant 0 : i32
    %c0_i32_1 = arith.constant 0 : i32
    return %c0_i32, %c0_i32_0 : i32, i32
  }
  func.func @transform_5(%arg0: i32, %arg1: i32, %arg2: i32) -> (i32, i32) {
    %c0_i32 = arith.constant 0 : i32
    return %arg0, %arg1 : i32, i32
  }
}

module attributes {stable_mosaic.version = 11 : i64} {
  func.func @_mha_ctx_kernel(%arg0: i32, %arg1: i32, %arg2: memref<1x8x128xbf16, #tpu.memory_space<vmem>>, %arg3: memref<1x8x128xbf16, #tpu.memory_space<vmem>>, %arg4: memref<1x8x128xbf16, #tpu.memory_space<vmem>>, %arg5: memref<1x1x8xf32, #tpu.memory_space<vmem>>, %arg6: memref<1x8x128xbf16, #tpu.memory_space<vmem>>, %arg7: memref<1x8x8xf32, #tpu.memory_space<vmem>>) attributes {dimension_semantics = [#tpu.dimension_semantics<parallel>, #tpu.dimension_semantics<parallel>], iteration_bounds = array<i64: 2, 1>, scalar_prefetch = 0 : i64, scratch_operands = 0 : i64, tpu.core_type = #tpu.core_type<tc>, window_params = [{transform_indices = @transform_0, window_bounds = array<i64: 1, 8, 128>}, {transform_indices = @transform_1, window_bounds = array<i64: 1, 8, 128>}, {transform_indices = @transform_2, window_bounds = array<i64: 1, 8, 128>}, {transform_indices = @transform_3, window_bounds = array<i64: 1, 1, 8>}, {transform_indices = @transform_4, window_bounds = array<i64: 1, 8, 128>}, {transform_indices = @transform_5, window_bounds = array<i64: 1, 8, 8>}]} {
    %c0 = arith.constant 0 : index
    %c0_0 = arith.constant 0 : index
    %c0_1 = arith.constant 0 : index
    %0 = vector.load %arg5[%c0, %c0_0, %c0_1] : memref<1x1x8xf32, #tpu.memory_space<vmem>>, vector<1x1x8xf32>
    %1 = vector.shape_cast %0 : vector<1x1x8xf32> to vector<1x8xf32>
    %cst = arith.constant 0.000000e+00 : f32
    %2 = vector.broadcast %cst : f32 to vector<1x8xf32>
    %3 = arith.cmpf ogt, %1, %2 : vector<1x8xf32>
    %4 = vector.shape_cast %3 : vector<1x8xi1> to vector<1x8xi1>
    %5 = vector.broadcast %4 : vector<1x8xi1> to vector<8x8xi1>
    %c0_2 = arith.constant 0 : index
    %c0_3 = arith.constant 0 : index
    %c0_4 = arith.constant 0 : index
    %6 = vector.load %arg2[%c0_2, %c0_3, %c0_4] : memref<1x8x128xbf16, #tpu.memory_space<vmem>>, vector<1x8x128xbf16>
    %7 = vector.shape_cast %6 : vector<1x8x128xbf16> to vector<8x128xbf16>
    %c0_5 = arith.constant 0 : index
    %c0_6 = arith.constant 0 : index
    %c0_7 = arith.constant 0 : index
    %8 = vector.load %arg3[%c0_5, %c0_6, %c0_7] : memref<1x8x128xbf16, #tpu.memory_space<vmem>>, vector<1x8x128xbf16>
    %9 = vector.shape_cast %8 : vector<1x8x128xbf16> to vector<8x128xbf16>
    %c0_8 = arith.constant 0 : index
    %c0_9 = arith.constant 0 : index
    %c0_10 = arith.constant 0 : index
    %10 = vector.load %arg4[%c0_8, %c0_9, %c0_10] : memref<1x8x128xbf16, #tpu.memory_space<vmem>>, vector<1x8x128xbf16>
    %11 = vector.shape_cast %10 : vector<1x8x128xbf16> to vector<8x128xbf16>
    %12 = vector.extract_strided_slice %7 {offsets = [0, 0], sizes = [8, 32], strides = [1, 1]} : vector<8x128xbf16> to vector<8x32xbf16>
    %13 = vector.extract_strided_slice %9 {offsets = [0, 0], sizes = [8, 32], strides = [1, 1]} : vector<8x128xbf16> to vector<8x32xbf16>
    %cst_11 = arith.constant dense<0.000000e+00> : vector<8x8xf32>
    %14 = tpu.matmul %12, %13, %cst_11 {dimension_numbers = #tpu.dot_dimension_numbers<[1], [1], [0], [0], [0, 0, 1, 0], [], []>} : vector<8x32xbf16>, vector<8x32xbf16>, vector<8x8xf32> -> vector<8x8xf32>
    %cst_12 = arith.constant 0.176776692 : f32
    %15 = vector.broadcast %cst_12 : f32 to vector<8x8xf32>
    %16 = arith.mulf %14, %15 : vector<8x8xf32>
    %cst_13 = arith.constant -9.99999984E+17 : f32
    %17 = vector.broadcast %cst_13 : f32 to vector<8x8xf32>
    %18 = arith.select %5, %17, %16 : vector<8x8xi1>, vector<8x8xf32>
    %cst_14 = arith.constant dense<0xFF800000> : vector<8xf32>
    %19 = vector.multi_reduction <maximumf>, %18, %cst_14 [1] : vector<8x8xf32> to vector<8xf32>
    %20 = vector.shape_cast %19 : vector<8xf32> to vector<8x1xf32>
    %21 = vector.broadcast %20 : vector<8x1xf32> to vector<8x8xf32>
    %22 = arith.subf %18, %21 : vector<8x8xf32>
    %23 = math.exp %22 : vector<8x8xf32>
    %cst_15 = arith.constant dense<0.000000e+00> : vector<8xf32>
    %24 = vector.multi_reduction <add>, %23, %cst_15 [1] : vector<8x8xf32> to vector<8xf32>
    %25 = vector.shape_cast %24 : vector<8xf32> to vector<8x1xf32>
    %26 = tpu.reciprocal %25 {approx = true} : vector<8x1xf32> -> vector<8x1xf32>
    %27 = vector.broadcast %26 : vector<8x1xf32> to vector<8x8xf32>
    %28 = arith.mulf %23, %27 : vector<8x8xf32>
    %c0_16 = arith.constant 0 : index
    %c0_17 = arith.constant 0 : index
    %c0_18 = arith.constant 0 : index
    %29 = vector.load %arg7[%c0_16, %c0_17, %c0_18] : memref<1x8x8xf32, #tpu.memory_space<vmem>>, vector<1x8x8xf32>
    %30 = vector.shape_cast %29 : vector<1x8x8xf32> to vector<8x8xf32>
    %31 = vector.shape_cast %28 : vector<8x8xf32> to vector<1x8x8xf32>
    tpu.vector_store %arg7[%c0_16, %c0_17, %c0_18], %31 {strides = array<i32>} : memref<1x8x8xf32, #tpu.memory_space<vmem>>, vector<1x8x8xf32>,
    %32 = arith.truncf %28 : vector<8x8xf32> to vector<8x8xbf16>
    %33 = vector.extract_strided_slice %11 {offsets = [0, 0], sizes = [8, 32], strides = [1, 1]} : vector<8x128xbf16> to vector<8x32xbf16>
    %cst_19 = arith.constant dense<0.000000e+00> : vector<8x32xf32>
    %34 = tpu.matmul %32, %33, %cst_19 {dimension_numbers = #tpu.dot_dimension_numbers<[1], [0], [0], [1], [0, 0, 1, 1], [], []>} : vector<8x8xbf16>, vector<8x32xbf16>, vector<8x32xf32> -> vector<8x32xf32>
    %35 = vector.extract_strided_slice %7 {offsets = [0, 32], sizes = [8, 32], strides = [1, 1]} : vector<8x128xbf16> to vector<8x32xbf16>
    %36 = vector.extract_strided_slice %9 {offsets = [0, 32], sizes = [8, 32], strides = [1, 1]} : vector<8x128xbf16> to vector<8x32xbf16>
    %cst_20 = arith.constant dense<0.000000e+00> : vector<8x8xf32>
    %37 = tpu.matmul %35, %36, %cst_20 {dimension_numbers = #tpu.dot_dimension_numbers<[1], [1], [0], [0], [0, 0, 1, 0], [], []>} : vector<8x32xbf16>, vector<8x32xbf16>, vector<8x8xf32> -> vector<8x8xf32>
    %cst_21 = arith.constant 0.176776692 : f32
    %38 = vector.broadcast %cst_21 : f32 to vector<8x8xf32>
    %39 = arith.mulf %37, %38 : vector<8x8xf32>
    %cst_22 = arith.constant -9.99999984E+17 : f32
    %40 = vector.broadcast %cst_22 : f32 to vector<8x8xf32>
    %41 = arith.select %5, %40, %39 : vector<8x8xi1>, vector<8x8xf32>
    %cst_23 = arith.constant dense<0xFF800000> : vector<8xf32>
    %42 = vector.multi_reduction <maximumf>, %41, %cst_23 [1] : vector<8x8xf32> to vector<8xf32>
    %43 = vector.shape_cast %42 : vector<8xf32> to vector<8x1xf32>
    %44 = vector.broadcast %43 : vector<8x1xf32> to vector<8x8xf32>
    %45 = arith.subf %41, %44 : vector<8x8xf32>
    %46 = math.exp %45 : vector<8x8xf32>
    %cst_24 = arith.constant dense<0.000000e+00> : vector<8xf32>
    %47 = vector.multi_reduction <add>, %46, %cst_24 [1] : vector<8x8xf32> to vector<8xf32>
    %48 = vector.shape_cast %47 : vector<8xf32> to vector<8x1xf32>
    %49 = tpu.reciprocal %48 {approx = true} : vector<8x1xf32> -> vector<8x1xf32>
    %50 = vector.broadcast %49 : vector<8x1xf32> to vector<8x8xf32>
    %51 = arith.mulf %46, %50 : vector<8x8xf32>
    %52 = arith.truncf %51 : vector<8x8xf32> to vector<8x8xbf16>
    %53 = vector.extract_strided_slice %11 {offsets = [0, 32], sizes = [8, 32], strides = [1, 1]} : vector<8x128xbf16> to vector<8x32xbf16>
    %cst_25 = arith.constant dense<0.000000e+00> : vector<8x32xf32>
    %54 = tpu.matmul %52, %53, %cst_25 {dimension_numbers = #tpu.dot_dimension_numbers<[1], [0], [0], [1], [0, 0, 1, 1], [], []>} : vector<8x8xbf16>, vector<8x32xbf16>, vector<8x32xf32> -> vector<8x32xf32>
    %55 = vector.extract_strided_slice %7 {offsets = [0, 64], sizes = [8, 32], strides = [1, 1]} : vector<8x128xbf16> to vector<8x32xbf16>
    %56 = vector.extract_strided_slice %9 {offsets = [0, 64], sizes = [8, 32], strides = [1, 1]} : vector<8x128xbf16> to vector<8x32xbf16>
    %cst_26 = arith.constant dense<0.000000e+00> : vector<8x8xf32>
    %57 = tpu.matmul %55, %56, %cst_26 {dimension_numbers = #tpu.dot_dimension_numbers<[1], [1], [0], [0], [0, 0, 1, 0], [], []>} : vector<8x32xbf16>, vector<8x32xbf16>, vector<8x8xf32> -> vector<8x8xf32>
    %cst_27 = arith.constant 0.176776692 : f32
    %58 = vector.broadcast %cst_27 : f32 to vector<8x8xf32>
    %59 = arith.mulf %57, %58 : vector<8x8xf32>
    %cst_28 = arith.constant -9.99999984E+17 : f32
    %60 = vector.broadcast %cst_28 : f32 to vector<8x8xf32>
    %61 = arith.select %5, %60, %59 : vector<8x8xi1>, vector<8x8xf32>
    %cst_29 = arith.constant dense<0xFF800000> : vector<8xf32>
    %62 = vector.multi_reduction <maximumf>, %61, %cst_29 [1] : vector<8x8xf32> to vector<8xf32>
    %63 = vector.shape_cast %62 : vector<8xf32> to vector<8x1xf32>
    %64 = vector.broadcast %63 : vector<8x1xf32> to vector<8x8xf32>
    %65 = arith.subf %61, %64 : vector<8x8xf32>
    %66 = math.exp %65 : vector<8x8xf32>
    %cst_30 = arith.constant dense<0.000000e+00> : vector<8xf32>
    %67 = vector.multi_reduction <add>, %66, %cst_30 [1] : vector<8x8xf32> to vector<8xf32>
    %68 = vector.shape_cast %67 : vector<8xf32> to vector<8x1xf32>
    %69 = tpu.reciprocal %68 {approx = true} : vector<8x1xf32> -> vector<8x1xf32>
    %70 = vector.broadcast %69 : vector<8x1xf32> to vector<8x8xf32>
    %71 = arith.mulf %66, %70 : vector<8x8xf32>
    %72 = arith.truncf %71 : vector<8x8xf32> to vector<8x8xbf16>
    %73 = vector.extract_strided_slice %11 {offsets = [0, 64], sizes = [8, 32], strides = [1, 1]} : vector<8x128xbf16> to vector<8x32xbf16>
    %cst_31 = arith.constant dense<0.000000e+00> : vector<8x32xf32>
    %74 = tpu.matmul %72, %73, %cst_31 {dimension_numbers = #tpu.dot_dimension_numbers<[1], [0], [0], [1], [0, 0, 1, 1], [], []>} : vector<8x8xbf16>, vector<8x32xbf16>, vector<8x32xf32> -> vector<8x32xf32>
    %75 = vector.extract_strided_slice %7 {offsets = [0, 96], sizes = [8, 32], strides = [1, 1]} : vector<8x128xbf16> to vector<8x32xbf16>
    %76 = vector.extract_strided_slice %9 {offsets = [0, 96], sizes = [8, 32], strides = [1, 1]} : vector<8x128xbf16> to vector<8x32xbf16>
    %cst_32 = arith.constant dense<0.000000e+00> : vector<8x8xf32>
    %77 = tpu.matmul %75, %76, %cst_32 {dimension_numbers = #tpu.dot_dimension_numbers<[1], [1], [0], [0], [0, 0, 1, 0], [], []>} : vector<8x32xbf16>, vector<8x32xbf16>, vector<8x8xf32> -> vector<8x8xf32>
    %cst_33 = arith.constant 0.176776692 : f32
    %78 = vector.broadcast %cst_33 : f32 to vector<8x8xf32>
    %79 = arith.mulf %77, %78 : vector<8x8xf32>
    %cst_34 = arith.constant -9.99999984E+17 : f32
    %80 = vector.broadcast %cst_34 : f32 to vector<8x8xf32>
    %81 = arith.select %5, %80, %79 : vector<8x8xi1>, vector<8x8xf32>
    %cst_35 = arith.constant dense<0xFF800000> : vector<8xf32>
    %82 = vector.multi_reduction <maximumf>, %81, %cst_35 [1] : vector<8x8xf32> to vector<8xf32>
    %83 = vector.shape_cast %82 : vector<8xf32> to vector<8x1xf32>
    %84 = vector.broadcast %83 : vector<8x1xf32> to vector<8x8xf32>
    %85 = arith.subf %81, %84 : vector<8x8xf32>
    %86 = math.exp %85 : vector<8x8xf32>
    %cst_36 = arith.constant dense<0.000000e+00> : vector<8xf32>
    %87 = vector.multi_reduction <add>, %86, %cst_36 [1] : vector<8x8xf32> to vector<8xf32>
    %88 = vector.shape_cast %87 : vector<8xf32> to vector<8x1xf32>
    %89 = tpu.reciprocal %88 {approx = true} : vector<8x1xf32> -> vector<8x1xf32>
    %90 = vector.broadcast %89 : vector<8x1xf32> to vector<8x8xf32>
    %91 = arith.mulf %86, %90 : vector<8x8xf32>
    %92 = arith.truncf %91 : vector<8x8xf32> to vector<8x8xbf16>
    %93 = vector.extract_strided_slice %11 {offsets = [0, 96], sizes = [8, 32], strides = [1, 1]} : vector<8x128xbf16> to vector<8x32xbf16>
    %cst_37 = arith.constant dense<0.000000e+00> : vector<8x32xf32>
    %94 = tpu.matmul %92, %93, %cst_37 {dimension_numbers = #tpu.dot_dimension_numbers<[1], [0], [0], [1], [0, 0, 1, 1], [], []>} : vector<8x8xbf16>, vector<8x32xbf16>, vector<8x32xf32> -> vector<8x32xf32>
    %95 = tpu.concatenate %34, %54, %74, %94 in 1 : vector<8x32xf32>, vector<8x32xf32>, vector<8x32xf32>, vector<8x32xf32> -> vector<8x128xf32>
    %96 = arith.truncf %95 : vector<8x128xf32> to vector<8x128xbf16>
    %c0_38 = arith.constant 0 : index
    %c0_39 = arith.constant 0 : index
    %c0_40 = arith.constant 0 : index
    %97 = vector.load %arg6[%c0_38, %c0_39, %c0_40] : memref<1x8x128xbf16, #tpu.memory_space<vmem>>, vector<1x8x128xbf16>
    %98 = vector.shape_cast %97 : vector<1x8x128xbf16> to vector<8x128xbf16>
    %99 = vector.shape_cast %96 : vector<8x128xbf16> to vector<1x8x128xbf16>
    tpu.vector_store %arg6[%c0_38, %c0_39, %c0_40], %99 {strides = array<i32>} : memref<1x8x128xbf16, #tpu.memory_space<vmem>>, vector<1x8x128xbf16>,
    return
  }
  func.func @transform_0(%arg0: i32, %arg1: i32) -> (i32, i32, i32) {
    %c0_i32 = arith.constant 0 : i32
    %c0_i32_0 = arith.constant 0 : i32
    return %arg0, %arg1, %c0_i32 : i32, i32, i32
  }
  func.func @transform_1(%arg0: i32, %arg1: i32) -> (i32, i32, i32) {
    %c0_i32 = arith.constant 0 : i32
    %c0_i32_0 = arith.constant 0 : i32
    %c0_i32_1 = arith.constant 0 : i32
    return %arg0, %c0_i32, %c0_i32_0 : i32, i32, i32
  }
  func.func @transform_2(%arg0: i32, %arg1: i32) -> (i32, i32, i32) {
    %c0_i32 = arith.constant 0 : i32
    %c1_i32 = arith.constant 1 : i32
    %c0_i32_0 = arith.constant 0 : i32
    return %arg0, %c0_i32, %c1_i32 : i32, i32, i32
  }
  func.func @transform_3(%arg0: i32, %arg1: i32) -> (i32, i32, i32) {
    %c0_i32 = arith.constant 0 : i32
    %c0_i32_0 = arith.constant 0 : i32
    %c0_i32_1 = arith.constant 0 : i32
    return %arg0, %c0_i32, %c0_i32_0 : i32, i32, i32
  }
  func.func @transform_4(%arg0: i32, %arg1: i32) -> (i32, i32, i32) {
    %c0_i32 = arith.constant 0 : i32
    %c0_i32_0 = arith.constant 0 : i32
    return %arg0, %arg1, %c0_i32 : i32, i32, i32
  }
  func.func @transform_5(%arg0: i32, %arg1: i32) -> (i32, i32, i32) {
    %c0_i32 = arith.constant 0 : i32
    %c0_i32_0 = arith.constant 0 : i32
    return %arg0, %arg1, %c0_i32 : i32, i32, i32
  }
}

module attributes {stable_mosaic.version = 11 : i64} {
  func.func @_linear_kernel(%arg0: i32, %arg1: i32, %arg2: i32, %arg3: memref<16x128xbf16, #tpu.memory_space<vmem>>, %arg4: memref<128x256xbf16, #tpu.memory_space<vmem>>, %arg5: memref<1x256xf32, #tpu.memory_space<vmem>>, %arg6: memref<16x256xbf16, #tpu.memory_space<vmem>>, %arg7: memref<16x256xf32, #tpu.memory_space<vmem>>) attributes {dimension_semantics = [#tpu.dimension_semantics<parallel>, #tpu.dimension_semantics<parallel>, #tpu.dimension_semantics<arbitrary>], iteration_bounds = array<i64: 1, 1, 1>, scalar_prefetch = 0 : i64, scratch_operands = 1 : i64, tpu.core_type = #tpu.core_type<tc>, window_params = [{transform_indices = @transform_0, window_bounds = array<i64: 16, 128>}, {transform_indices = @transform_1, window_bounds = array<i64: 128, 256>}, {transform_indices = @transform_2, window_bounds = array<i64: 1, 256>}, {transform_indices = @transform_3, window_bounds = array<i64: 16, 256>}]} {
    %c0 = arith.constant 0 : index
    %c0_0 = arith.constant 0 : index
    %0 = vector.load %arg3[%c0, %c0_0] : memref<16x128xbf16, #tpu.memory_space<vmem>>, vector<16x128xbf16>
    %c0_1 = arith.constant 0 : index
    %c0_2 = arith.constant 0 : index
    %1 = vector.load %arg4[%c0_1, %c0_2] : memref<128x256xbf16, #tpu.memory_space<vmem>>, vector<128x256xbf16>
    %cst = arith.constant dense<0.000000e+00> : vector<16x256xf32>
    %2 = tpu.matmul %0, %1, %cst {dimension_numbers = #tpu.dot_dimension_numbers<[1], [0], [0], [1], [0, 0, 1, 1], [], []>} : vector<16x128xbf16>, vector<128x256xbf16>, vector<16x256xf32> -> vector<16x256xf32>
    %c0_3 = arith.constant 0 : index
    %c0_4 = arith.constant 0 : index
    %3 = vector.load %arg5[%c0_3, %c0_4] : memref<1x256xf32, #tpu.memory_space<vmem>>, vector<1x256xf32>
    %4 = vector.broadcast %3 : vector<1x256xf32> to vector<16x256xf32>
    %5 = arith.addf %2, %4 : vector<16x256xf32>
    %6 = arith.truncf %5 : vector<16x256xf32> to vector<16x256xbf16>
    %c0_5 = arith.constant 0 : index
    %c0_6 = arith.constant 0 : index
    %7 = vector.load %arg6[%c0_5, %c0_6] : memref<16x256xbf16, #tpu.memory_space<vmem>>, vector<16x256xbf16>
    tpu.vector_store %arg6[%c0_5, %c0_6], %6 {strides = array<i32>} : memref<16x256xbf16, #tpu.memory_space<vmem>>, vector<16x256xbf16>,
    return
  }
  func.func @transform_0(%arg0: i32, %arg1: i32, %arg2: i32) -> (i32, i32) {
    %c0_i32 = arith.constant 0 : i32
    return %arg0, %arg2 : i32, i32
  }
  func.func @transform_1(%arg0: i32, %arg1: i32, %arg2: i32) -> (i32, i32) {
    %c0_i32 = arith.constant 0 : i32
    return %arg2, %arg1 : i32, i32
  }
  func.func @transform_2(%arg0: i32, %arg1: i32, %arg2: i32) -> (i32, i32) {
    %c0_i32 = arith.constant 0 : i32
    %c0_i32_0 = arith.constant 0 : i32
    return %c0_i32, %arg1 : i32, i32
  }
  func.func @transform_3(%arg0: i32, %arg1: i32, %arg2: i32) -> (i32, i32) {
    %c0_i32 = arith.constant 0 : i32
    return %arg0, %arg1 : i32, i32
  }
}

module attributes {stable_mosaic.version = 11 : i64} {
  func.func @_ffn_kernel(%arg0: i32, %arg1: i32, %arg2: memref<16x128xbf16, #tpu.memory_space<vmem>>, %arg3: memref<128x256xbf16, #tpu.memory_space<vmem>>, %arg4: memref<1x256xf32, #tpu.memory_space<vmem>>, %arg5: memref<256x128xbf16, #tpu.memory_space<vmem>>, %arg6: memref<1x128xf32, #tpu.memory_space<vmem>>, %arg7: memref<1x128xf32, #tpu.memory_space<vmem>>, %arg8: memref<1x128xf32, #tpu.memory_space<vmem>>, %arg9: memref<16x128xbf16, #tpu.memory_space<vmem>>, %arg10: memref<16x128xbf16, #tpu.memory_space<vmem>>, %arg11: memref<16x128xf32, #tpu.memory_space<vmem>>, %arg12: memref<16x128xbf16, #tpu.memory_space<vmem>>) attributes {dimension_semantics = [#tpu.dimension_semantics<parallel>, #tpu.dimension_semantics<arbitrary>], iteration_bounds = array<i64: 1, 1>, scalar_prefetch = 0 : i64, scratch_operands = 2 : i64, tpu.core_type = #tpu.core_type<tc>, window_params = [{transform_indices = @transform_0, window_bounds = array<i64: 16, 128>}, {transform_indices = @transform_1, window_bounds = array<i64: 128, 256>}, {transform_indices = @transform_2, window_bounds = array<i64: 1, 256>}, {transform_indices = @transform_3, window_bounds = array<i64: 256, 128>}, {pipeline_mode = #tpu.pipeline_mode<synchronous>, transform_indices = @transform_4, window_bounds = array<i64: 1, 128>}, {pipeline_mode = #tpu.pipeline_mode<synchronous>, transform_indices = @transform_5, window_bounds = array<i64: 1, 128>}, {pipeline_mode = #tpu.pipeline_mode<synchronous>, transform_indices = @transform_6, window_bounds = array<i64: 1, 128>}, {transform_indices = @transform_7, window_bounds = array<i64: 16, 128>}, {transform_indices = @transform_8, window_bounds = array<i64: 16, 128>}]} {
    %c0 = arith.constant 0 : index
    %c0_0 = arith.constant 0 : index
    %0 = vector.load %arg2[%c0, %c0_0] : memref<16x128xbf16, #tpu.memory_space<vmem>>, vector<16x128xbf16>
    %1 = arith.extf %0 : vector<16x128xbf16> to vector<16x128xf32>
    %cst = arith.constant dense<0.000000e+00> : vector<16xf32>
    %2 = vector.multi_reduction <add>, %1, %cst [1] : vector<16x128xf32> to vector<16xf32>
    %3 = vector.shape_cast %2 : vector<16xf32> to vector<16x1xf32>
    %cst_1 = arith.constant 1.280000e+02 : f32
    %4 = vector.broadcast %cst_1 : f32 to vector<16x1xf32>
    %5 = arith.divf %3, %4 : vector<16x1xf32>
    %6 = vector.broadcast %5 : vector<16x1xf32> to vector<16x128xf32>
    %7 = arith.subf %1, %6 : vector<16x128xf32>
    %8 = arith.mulf %7, %7 : vector<16x128xf32>
    %cst_2 = arith.constant dense<0.000000e+00> : vector<16xf32>
    %9 = vector.multi_reduction <add>, %8, %cst_2 [1] : vector<16x128xf32> to vector<16xf32>
    %10 = vector.shape_cast %9 : vector<16xf32> to vector<16x1xf32>
    %cst_3 = arith.constant 0.00787401571 : f32
    %11 = vector.broadcast %cst_3 : f32 to vector<16x1xf32>
    %12 = arith.mulf %10, %11 : vector<16x1xf32>
    %13 = math.sqrt %12 : vector<16x1xf32>
    %cst_4 = arith.constant 9.99999997E-7 : f32
    %14 = vector.broadcast %cst_4 : f32 to vector<16x1xf32>
    %15 = arith.addf %13, %14 : vector<16x1xf32>
    %16 = tpu.reciprocal %15 : vector<16x1xf32> -> vector<16x1xf32>
    %c0_5 = arith.constant 0 : index
    %c0_6 = arith.constant 0 : index
    %17 = vector.load %arg7[%c0_5, %c0_6] : memref<1x128xf32, #tpu.memory_space<vmem>>, vector<1x128xf32>
    %18 = vector.broadcast %17 : vector<1x128xf32> to vector<16x128xf32>
    %19 = arith.mulf %18, %7 : vector<16x128xf32>
    %20 = vector.broadcast %16 : vector<16x1xf32> to vector<16x128xf32>
    %21 = arith.mulf %19, %20 : vector<16x128xf32>
    %c0_7 = arith.constant 0 : index
    %c0_8 = arith.constant 0 : index
    %22 = vector.load %arg8[%c0_7, %c0_8] : memref<1x128xf32, #tpu.memory_space<vmem>>, vector<1x128xf32>
    %23 = vector.broadcast %22 : vector<1x128xf32> to vector<16x128xf32>
    %24 = arith.addf %21, %23 : vector<16x128xf32>
    %25 = arith.truncf %24 : vector<16x128xf32> to vector<16x128xbf16>
    %c0_9 = arith.constant 0 : index
    %c0_10 = arith.constant 0 : index
    %26 = vector.load %arg3[%c0_9, %c0_10] : memref<128x256xbf16, #tpu.memory_space<vmem>>, vector<128x256xbf16>
    %cst_11 = arith.constant dense<0.000000e+00> : vector<16x256xf32>
    %27 = tpu.matmul %25, %26, %cst_11 {dimension_numbers = #tpu.dot_dimension_numbers<[1], [0], [0], [1], [0, 0, 1, 1], [], []>} : vector<16x128xbf16>, vector<128x256xbf16>, vector<16x256xf32> -> vector<16x256xf32>
    %c0_12 = arith.constant 0 : index
    %c0_13 = arith.constant 0 : index
    %28 = vector.load %arg4[%c0_12, %c0_13] : memref<1x256xf32, #tpu.memory_space<vmem>>, vector<1x256xf32>
    %29 = vector.broadcast %28 : vector<1x256xf32> to vector<16x256xf32>
    %30 = arith.addf %27, %29 : vector<16x256xf32>
    %cst_14 = arith.constant 0.000000e+00 : f32
    %31 = vector.broadcast %cst_14 : f32 to vector<16x256xf32>
    %32 = arith.maximumf %30, %31 : vector<16x256xf32>
    %33 = arith.truncf %32 : vector<16x256xf32> to vector<16x256xbf16>
    %c0_15 = arith.constant 0 : index
    %c0_16 = arith.constant 0 : index
    %34 = vector.load %arg5[%c0_15, %c0_16] : memref<256x128xbf16, #tpu.memory_space<vmem>>, vector<256x128xbf16>
    %cst_17 = arith.constant dense<0.000000e+00> : vector<16x128xf32>
    %35 = tpu.matmul %33, %34, %cst_17 {dimension_numbers = #tpu.dot_dimension_numbers<[1], [0], [0], [1], [0, 0, 1, 1], [], []>} : vector<16x256xbf16>, vector<256x128xbf16>, vector<16x128xf32> -> vector<16x128xf32>
    %cst_18 = arith.constant 0.000000e+00 : f32
    %36 = vector.broadcast %cst_18 : f32 to vector<16x128xf32>
    %37 = arith.addf %36, %35 : vector<16x128xf32>
    %c0_19 = arith.constant 0 : index
    %c0_20 = arith.constant 0 : index
    %38 = vector.load %arg6[%c0_19, %c0_20] : memref<1x128xf32, #tpu.memory_space<vmem>>, vector<1x128xf32>
    %39 = vector.broadcast %38 : vector<1x128xf32> to vector<16x128xf32>
    %40 = arith.addf %37, %39 : vector<16x128xf32>
    %c0_21 = arith.constant 0 : index
    %c0_22 = arith.constant 0 : index
    %41 = vector.load %arg9[%c0_21, %c0_22] : memref<16x128xbf16, #tpu.memory_space<vmem>>, vector<16x128xbf16>
    %42 = arith.extf %41 : vector<16x128xbf16> to vector<16x128xf32>
    %43 = arith.addf %40, %42 : vector<16x128xf32>
    %44 = arith.truncf %43 : vector<16x128xf32> to vector<16x128xbf16>
    %c0_23 = arith.constant 0 : index
    %c0_24 = arith.constant 0 : index
    %45 = vector.load %arg10[%c0_23, %c0_24] : memref<16x128xbf16, #tpu.memory_space<vmem>>, vector<16x128xbf16>
    tpu.vector_store %arg10[%c0_23, %c0_24], %44 {strides = array<i32>} : memref<16x128xbf16, #tpu.memory_space<vmem>>, vector<16x128xbf16>,
    return
  }
  func.func @transform_0(%arg0: i32, %arg1: i32) -> (i32, i32) {
    %c0_i32 = arith.constant 0 : i32
    %c0_i32_0 = arith.constant 0 : i32
    return %arg0, %c0_i32 : i32, i32
  }
  func.func @transform_1(%arg0: i32, %arg1: i32) -> (i32, i32) {
    %c0_i32 = arith.constant 0 : i32
    %c0_i32_0 = arith.constant 0 : i32
    return %c0_i32, %arg1 : i32, i32
  }
  func.func @transform_2(%arg0: i32, %arg1: i32) -> (i32, i32) {
    %c0_i32 = arith.constant 0 : i32
    %c0_i32_0 = arith.constant 0 : i32
    return %c0_i32, %arg1 : i32, i32
  }
  func.func @transform_3(%arg0: i32, %arg1: i32) -> (i32, i32) {
    %c0_i32 = arith.constant 0 : i32
    %c0_i32_0 = arith.constant 0 : i32
    return %arg1, %c0_i32 : i32, i32
  }
  func.func @transform_4(%arg0: i32, %arg1: i32) -> (i32, i32) {
    %c0_i32 = arith.constant 0 : i32
    %c0_i32_0 = arith.constant 0 : i32
    %c0_i32_1 = arith.constant 0 : i32
    return %c0_i32, %c0_i32_0 : i32, i32
  }
  func.func @transform_5(%arg0: i32, %arg1: i32) -> (i32, i32) {
    %c0_i32 = arith.constant 0 : i32
    %c0_i32_0 = arith.constant 0 : i32
    %c0_i32_1 = arith.constant 0 : i32
    return %c0_i32, %c0_i32_0 : i32, i32
  }
  func.func @transform_6(%arg0: i32, %arg1: i32) -> (i32, i32) {
    %c0_i32 = arith.constant 0 : i32
    %c0_i32_0 = arith.constant 0 : i32
    %c0_i32_1 = arith.constant 0 : i32
    return %c0_i32, %c0_i32_0 : i32, i32
  }
  func.func @transform_7(%arg0: i32, %arg1: i32) -> (i32, i32) {
    %c0_i32 = arith.constant 0 : i32
    %c0_i32_0 = arith.constant 0 : i32
    return %arg0, %c0_i32 : i32, i32
  }
  func.func @transform_8(%arg0: i32, %arg1: i32) -> (i32, i32) {
    %c0_i32 = arith.constant 0 : i32
    %c0_i32_0 = arith.constant 0 : i32
    return %arg0, %c0_i32 : i32, i32
  }
}

module attributes {stable_mosaic.version = 11 : i64} {
  func.func @_layernorm_kernel(%arg0: i32, %arg1: memref<16x128xbf16, #tpu.memory_space<vmem>>, %arg2: memref<1x128xf32, #tpu.memory_space<vmem>>, %arg3: memref<1x128xf32, #tpu.memory_space<vmem>>, %arg4: memref<16x128xf32, #tpu.memory_space<vmem>>) attributes {dimension_semantics = [#tpu.dimension_semantics<parallel>], iteration_bounds = array<i64: 1>, scalar_prefetch = 0 : i64, scratch_operands = 0 : i64, tpu.core_type = #tpu.core_type<tc>, window_params = [{transform_indices = @transform_0, window_bounds = array<i64: 16, 128>}, {pipeline_mode = #tpu.pipeline_mode<synchronous>, transform_indices = @transform_1, window_bounds = array<i64: 1, 128>}, {pipeline_mode = #tpu.pipeline_mode<synchronous>, transform_indices = @transform_2, window_bounds = array<i64: 1, 128>}, {transform_indices = @transform_3, window_bounds = array<i64: 16, 128>}]} {
    %c0 = arith.constant 0 : index
    %c0_0 = arith.constant 0 : index
    %0 = vector.load %arg1[%c0, %c0_0] : memref<16x128xbf16, #tpu.memory_space<vmem>>, vector<16x128xbf16>
    %1 = arith.extf %0 : vector<16x128xbf16> to vector<16x128xf32>
    %cst = arith.constant dense<0.000000e+00> : vector<16xf32>
    %2 = vector.multi_reduction <add>, %1, %cst [1] : vector<16x128xf32> to vector<16xf32>
    %3 = vector.shape_cast %2 : vector<16xf32> to vector<16x1xf32>
    %cst_1 = arith.constant 1.280000e+02 : f32
    %4 = vector.broadcast %cst_1 : f32 to vector<16x1xf32>
    %5 = arith.divf %3, %4 : vector<16x1xf32>
    %6 = vector.broadcast %5 : vector<16x1xf32> to vector<16x128xf32>
    %7 = arith.subf %1, %6 : vector<16x128xf32>
    %8 = arith.mulf %7, %7 : vector<16x128xf32>
    %cst_2 = arith.constant dense<0.000000e+00> : vector<16xf32>
    %9 = vector.multi_reduction <add>, %8, %cst_2 [1] : vector<16x128xf32> to vector<16xf32>
    %10 = vector.shape_cast %9 : vector<16xf32> to vector<16x1xf32>
    %cst_3 = arith.constant 0.00787401571 : f32
    %11 = vector.broadcast %cst_3 : f32 to vector<16x1xf32>
    %12 = arith.mulf %10, %11 : vector<16x1xf32>
    %13 = math.sqrt %12 : vector<16x1xf32>
    %cst_4 = arith.constant 9.99999997E-7 : f32
    %14 = vector.broadcast %cst_4 : f32 to vector<16x1xf32>
    %15 = arith.addf %13, %14 : vector<16x1xf32>
    %16 = tpu.reciprocal %15 : vector<16x1xf32> -> vector<16x1xf32>
    %c0_5 = arith.constant 0 : index
    %c0_6 = arith.constant 0 : index
    %17 = vector.load %arg2[%c0_5, %c0_6] : memref<1x128xf32, #tpu.memory_space<vmem>>, vector<1x128xf32>
    %18 = vector.broadcast %17 : vector<1x128xf32> to vector<16x128xf32>
    %19 = arith.mulf %18, %7 : vector<16x128xf32>
    %20 = vector.broadcast %16 : vector<16x1xf32> to vector<16x128xf32>
    %21 = arith.mulf %19, %20 : vector<16x128xf32>
    %c0_7 = arith.constant 0 : index
    %c0_8 = arith.constant 0 : index
    %22 = vector.load %arg3[%c0_7, %c0_8] : memref<1x128xf32, #tpu.memory_space<vmem>>, vector<1x128xf32>
    %23 = vector.broadcast %22 : vector<1x128xf32> to vector<16x128xf32>
    %24 = arith.addf %21, %23 : vector<16x128xf32>
    %c0_9 = arith.constant 0 : index
    %c0_10 = arith.constant 0 : index
    %25 = vector.load %arg4[%c0_9, %c0_10] : memref<16x128xf32, #tpu.memory_space<vmem>>, vector<16x128xf32>
    tpu.vector_store %arg4[%c0_9, %c0_10], %24 {strides = array<i32>} : memref<16x128xf32, #tpu.memory_space<vmem>>, vector<16x128xf32>,
    return
  }
  func.func @transform_0(%arg0: i32) -> (i32, i32) {
    %c0_i32 = arith.constant 0 : i32
    %c0_i32_0 = arith.constant 0 : i32
    return %arg0, %c0_i32 : i32, i32
  }
  func.func @transform_1(%arg0: i32) -> (i32, i32) {
    %c0_i32 = arith.constant 0 : i32
    %c0_i32_0 = arith.constant 0 : i32
    %c0_i32_1 = arith.constant 0 : i32
    return %c0_i32, %c0_i32_0 : i32, i32
  }
  func.func @transform_2(%arg0: i32) -> (i32, i32) {
    %c0_i32 = arith.constant 0 : i32
    %c0_i32_0 = arith.constant 0 : i32
    %c0_i32_1 = arith.constant 0 : i32
    return %c0_i32, %c0_i32_0 : i32, i32
  }
  func.func @transform_3(%arg0: i32) -> (i32, i32) {
    %c0_i32 = arith.constant 0 : i32
    %c0_i32_0 = arith.constant 0 : i32
    return %arg0, %c0_i32 : i32, i32
  }
}

</mosaic_0001>

<llo_original>
// kernel: transformer_decoder_forward.19
$region0: #{transformer_decoder_forward.19}
  #allocation0 [shape = 'u32[]', space=smem, size = 0x4, offset = 0x4, fixed_abs, tag = 'smem constant byte address 0x4 - core index']
  #allocation1 [shape = 'u32[144,128]{1,0:T(1,128)}', space=vmem, size = 0x12000, scoped, tag = 'internal scratch']
  #allocation2 [shape = 'f32[16,128]{1,0:T(8,128)}', space=vmem, size = 0x2000, scoped, tag = 'scratch operand']
  %s0 = inlined_call_operand.vmem [shape: bf16[16,128], index: 0, kind: input, shape index: {}]
  %s1 = inlined_call_operand.vmem [shape: bf16[128,128], index: 1, kind: input, shape index: {}]
  %s2 = inlined_call_operand.vmem [shape: f32[1,128], index: 2, kind: input, shape index: {}]
  %s3 = inlined_call_operand.vmem [shape: bf16[16,128], index: 3, kind: input, shape index: {}]
  %s4 = inlined_call_operand.vmem [shape: bf16[16,128], index: 4, kind: output, shape index: {}]
  %s5 = sld [smem:[#allocation0]]
  $region26: #{transformer_decoder_forward.19} parent=0
    _
  %s7 = ssub.s32 1, %s5
  %s8 = scalar_select 0, %s7, %s5
  // Predicated region
  $region2: #{transformer_decoder_forward.19} parent=0 // pred_check
    _
  $region3: #{transformer_decoder_forward.19} parent=0 // pred_check_branch
    %10 = sbr.rel (0) target = $region5
  $region4: #{transformer_decoder_forward.19} parent=0 // pred_region
    _
  $region5: #{transformer_decoder_forward.19} parent=0 // pred_fallthru
    _
  // Predicated region
  $region6: #{transformer_decoder_forward.19} parent=0 // pred_check
    _
  $region7: #{transformer_decoder_forward.19} parent=0 // pred_check_branch
    %12 = sbr.rel (0) target = $region9
  $region8: #{transformer_decoder_forward.19} parent=0 // pred_region
    _
  $region9: #{transformer_decoder_forward.19} parent=0 // pred_fallthru
    _
  // Predicated region
  $region10: #{transformer_decoder_forward.19} parent=0 // pred_check
    _
  $region11: #{transformer_decoder_forward.19} parent=0 // pred_check_branch
    %14 = sbr.rel (0) target = $region13
  $region12: #{transformer_decoder_forward.19} parent=0 // pred_region
    _
  $region13: #{transformer_decoder_forward.19} parent=0 // pred_fallthru
    _
  // Predicated region
  $region14: #{transformer_decoder_forward.19} parent=0 // pred_check
    _
  $region15: #{transformer_decoder_forward.19} parent=0 // pred_check_branch
    %16 = sbr.rel (0) target = $region17
  $region16: #{transformer_decoder_forward.19} parent=0 // pred_region
    _
  $region17: #{transformer_decoder_forward.19} parent=0 // pred_fallthru
    _
  %v18 = vld [vmem:[%s0] sm:$0xf]
  %v19 = vld [vmem:[%s0 + $0x4] sm:$0xf]
  %v20 = vld [vmem:[%s1] sm:$0xf]
  %v21 = vld [vmem:[%s1 + $0x4] sm:$0xf]
  %v22 = vld [vmem:[%s1 + $0x8] sm:$0xf]
  %v23 = vld [vmem:[%s1 + $0xc] sm:$0xf]
  %v24 = vld [vmem:[%s1 + $0x10] sm:$0xf]
  %v25 = vld [vmem:[%s1 + $0x14] sm:$0xf]
  %v26 = vld [vmem:[%s1 + $0x18] sm:$0xf]
  %v27 = vld [vmem:[%s1 + $0x1c] sm:$0xf]
  %v28 = vld [vmem:[%s1 + $0x20] sm:$0xf]
  %v29 = vld [vmem:[%s1 + $0x24] sm:$0xf]
  %v30 = vld [vmem:[%s1 + $0x28] sm:$0xf]
  %v31 = vld [vmem:[%s1 + $0x2c] sm:$0xf]
  %v32 = vld [vmem:[%s1 + $0x30] sm:$0xf]
  %v33 = vld [vmem:[%s1 + $0x34] sm:$0xf]
  %v34 = vld [vmem:[%s1 + $0x38] sm:$0xf]
  %v35 = vld [vmem:[%s1 + $0x3c] sm:$0xf]
  %v36 = vld [vmem:[%s2] sm:$0x1]
  %v38 = vlaneseq
  %v39 = vshrl.u32 %v38, 7
  %v40 = vsub.s32 0, %v39
  %v41 = vrot.slane %v36, %v40
  %v45 = vunpack.c.l.b16 %v18
  %v46 = vunpack.c.l.b16 %v19
  %v47 = vpack.c.b16 %v46, %v45
  %v65 = vunpack.c.l.b16 %v20
  %v66 = vunpack.c.l.b16 %v21
  %v67 = vunpack.c.l.b16 %v22
  %v68 = vunpack.c.l.b16 %v23
  %v69 = vunpack.c.l.b16 %v24
  %v70 = vunpack.c.l.b16 %v25
  %v71 = vunpack.c.l.b16 %v26
  %v72 = vunpack.c.l.b16 %v27
  %v73 = vunpack.c.l.b16 %v28
  %v74 = vunpack.c.l.b16 %v29
  %v75 = vunpack.c.l.b16 %v30
  %v76 = vunpack.c.l.b16 %v31
  %v77 = vunpack.c.l.b16 %v32
  %v78 = vunpack.c.l.b16 %v33
  %v79 = vunpack.c.l.b16 %v34
  %v80 = vunpack.c.l.b16 %v35
  %v81 = vpack.c.b16 %v66, %v65
  %v82 = vpack.c.b16 %v68, %v67
  %v83 = vpack.c.b16 %v70, %v69
  %v84 = vpack.c.b16 %v72, %v71
  %v85 = vpack.c.b16 %v74, %v73
  %v86 = vpack.c.b16 %v76, %v75
  %v87 = vpack.c.b16 %v78, %v77
  %v88 = vpack.c.b16 %v80, %v79
  %97 = vmatprep.subr.bf16.mxu0 0
  %98 = vmatpush1.bf16.msra.mxu0 %v81
  %99 = vmatprep.subr.bf16.mxu0 0
  %100 = vmatpush1.bf16.msra.mxu0 %v82
  %101 = vmatprep.subr.bf16.mxu0 0
  %102 = vmatpush1.bf16.msra.mxu0 %v83
  %103 = vmatprep.subr.bf16.mxu0 0
  %104 = vmatpush1.bf16.msra.mxu0 %v84
  %105 = vmatprep.subr.bf16.mxu0 0
  %106 = vmatpush1.bf16.msra.mxu0 %v85
  %107 = vmatprep.subr.bf16.mxu0 0
  %108 = vmatpush1.bf16.msra.mxu0 %v86
  %109 = vmatprep.subr.bf16.mxu0 0
  %110 = vmatpush1.bf16.msra.mxu0 %v87
  %111 = vmatprep.subr.bf16.mxu0 0
  %112 = vmatpush1.bf16.msra.mxu0 %v88
  %113 = vmatprep.subr.bf16.mxu0 0
  %114 = vmatpush1.bf16.msra.mxu0 0
  %115 = vmatprep.subr.bf16.mxu0 0
  %116 = vmatpush1.bf16.msra.mxu0 0
  %117 = vmatprep.subr.bf16.mxu0 0
  %118 = vmatpush1.bf16.msra.mxu0 0
  %119 = vmatprep.subr.bf16.mxu0 0
  %120 = vmatpush1.bf16.msra.mxu0 0
  %121 = vmatprep.subr.bf16.mxu0 0
  %122 = vmatpush1.bf16.msra.mxu0 0
  %123 = vmatprep.subr.bf16.mxu0 0
  %124 = vmatpush1.bf16.msra.mxu0 0
  %125 = vmatprep.subr.bf16.mxu0 0
  %126 = vmatpush1.bf16.msra.mxu0 0
  %127 = vmatprep.subr.bf16.mxu0 0
  %128 = vmatpush1.bf16.msra.mxu0 0
  %129 = vmatprep.mubr.bf16.mxu0 0
  %130 = vmatmul.mubr.bf16.gmra.mrb[0].mxu0 %v47
  %v131 = vpop.f32.mrb[0].mxu0
  %v132 = vadd.f32 %v41, %v131
  %v133 = vpop.f32.mrb[0].mxu0
  %v134 = vpop.f32.mrb[0].mxu0
  %v135 = vadd.f32 %v41, %v134
  %v136 = vpop.f32.mrb[0].mxu0
  %137 = vdwg.mxu0
  %v138 = vld [vmem:[%s3] sm:$0xf]
  %v139 = vld [vmem:[%s3 + $0x4] sm:$0xf]
  %v140 = vunpack.c.l.bf16 %v138
  %v141 = vunpack.c.l.bf16 %v139
  %v142 = vadd.f32 %v132, %v140
  %v143 = vadd.f32 %v135, %v141
  %v144 = vpack.c.bf16 %v143, %v142
  %v146 = vunpack.c.l.b16 %v144
  %v147 = vunpack.c.h.b16 %v144
  %v148 = vpack.c.b16 %v146, %v146
  %v149 = vpack.c.b16 %v147, %v147
  %152 = vst [vmem:[%s4] sm:$0xf] %v148
  %153 = vst [vmem:[%s4 + $0x4] sm:$0xf] %v149
  // Predicated region
  $region18: #{transformer_decoder_forward.19} parent=0 // pred_check
    _
  $region19: #{transformer_decoder_forward.19} parent=0 // pred_check_branch
    %155 = sbr.rel (0) target = $region21
  $region20: #{transformer_decoder_forward.19} parent=0 // pred_region
    _
  $region21: #{transformer_decoder_forward.19} parent=0 // pred_fallthru
    _
  // Predicated region
  $region22: #{transformer_decoder_forward.19} parent=0 // pred_check
    _
  $region23: #{transformer_decoder_forward.19} parent=0 // pred_check_branch
    %157 = sbr.rel (0) target = $region25
  $region24: #{transformer_decoder_forward.19} parent=0 // pred_region
    _
  $region25: #{transformer_decoder_forward.19} parent=0 // pred_fallthru
    _

// kernel: transformer_decoder_forward.17
$region0: #{transformer_decoder_forward.17}
  #allocation0 [shape = 'u32[]', space=smem, size = 0x4, offset = 0x4, fixed_abs, tag = 'smem constant byte address 0x4 - core index']
  #allocation1 [shape = 'u32[144,128]{1,0:T(1,128)}', space=vmem, size = 0x12000, scoped, tag = 'internal scratch']
  #allocation2 [shape = 'f32[16,384]{1,0:T(8,128)}', space=vmem, size = 0x6000, scoped, tag = 'scratch operand']
  %s0 = inlined_call_operand.vmem [shape: bf16[16,128], index: 0, kind: input, shape index: {}]
  %s1 = inlined_call_operand.vmem [shape: bf16[128,384], index: 1, kind: input, shape index: {}]
  %s2 = inlined_call_operand.vmem [shape: f32[1,384], index: 2, kind: input, shape index: {}]
  %s3 = inlined_call_operand.vmem [shape: f32[1,128], index: 3, kind: input, shape index: {}]
  %s4 = inlined_call_operand.vmem [shape: f32[1,128], index: 4, kind: input, shape index: {}]
  %s5 = inlined_call_operand.vmem [shape: bf16[16,384], index: 5, kind: output, shape index: {}]
  %s6 = sld [smem:[#allocation0]]
  $region30: #{transformer_decoder_forward.17} parent=0
    _
  %s8 = ssub.s32 1, %s6
  %s9 = scalar_select 0, %s8, %s6
  // Predicated region
  $region2: #{transformer_decoder_forward.17} parent=0 // pred_check
    _
  $region3: #{transformer_decoder_forward.17} parent=0 // pred_check_branch
    %11 = sbr.rel (0) target = $region5
  $region4: #{transformer_decoder_forward.17} parent=0 // pred_region
    _
  $region5: #{transformer_decoder_forward.17} parent=0 // pred_fallthru
    _
  // Predicated region
  $region6: #{transformer_decoder_forward.17} parent=0 // pred_check
    _
  $region7: #{transformer_decoder_forward.17} parent=0 // pred_check_branch
    %13 = sbr.rel (0) target = $region9
  $region8: #{transformer_decoder_forward.17} parent=0 // pred_region
    _
  $region9: #{transformer_decoder_forward.17} parent=0 // pred_fallthru
    _
  // Predicated region
  $region10: #{transformer_decoder_forward.17} parent=0 // pred_check
    _
  $region11: #{transformer_decoder_forward.17} parent=0 // pred_check_branch
    %15 = sbr.rel (0) target = $region13
  $region12: #{transformer_decoder_forward.17} parent=0 // pred_region
    _
  $region13: #{transformer_decoder_forward.17} parent=0 // pred_fallthru
    _
  // Predicated region
  $region14: #{transformer_decoder_forward.17} parent=0 // pred_check
    _
  $region15: #{transformer_decoder_forward.17} parent=0 // pred_check_branch
    %17 = sbr.rel (0) target = $region17
  $region16: #{transformer_decoder_forward.17} parent=0 // pred_region
    _
  $region17: #{transformer_decoder_forward.17} parent=0 // pred_fallthru
    _
  // Predicated region
  $region18: #{transformer_decoder_forward.17} parent=0 // pred_check
    _
  $region19: #{transformer_decoder_forward.17} parent=0 // pred_check_branch
    %19 = sbr.rel (0) target = $region21
  $region20: #{transformer_decoder_forward.17} parent=0 // pred_region
    _
  $region21: #{transformer_decoder_forward.17} parent=0 // pred_fallthru
    _
  %v21 = vld [vmem:[%s0] sm:$0xf]
  %v22 = vld [vmem:[%s0 + $0x4] sm:$0xf]
  %v23 = vunpack.c.l.bf16 %v21
  %v24 = vunpack.c.l.bf16 %v22
  %25 = vadd.xlane.f32.xlu0 %v23
  %v26 = vpop.xlane.xlu0 %25
  %27 = vadd.xlane.f32.xlu0 %v24
  %v28 = vpop.xlane.xlu0 %27
  %v29 = vrcp.pop 128.0
  %v30 = vmul.f32 %v26, %v29
  %v31 = vmul.f32 %v28, %v29
  %v32 = vsub.f32 %v23, %v30
  %v33 = vsub.f32 %v24, %v31
  %v34 = vmul.f32 %v32, %v32
  %v35 = vmul.f32 %v33, %v33
  %36 = vadd.xlane.f32.xlu0 %v34
  %v37 = vpop.xlane.xlu0 %36
  %38 = vadd.xlane.f32.xlu0 %v35
  %v39 = vpop.xlane.xlu0 %38
  %v40 = vmul.f32 %v37, 0.007874016
  %v41 = vmul.f32 %v39, 0.007874016
  %v42 = vrsqrt.pop %v40
  %v43 = vmul.f32 %v40, %v42
  %vm44 = vcmp.eq.f32.partialorder %v40, inf
  %v45 = vsel %vm44, %v40, %v43
  %vm46 = vcmp.eq.f32.partialorder %v40, 0.0
  %v47 = vand.u32 %v40, 2147483648
  %v48 = vsel %vm46, %v47, %v45
  %v49 = vrsqrt.pop %v41
  %v50 = vmul.f32 %v41, %v49
  %vm51 = vcmp.eq.f32.partialorder %v41, inf
  %v52 = vsel %vm51, %v41, %v50
  %vm53 = vcmp.eq.f32.partialorder %v41, 0.0
  %v54 = vand.u32 %v41, 2147483648
  %v55 = vsel %vm53, %v54, %v52
  %v56 = vadd.f32 %v48, 1e-06
  %v57 = vadd.f32 %v55, 1e-06
  %v58 = vrcp.pop %v56
  %v59 = vrcp.pop %v57
  %v60 = vld [vmem:[%s3] sm:$0x1]
  %v62 = vlaneseq
  %v63 = vshrl.u32 %v62, 7
  %v64 = vsub.s32 0, %v63
  %v65 = vrot.slane %v60, %v64
  %v67 = vmul.f32 %v65, %v32
  %v68 = vmul.f32 %v65, %v33
  %v69 = vmul.f32 %v67, %v58
  %v70 = vmul.f32 %v68, %v59
  %v71 = vld [vmem:[%s4] sm:$0x1]
  %v73 = vlaneseq
  %v74 = vshrl.u32 %v73, 7
  %v75 = vsub.s32 0, %v74
  %v76 = vrot.slane %v71, %v75
  %v78 = vadd.f32 %v69, %v76
  %v79 = vadd.f32 %v70, %v76
  %v80 = vpack.c.bf16 %v79, %v78
  %v81 = vld [vmem:[%s1] sm:$0xff]
  %v82 = vld [vmem:[%s1 + $0x8] sm:$0xf]
  %v83 = vld [vmem:[%s1 + $0xc] sm:$0xff]
  %v84 = vld [vmem:[%s1 + $0x14] sm:$0xf]
  %v85 = vld [vmem:[%s1 + $0x18] sm:$0xff]
  %v86 = vld [vmem:[%s1 + $0x20] sm:$0xf]
  %v87 = vld [vmem:[%s1 + $0x24] sm:$0xff]
  %v88 = vld [vmem:[%s1 + $0x2c] sm:$0xf]
  %v89 = vld [vmem:[%s1 + $0x30] sm:$0xff]
  %v90 = vld [vmem:[%s1 + $0x38] sm:$0xf]
  %v91 = vld [vmem:[%s1 + $0x3c] sm:$0xff]
  %v92 = vld [vmem:[%s1 + $0x44] sm:$0xf]
  %v93 = vld [vmem:[%s1 + $0x48] sm:$0xff]
  %v94 = vld [vmem:[%s1 + $0x50] sm:$0xf]
  %v95 = vld [vmem:[%s1 + $0x54] sm:$0xff]
  %v96 = vld [vmem:[%s1 + $0x5c] sm:$0xf]
  %v97 = vld [vmem:[%s1 + $0x60] sm:$0xff]
  %v98 = vld [vmem:[%s1 + $0x68] sm:$0xf]
  %v99 = vld [vmem:[%s1 + $0x6c] sm:$0xff]
  %v100 = vld [vmem:[%s1 + $0x74] sm:$0xf]
  %v101 = vld [vmem:[%s1 + $0x78] sm:$0xff]
  %v102 = vld [vmem:[%s1 + $0x80] sm:$0xf]
  %v103 = vld [vmem:[%s1 + $0x84] sm:$0xff]
  %v104 = vld [vmem:[%s1 + $0x8c] sm:$0xf]
  %v105 = vld [vmem:[%s1 + $0x90] sm:$0xff]
  %v106 = vld [vmem:[%s1 + $0x98] sm:$0xf]
  %v107 = vld [vmem:[%s1 + $0x9c] sm:$0xff]
  %v108 = vld [vmem:[%s1 + $0xa4] sm:$0xf]
  %v109 = vld [vmem:[%s1 + $0xa8] sm:$0xff]
  %v110 = vld [vmem:[%s1 + $0xb0] sm:$0xf]
  %v111 = vld [vmem:[%s1 + $0xb4] sm:$0xff]
  %v112 = vld [vmem:[%s1 + $0xbc] sm:$0xf]
  %v113 = vld [vmem:[%s2] sm:$0x7]
  %v115 = vlaneseq
  %v116 = vshrl.u32 %v115, 7
  %v117 = vsub.s32 0, %v116
  %v118 = vrot.slane %v113, %v117
  %v119 = vlaneseq
  %v120 = vshrl.u32 %v119, 7
  %v121 = vsub.s32 1, %v120
  %v122 = vrot.slane %v113, %v121
  %v123 = vlaneseq
  %v124 = vshrl.u32 %v123, 7
  %v125 = vsub.s32 2, %v124
  %v126 = vrot.slane %v113, %v125
  %v162 = vunpack.c.l.b16 %v81
  %v163 = vunpack.c.h.b16 %v81
  %v164 = vunpack.c.l.b16 %v82
  %v165 = vunpack.c.l.b16 %v83
  %v166 = vunpack.c.h.b16 %v83
  %v167 = vunpack.c.l.b16 %v84
  %v168 = vunpack.c.l.b16 %v85
  %v169 = vunpack.c.h.b16 %v85
  %v170 = vunpack.c.l.b16 %v86
  %v171 = vunpack.c.l.b16 %v87
  %v172 = vunpack.c.h.b16 %v87
  %v173 = vunpack.c.l.b16 %v88
  %v174 = vunpack.c.l.b16 %v89
  %v175 = vunpack.c.h.b16 %v89
  %v176 = vunpack.c.l.b16 %v90
  %v177 = vunpack.c.l.b16 %v91
  %v178 = vunpack.c.h.b16 %v91
  %v179 = vunpack.c.l.b16 %v92
  %v180 = vunpack.c.l.b16 %v93
  %v181 = vunpack.c.h.b16 %v93
  %v182 = vunpack.c.l.b16 %v94
  %v183 = vunpack.c.l.b16 %v95
  %v184 = vunpack.c.h.b16 %v95
  %v185 = vunpack.c.l.b16 %v96
  %v186 = vunpack.c.l.b16 %v97
  %v187 = vunpack.c.h.b16 %v97
  %v188 = vunpack.c.l.b16 %v98
  %v189 = vunpack.c.l.b16 %v99
  %v190 = vunpack.c.h.b16 %v99
  %v191 = vunpack.c.l.b16 %v100
  %v192 = vunpack.c.l.b16 %v101
  %v193 = vunpack.c.h.b16 %v101
  %v194 = vunpack.c.l.b16 %v102
  %v195 = vunpack.c.l.b16 %v103
  %v196 = vunpack.c.h.b16 %v103
  %v197 = vunpack.c.l.b16 %v104
  %v198 = vunpack.c.l.b16 %v105
  %v199 = vunpack.c.h.b16 %v105
  %v200 = vunpack.c.l.b16 %v106
  %v201 = vunpack.c.l.b16 %v107
  %v202 = vunpack.c.h.b16 %v107
  %v203 = vunpack.c.l.b16 %v108
  %v204 = vunpack.c.l.b16 %v109
  %v205 = vunpack.c.h.b16 %v109
  %v206 = vunpack.c.l.b16 %v110
  %v207 = vunpack.c.l.b16 %v111
  %v208 = vunpack.c.h.b16 %v111
  %v209 = vunpack.c.l.b16 %v112
  %v210 = vpack.c.b16 %v165, %v162
  %v211 = vpack.c.b16 %v166, %v163
  %v212 = vpack.c.b16 %v167, %v164
  %v213 = vpack.c.b16 %v171, %v168
  %v214 = vpack.c.b16 %v172, %v169
  %v215 = vpack.c.b16 %v173, %v170
  %v216 = vpack.c.b16 %v177, %v174
  %v217 = vpack.c.b16 %v178, %v175
  %v218 = vpack.c.b16 %v179, %v176
  %v219 = vpack.c.b16 %v183, %v180
  %v220 = vpack.c.b16 %v184, %v181
  %v221 = vpack.c.b16 %v185, %v182
  %v222 = vpack.c.b16 %v189, %v186
  %v223 = vpack.c.b16 %v190, %v187
  %v224 = vpack.c.b16 %v191, %v188
  %v225 = vpack.c.b16 %v195, %v192
  %v226 = vpack.c.b16 %v196, %v193
  %v227 = vpack.c.b16 %v197, %v194
  %v228 = vpack.c.b16 %v201, %v198
  %v229 = vpack.c.b16 %v202, %v199
  %v230 = vpack.c.b16 %v203, %v200
  %v231 = vpack.c.b16 %v207, %v204
  %v232 = vpack.c.b16 %v208, %v205
  %v233 = vpack.c.b16 %v209, %v206
  %258 = vmatprep.subr.bf16.mxu0 %v211
  %259 = vmatpush1.bf16.msra.mxu0 %v210
  %260 = vmatprep.subr.bf16.mxu0 %v214
  %261 = vmatpush1.bf16.msra.mxu0 %v213
  %262 = vmatprep.subr.bf16.mxu0 %v217
  %263 = vmatpush1.bf16.msra.mxu0 %v216
  %264 = vmatprep.subr.bf16.mxu0 %v220
  %265 = vmatpush1.bf16.msra.mxu0 %v219
  %266 = vmatprep.subr.bf16.mxu0 %v223
  %267 = vmatpush1.bf16.msra.mxu0 %v222
  %268 = vmatprep.subr.bf16.mxu0 %v226
  %269 = vmatpush1.bf16.msra.mxu0 %v225
  %270 = vmatprep.subr.bf16.mxu0 %v229
  %271 = vmatpush1.bf16.msra.mxu0 %v228
  %272 = vmatprep.subr.bf16.mxu0 %v232
  %273 = vmatpush1.bf16.msra.mxu0 %v231
  %274 = vmatprep.subr.bf16.mxu0 0
  %275 = vmatpush1.bf16.msra.mxu0 0
  %276 = vmatprep.subr.bf16.mxu0 0
  %277 = vmatpush1.bf16.msra.mxu0 0
  %278 = vmatprep.subr.bf16.mxu0 0
  %279 = vmatpush1.bf16.msra.mxu0 0
  %280 = vmatprep.subr.bf16.mxu0 0
  %281 = vmatpush1.bf16.msra.mxu0 0
  %282 = vmatprep.subr.bf16.mxu0 0
  %283 = vmatpush1.bf16.msra.mxu0 0
  %284 = vmatprep.subr.bf16.mxu0 0
  %285 = vmatpush1.bf16.msra.mxu0 0
  %286 = vmatprep.subr.bf16.mxu0 0
  %287 = vmatpush1.bf16.msra.mxu0 0
  %288 = vmatprep.subr.bf16.mxu0 0
  %289 = vmatpush1.bf16.msra.mxu0 0
  %290 = vmatprep.mubr.bf16.mxu0 0
  %291 = vmatmul.mubr.bf16.gmra.mrb[0].mxu0 %v80
  %v292 = vpop.f32.mrb[0].mxu0
  %v293 = vadd.f32 %v118, %v292
  %v294 = vpop.f32.mrb[0].mxu0
  %v295 = vadd.f32 %v122, %v294
  %v296 = vpop.f32.mrb[0].mxu0
  %v297 = vadd.f32 %v118, %v296
  %v298 = vpop.f32.mrb[0].mxu0
  %v299 = vadd.f32 %v122, %v298
  %300 = vdwg.mxu0
  %301 = vmatprep.subr.bf16.mxu0 0
  %302 = vmatpush1.bf16.msra.mxu0 %v212
  %303 = vmatprep.subr.bf16.mxu0 0
  %304 = vmatpush1.bf16.msra.mxu0 %v215
  %305 = vmatprep.subr.bf16.mxu0 0
  %306 = vmatpush1.bf16.msra.mxu0 %v218
  %307 = vmatprep.subr.bf16.mxu0 0
  %308 = vmatpush1.bf16.msra.mxu0 %v221
  %309 = vmatprep.subr.bf16.mxu0 0
  %310 = vmatpush1.bf16.msra.mxu0 %v224
  %311 = vmatprep.subr.bf16.mxu0 0
  %312 = vmatpush1.bf16.msra.mxu0 %v227
  %313 = vmatprep.subr.bf16.mxu0 0
  %314 = vmatpush1.bf16.msra.mxu0 %v230
  %315 = vmatprep.subr.bf16.mxu0 0
  %316 = vmatpush1.bf16.msra.mxu0 %v233
  %317 = vmatprep.subr.bf16.mxu0 0
  %318 = vmatpush1.bf16.msra.mxu0 0
  %319 = vmatprep.subr.bf16.mxu0 0
  %320 = vmatpush1.bf16.msra.mxu0 0
  %321 = vmatprep.subr.bf16.mxu0 0
  %322 = vmatpush1.bf16.msra.mxu0 0
  %323 = vmatprep.subr.bf16.mxu0 0
  %324 = vmatpush1.bf16.msra.mxu0 0
  %325 = vmatprep.subr.bf16.mxu0 0
  %326 = vmatpush1.bf16.msra.mxu0 0
  %327 = vmatprep.subr.bf16.mxu0 0
  %328 = vmatpush1.bf16.msra.mxu0 0
  %329 = vmatprep.subr.bf16.mxu0 0
  %330 = vmatpush1.bf16.msra.mxu0 0
  %331 = vmatprep.subr.bf16.mxu0 0
  %332 = vmatpush1.bf16.msra.mxu0 0
  %333 = vmatprep.mubr.bf16.mxu0 0
  %334 = vmatmul.mubr.bf16.gmra.mrb[0].mxu0 %v80
  %v335 = vpop.f32.mrb[0].mxu0
  %v336 = vadd.f32 %v126, %v335
  %v337 = vpop.f32.mrb[0].mxu0
  %v338 = vpop.f32.mrb[0].mxu0
  %v339 = vadd.f32 %v126, %v338
  %v340 = vpop.f32.mrb[0].mxu0
  %341 = vdwg.mxu0
  %v342 = vpack.c.bf16 %v297, %v293
  %v343 = vpack.c.bf16 %v299, %v295
  %v344 = vpack.c.bf16 %v339, %v336
  %v348 = vunpack.c.l.b16 %v342
  %v349 = vunpack.c.l.b16 %v343
  %v350 = vunpack.c.l.b16 %v344
  %v351 = vunpack.c.h.b16 %v342
  %v352 = vunpack.c.h.b16 %v343
  %v353 = vunpack.c.h.b16 %v344
  %v354 = vpack.c.b16 %v349, %v348
  %v355 = vpack.c.b16 %v350, %v350
  %v356 = vpack.c.b16 %v352, %v351
  %v357 = vpack.c.b16 %v353, %v353
  %362 = vst [vmem:[%s5] sm:$0xff] %v354
  %363 = vst [vmem:[%s5 + $0x8] sm:$0xf] %v355
  %364 = vst [vmem:[%s5 + $0xc] sm:$0xff] %v356
  %365 = vst [vmem:[%s5 + $0x14] sm:$0xf] %v357
  // Predicated region
  $region22: #{transformer_decoder_forward.17} parent=0 // pred_check
    _
  $region23: #{transformer_decoder_forward.17} parent=0 // pred_check_branch
    %367 = sbr.rel (0) target = $region25
  $region24: #{transformer_decoder_forward.17} parent=0 // pred_region
    _
  $region25: #{transformer_decoder_forward.17} parent=0 // pred_fallthru
    _
  // Predicated region
  $region26: #{transformer_decoder_forward.17} parent=0 // pred_check
    _
  $region27: #{transformer_decoder_forward.17} parent=0 // pred_check_branch
    %369 = sbr.rel (0) target = $region29
  $region28: #{transformer_decoder_forward.17} parent=0 // pred_region
    _
  $region29: #{transformer_decoder_forward.17} parent=0 // pred_fallthru
    _

// kernel: transformer_decoder_forward.18
$region0: #{transformer_decoder_forward.18}
  #allocation0 [shape = 'u32[]', space=smem, size = 0x4, offset = 0x4, fixed_abs, tag = 'smem constant byte address 0x4 - core index']
  #allocation1 [shape = 'u32[144,128]{1,0:T(1,128)}', space=vmem, size = 0x12000, scoped, tag = 'internal scratch']
  %s0 = inlined_call_operand.vmem [shape: bf16[2,8,384], index: 0, kind: input, shape index: {}, may-alias: {0,1,2}]
  %s1 = inlined_call_operand.vmem [shape: bf16[2,8,384], index: 1, kind: input, shape index: {}, may-alias: {0,1,2}]
  %s2 = inlined_call_operand.vmem [shape: bf16[2,8,384], index: 2, kind: input, shape index: {}, may-alias: {0,1,2}]
  %s3 = inlined_call_operand.vmem [shape: f32[2,1,8], index: 3, kind: input, shape index: {}]
  %s4 = inlined_call_operand.vmem [shape: bf16[2,8,128], index: 4, kind: output, shape index: {}]
  %s5 = sld [smem:[#allocation0]]
  $region49: #{transformer_decoder_forward.18} parent=0
    _
  %s7 = ssub.s32 1, %s5
  %s8 = scalar_select 0, %s7, %s5
  loop: start=0, step=1, limit=4
  $region2: #{transformer_decoder_forward.18} parent=0 // loop_pre_header
    _
  $region3: #{transformer_decoder_forward.18} parent=0 // loop_header
    %s10 = sphi 0, %s14
    %p11 = scmp.ge.s32.totalorder %s10, 4
    %s17 = sphi 0, %s29
    %s18 = sphi 0, %s25
    %s19 = sphi 0, %s17
    %s20 = sphi 0, %s18
    %s21 = sphi 0, %s19
    %s22 = sphi 0, %s20
    %s34 = sphi 0, %s36
    %s37 = sphi 0, %s34
    %s38 = sphi 0, %s37
    %s54 = sphi 0, %s38
    %s60 = sphi 0, %s62
    %s63 = sphi 0, %s60
    %s64 = sphi 0, %s63
    %s80 = sphi 0, %s64
    %s86 = sphi 0, %s88
    %s89 = sphi 0, %s86
    %s90 = sphi 0, %s89
    %s106 = sphi 0, %s90
    %s112 = sphi 0, %s114
    %s115 = sphi 0, %s112
    %s116 = sphi 0, %s115
    %s132 = sphi 0, %s116
    %s140 = sphi 0, %s142
    %s143 = sphi 0, %s140
    %s144 = sphi 0, %s143
    %s160 = sphi 0, %s144
  $region4: #{transformer_decoder_forward.18} parent=0 // loop_header_branch
    %13 = sbr.rel (%p11) target = $region8
  $region5: #{transformer_decoder_forward.18} parent=0 // loop_body
    %s15 = ssub.s32 %s10, 1
    %s16 = ssub.s32 %s10, 2
    %s23 = sadd.s32 1, %s18
    %p24 = scmp.ge.s32.totalorder %s23, 1
    %s25 = scalar_select %p24, 0, %s23
    %s26 = sadd.s32 1, %s17
    %s27 = scalar_select %p24, %s26, %s17
    %p28 = scmp.ge.s32.totalorder %s27, 2
    %s29 = scalar_select %p28, 0, %s27
    %s30 = ssub.s32 %s17, %s29
    %s31 = ssub.s32 %s18, %s25
    %s32 = sor.u32 %s30, %s31
    %p33 = scmp.eq.s32.totalorder %s32, 0
    %s35 = sadd.s32 %s34, 1
    %s36 = scalar_select %p33, %s34, %s35
    %p39 = pneg %p33
    %p40 = scmp.eq.s32.totalorder %s10, 1
    %p41 = por %p39, %p40
    %p42 = scmp.ne.s32.totalorder %s34, %s37
    %p43 = scmp.eq.s32.totalorder %s10, 0
    %p44 = por %p42, %p43
    %p45 = scmp.ne.s32.totalorder %s34, %s37
    %p46 = scmp.eq.s32.totalorder %s15, 1
    %p47 = por %p45, %p46
    %p48 = scmp.ne.s32.totalorder %s37, %s38
    %p49 = scmp.eq.s32.totalorder %s15, 0
    %p50 = por %p48, %p49
    %p51 = scmp.ne.s32.totalorder %s37, %s38
    %p52 = scmp.eq.s32.totalorder %s16, 1
    %p53 = por %p51, %p52
    %p55 = scmp.ne.s32.totalorder %s38, %s54
    %p56 = scmp.eq.s32.totalorder %s16, 0
    %p57 = por %p55, %p56
    %s58 = ssub.s32 %s17, %s29
    %p59 = scmp.eq.s32.totalorder %s58, 0
    %s61 = sadd.s32 %s60, 1
    %s62 = scalar_select %p59, %s60, %s61
    %p65 = pneg %p59
    %p66 = scmp.eq.s32.totalorder %s10, 1
    %p67 = por %p65, %p66
    %p68 = scmp.ne.s32.totalorder %s60, %s63
    %p69 = scmp.eq.s32.totalorder %s10, 0
    %p70 = por %p68, %p69
    %p71 = scmp.ne.s32.totalorder %s60, %s63
    %p72 = scmp.eq.s32.totalorder %s15, 1
    %p73 = por %p71, %p72
    %p74 = scmp.ne.s32.totalorder %s63, %s64
    %p75 = scmp.eq.s32.totalorder %s15, 0
    %p76 = por %p74, %p75
    %p77 = scmp.ne.s32.totalorder %s63, %s64
    %p78 = scmp.eq.s32.totalorder %s16, 1
    %p79 = por %p77, %p78
    %p81 = scmp.ne.s32.totalorder %s64, %s80
    %p82 = scmp.eq.s32.totalorder %s16, 0
    %p83 = por %p81, %p82
    %s84 = ssub.s32 %s17, %s29
    %p85 = scmp.eq.s32.totalorder %s84, 0
    %s87 = sadd.s32 %s86, 1
    %s88 = scalar_select %p85, %s86, %s87
    %p91 = pneg %p85
    %p92 = scmp.eq.s32.totalorder %s10, 1
    %p93 = por %p91, %p92
    %p94 = scmp.ne.s32.totalorder %s86, %s89
    %p95 = scmp.eq.s32.totalorder %s10, 0
    %p96 = por %p94, %p95
    %p97 = scmp.ne.s32.totalorder %s86, %s89
    %p98 = scmp.eq.s32.totalorder %s15, 1
    %p99 = por %p97, %p98
    %p100 = scmp.ne.s32.totalorder %s89, %s90
    %p101 = scmp.eq.s32.totalorder %s15, 0
    %p102 = por %p100, %p101
    %p103 = scmp.ne.s32.totalorder %s89, %s90
    %p104 = scmp.eq.s32.totalorder %s16, 1
    %p105 = por %p103, %p104
    %p107 = scmp.ne.s32.totalorder %s90, %s106
    %p108 = scmp.eq.s32.totalorder %s16, 0
    %p109 = por %p107, %p108
    %s110 = ssub.s32 %s17, %s29
    %p111 = scmp.eq.s32.totalorder %s110, 0
    %s113 = sadd.s32 %s112, 1
    %s114 = scalar_select %p111, %s112, %s113
    %p117 = pneg %p111
    %p118 = scmp.eq.s32.totalorder %s10, 1
    %p119 = por %p117, %p118
    %p120 = scmp.ne.s32.totalorder %s112, %s115
    %p121 = scmp.eq.s32.totalorder %s10, 0
    %p122 = por %p120, %p121
    %p123 = scmp.ne.s32.totalorder %s112, %s115
    %p124 = scmp.eq.s32.totalorder %s15, 1
    %p125 = por %p123, %p124
    %p126 = scmp.ne.s32.totalorder %s115, %s116
    %p127 = scmp.eq.s32.totalorder %s15, 0
    %p128 = por %p126, %p127
    %p129 = scmp.ne.s32.totalorder %s115, %s116
    %p130 = scmp.eq.s32.totalorder %s16, 1
    %p131 = por %p129, %p130
    %p133 = scmp.ne.s32.totalorder %s116, %s132
    %p134 = scmp.eq.s32.totalorder %s16, 0
    %p135 = por %p133, %p134
    %s136 = ssub.s32 %s17, %s29
    %s137 = ssub.s32 %s18, %s25
    %s138 = sor.u32 %s136, %s137
    %p139 = scmp.eq.s32.totalorder %s138, 0
    %s141 = sadd.s32 %s140, 1
    %s142 = scalar_select %p139, %s140, %s141
    %p145 = pneg %p139
    %p146 = scmp.eq.s32.totalorder %s10, 1
    %p147 = por %p145, %p146
    %p148 = scmp.ne.s32.totalorder %s140, %s143
    %p149 = scmp.eq.s32.totalorder %s10, 0
    %p150 = por %p148, %p149
    %p151 = scmp.ne.s32.totalorder %s140, %s143
    %p152 = scmp.eq.s32.totalorder %s15, 1
    %p153 = por %p151, %p152
    %p154 = scmp.ne.s32.totalorder %s143, %s144
    %p155 = scmp.eq.s32.totalorder %s15, 0
    %p156 = por %p154, %p155
    %p157 = scmp.ne.s32.totalorder %s143, %s144
    %p158 = scmp.eq.s32.totalorder %s16, 1
    %p159 = por %p157, %p158
    %p161 = scmp.ne.s32.totalorder %s144, %s160
    %p162 = scmp.eq.s32.totalorder %s16, 0
    %p163 = por %p161, %p162
    %p164 = scmp.le.s32.totalorder 1, %s10
    %p165 = scmp.lt.s32.totalorder %s10, 3
    %p166 = pnand %p164, %p165
    %p167 = pneg %p166
    // Predicated region
    $region9: #{transformer_decoder_forward.18} parent=5 // pred_check
      _
    $region10: #{transformer_decoder_forward.18} parent=5 // pred_check_branch
      %169 = sbr.rel (%p166) target = $region12
    $region11: #{transformer_decoder_forward.18} parent=5 // pred_region
      %s170 = ssub.s32 %s10, 1
    $region12: #{transformer_decoder_forward.18} parent=5 // pred_fallthru
      _
    %p171 = scmp.lt.s32.totalorder %s10, 2
    // Predicated region
    $region13: #{transformer_decoder_forward.18} parent=5 // pred_check
      %p172 = pneg %p171
    $region14: #{transformer_decoder_forward.18} parent=5 // pred_check_branch
      %174 = sbr.rel (%p172) target = $region16
    $region15: #{transformer_decoder_forward.18} parent=5 // pred_region
      // Predicated region
      $region17: #{transformer_decoder_forward.18} parent=15 // pred_check
        %p175 = pneg %p44
      $region18: #{transformer_decoder_forward.18} parent=15 // pred_check_branch
        %177 = sbr.rel (%p175) target = $region20
      $region19: #{transformer_decoder_forward.18} parent=15 // pred_region
        %p178 = scmp.lt.s32.totalorder %s17, 1
        %s179 = scalar_select %p178, %s17, 1
        %p180 = scmp.lt.s32.totalorder %s18, 0
        %s181 = scalar_select %p180, %s18, 0
        %s182 = smul.addr %s181, 3
        %s183 = smul.addr %s179, 3
        %s184 = sadd.s32 %s182, %s183
        %s185 = smul.addr %s184, 4
        %s186 = scalar_lea.vmem %s0, %s185
      $region20: #{transformer_decoder_forward.18} parent=15 // pred_fallthru
        _
      // Predicated region
      $region21: #{transformer_decoder_forward.18} parent=15 // pred_check
        %p187 = pneg %p70
      $region22: #{transformer_decoder_forward.18} parent=15 // pred_check_branch
        %189 = sbr.rel (%p187) target = $region24
      $region23: #{transformer_decoder_forward.18} parent=15 // pred_region
        %p190 = scmp.lt.s32.totalorder %s17, 1
        %s191 = scalar_select %p190, %s17, 1
        %s192 = smul.addr %s191, 3
        %s193 = sadd.s32 1, %s192
        %s194 = smul.addr %s193, 4
        %s195 = scalar_lea.vmem %s1, %s194
      $region24: #{transformer_decoder_forward.18} parent=15 // pred_fallthru
        _
      // Predicated region
      $region25: #{transformer_decoder_forward.18} parent=15 // pred_check
        %p196 = pneg %p96
      $region26: #{transformer_decoder_forward.18} parent=15 // pred_check_branch
        %198 = sbr.rel (%p196) target = $region28
      $region27: #{transformer_decoder_forward.18} parent=15 // pred_region
        %p199 = scmp.lt.s32.totalorder %s17, 1
        %s200 = scalar_select %p199, %s17, 1
        %s201 = smul.addr %s200, 3
        %s202 = sadd.s32 2, %s201
        %s203 = smul.addr %s202, 4
        %s204 = scalar_lea.vmem %s2, %s203
      $region28: #{transformer_decoder_forward.18} parent=15 // pred_fallthru
        _
      // Predicated region
      $region29: #{transformer_decoder_forward.18} parent=15 // pred_check
        %p205 = pneg %p122
      $region30: #{transformer_decoder_forward.18} parent=15 // pred_check_branch
        %207 = sbr.rel (%p205) target = $region32
      $region31: #{transformer_decoder_forward.18} parent=15 // pred_region
        %p208 = scmp.lt.s32.totalorder %s17, 1
        %s209 = scalar_select %p208, %s17, 1
        %s210 = scalar_lea.vmem %s3, %s209
      $region32: #{transformer_decoder_forward.18} parent=15 // pred_fallthru
        _
    $region16: #{transformer_decoder_forward.18} parent=5 // pred_fallthru
      _
    %p211 = scmp.le.s32.totalorder 1, %s10
    %p212 = scmp.lt.s32.totalorder %s10, 3
    %p213 = pnand %p211, %p212
    %p214 = pneg %p213
    // Predicated region
    $region33: #{transformer_decoder_forward.18} parent=5 // pred_check
      _
    $region34: #{transformer_decoder_forward.18} parent=5 // pred_check_branch
      %216 = sbr.rel (%p213) target = $region36
    $region35: #{transformer_decoder_forward.18} parent=5 // pred_region
      %s217 = ssub.s32 %s10, 1
      %p218 = scmp.lt.s32.totalorder %s19, 1
      %s219 = scalar_select %p218, %s19, 1
      %p220 = scmp.lt.s32.totalorder %s20, 0
      %s221 = scalar_select %p220, %s20, 0
      %s222 = smul.addr %s221, 3
      %s223 = smul.addr %s219, 3
      %s224 = sadd.s32 %s222, %s223
      %s225 = smul.addr %s224, 4
      %s226 = scalar_lea.vmem %s0, %s225
      %p227 = pneg %p50
      %p228 = pneg %p47
      %p229 = scmp.lt.s32.totalorder %s19, 1
      %s230 = scalar_select %p229, %s19, 1
      %s231 = smul.addr %s230, 3
      %s232 = sadd.s32 1, %s231
      %s233 = smul.addr %s232, 4
      %s234 = scalar_lea.vmem %s1, %s233
      %p235 = pneg %p76
      %p236 = pneg %p73
      %p237 = scmp.lt.s32.totalorder %s19, 1
      %s238 = scalar_select %p237, %s19, 1
      %s239 = smul.addr %s238, 3
      %s240 = sadd.s32 2, %s239
      %s241 = smul.addr %s240, 4
      %s242 = scalar_lea.vmem %s2, %s241
      %p243 = pneg %p102
      %p244 = pneg %p99
      %p245 = scmp.lt.s32.totalorder %s19, 1
      %s246 = scalar_select %p245, %s19, 1
      %s247 = scalar_lea.vmem %s3, %s246
      %p248 = pneg %p128
      %p249 = pneg %p125
      %p250 = pneg %p156
      %p251 = pneg %p153
      %p252 = scmp.lt.s32.totalorder %s19, 1
      %s253 = scalar_select %p252, %s19, 1
      %p254 = scmp.lt.s32.totalorder %s20, 0
      %s255 = scalar_select %p254, %s20, 0
      %s256 = sadd.s32 %s255, %s253
      %s257 = smul.addr %s256, 4
      %s258 = scalar_lea.vmem %s4, %s257
      %p259 = scmp.lt.s32.totalorder %s19, 1
      %s260 = scalar_select %p259, %s19, 1
      %p261 = scmp.lt.s32.totalorder %s20, 0
      %s262 = scalar_select %p261, %s20, 0
      %s263 = smul.addr %s262, 3
      %s264 = smul.addr %s260, 3
      %s265 = sadd.s32 %s263, %s264
      %s266 = smul.addr %s265, 4
      %s267 = scalar_lea.vmem %s0, %s266
      %p268 = scmp.lt.s32.totalorder %s19, 1
      %s269 = scalar_select %p268, %s19, 1
      %s270 = smul.addr %s269, 3
      %s271 = sadd.s32 1, %s270
      %s272 = smul.addr %s271, 4
      %s273 = scalar_lea.vmem %s1, %s272
      %p274 = scmp.lt.s32.totalorder %s19, 1
      %s275 = scalar_select %p274, %s19, 1
      %s276 = smul.addr %s275, 3
      %s277 = sadd.s32 2, %s276
      %s278 = smul.addr %s277, 4
      %s279 = scalar_lea.vmem %s2, %s278
      %p280 = scmp.lt.s32.totalorder %s19, 1
      %s281 = scalar_select %p280, %s19, 1
      %s282 = scalar_lea.vmem %s3, %s281
      %p283 = scmp.lt.s32.totalorder %s19, 1
      %s284 = scalar_select %p283, %s19, 1
      %p285 = scmp.lt.s32.totalorder %s20, 0
      %s286 = scalar_select %p285, %s20, 0
      %s287 = sadd.s32 %s286, %s284
      %s288 = smul.addr %s287, 4
      %s289 = scalar_lea.vmem %s4, %s288
      %s291 = smul.u32 %s20, 8
      %v292 = vlaneseq
      %v293 = vand.u32 %v292, 127
      %v294 = vlaneseq
      %v295 = vshrl.u32 %v294, 7
      %v296 = vstv %s291
      %v297 = vadd.s32 %v295, %v296
      %v298 = vld [vmem:[%s282] sm:$0x1]
      %vm299 = vcmp.gt.f32.partialorder %v298, 0.0
      %v300 = vsel %vm299, 1, 0
      %v301 = vlaneseq
      %v302 = vshrl.u32 %v301, 7
      %v303 = vsub.s32 0, %v302
      %v304 = vrot.slane %v300, %v303
      %vm305 = vcmp.eq.s32.totalorder %v304, 1
      %vm306 = vcmp.gt.s32.totalorder %v293, %v297
      %vm307 = vmor %vm306, %vm305
      %v308 = vld [vmem:[%s267] sm:$0xf]
      %v309 = vld [vmem:[%s273] sm:$0xf]
      %v310 = vld [vmem:[%s279] sm:$0xf]
      %vm311 = vcmask 261120
      %v313 = vsel %vm311, %v308, 0
      %v316 = vsel %vm311, %v309, 0
      %318 = vmatprep.subr.bf16.mxu0 0
      %319 = vmatpush1.bf16.xpose.msra.mxu0 %v316
      %320 = vmatprep.subr.bf16.mxu0 0
      %321 = vmatpush1.bf16.xpose.msra.mxu0 0
      %322 = vmatprep.subr.bf16.mxu0 0
      %323 = vmatpush1.bf16.xpose.msra.mxu0 0
      %324 = vmatprep.subr.bf16.mxu0 0
      %325 = vmatpush1.bf16.xpose.msra.mxu0 0
      %326 = vmatprep.subr.bf16.mxu0 0
      %327 = vmatpush1.bf16.xpose.msra.mxu0 0
      %328 = vmatprep.subr.bf16.mxu0 0
      %329 = vmatpush1.bf16.xpose.msra.mxu0 0
      %330 = vmatprep.subr.bf16.mxu0 0
      %331 = vmatpush1.bf16.xpose.msra.mxu0 0
      %332 = vmatprep.subr.bf16.mxu0 0
      %333 = vmatpush1.bf16.xpose.msra.mxu0 0
      %334 = vmatprep.subr.bf16.mxu0 0
      %335 = vmatpush1.bf16.xpose.msra.mxu0 0
      %336 = vmatprep.subr.bf16.mxu0 0
      %337 = vmatpush1.bf16.xpose.msra.mxu0 0
      %338 = vmatprep.subr.bf16.mxu0 0
      %339 = vmatpush1.bf16.xpose.msra.mxu0 0
      %340 = vmatprep.subr.bf16.mxu0 0
      %341 = vmatpush1.bf16.xpose.msra.mxu0 0
      %342 = vmatprep.subr.bf16.mxu0 0
      %343 = vmatpush1.bf16.xpose.msra.mxu0 0
      %344 = vmatprep.subr.bf16.mxu0 0
      %345 = vmatpush1.bf16.xpose.msra.mxu0 0
      %346 = vmatprep.subr.bf16.mxu0 0
      %347 = vmatpush1.bf16.xpose.msra.mxu0 0
      %348 = vmatprep.subr.bf16.mxu0 0
      %349 = vmatpush1.bf16.xpose.msra.mxu0 0
      %350 = vmatprep.mubr.bf16.mxu0 0
      %351 = vmatmul.mubr.bf16.gmra.mrb[0].mxu0 %v313
      %v352 = vpop.f32.mrb[0].mxu0
      %v353 = vadd.f32 0.0, %v352
      %v354 = vpop.f32.mrb[0].mxu0
      %v355 = vpop.f32.mrb[0].mxu0
      %v356 = vpop.f32.mrb[0].mxu0
      %357 = vdwg.mxu0
      %v358 = vmul.f32 %v353, 0.17677669
      %v359 = vsel %vm307, -1e+18, %v358
      %vm360 = vcmask 64512
      %v361 = vsel %vm360, %v359, -inf
      %362 = vmax.xlane.f32.xlu0 %v361
      %v363 = vpop.xlane.xlu0 %362
      %v364 = vsub.f32 %v359, %v363
      %v365 = vmul.f32 %v364, 1.442695
      %v366 = vpow.pop %v365
      %v367 = vsel %vm360, %v366, 0.0
      %368 = vadd.xlane.f32.xlu0 %v367
      %v369 = vpop.xlane.xlu0 %368
      %v370 = vrcp.pop %v369
      %v371 = vmul.f32 %v366, %v370
      %v372 = vpack.c.bf16 %v371, %v371
      %v374 = vsel %vm360, %v372, 0
      %vm376 = vcmask 1043456
      %v378 = vsel %vm376, %v310, 0
      %380 = vmatprep.subr.bf16.mxu0 0
      %381 = vmatpush1.bf16.msra.mxu0 %v378
      %382 = vmatprep.subr.bf16.mxu0 0
      %383 = vmatpush1.bf16.msra.mxu0 0
      %384 = vmatprep.subr.bf16.mxu0 0
      %385 = vmatpush1.bf16.msra.mxu0 0
      %386 = vmatprep.subr.bf16.mxu0 0
      %387 = vmatpush1.bf16.msra.mxu0 0
      %388 = vmatprep.subr.bf16.mxu0 0
      %389 = vmatpush1.bf16.msra.mxu0 0
      %390 = vmatprep.subr.bf16.mxu0 0
      %391 = vmatpush1.bf16.msra.mxu0 0
      %392 = vmatprep.subr.bf16.mxu0 0
      %393 = vmatpush1.bf16.msra.mxu0 0
      %394 = vmatprep.subr.bf16.mxu0 0
      %395 = vmatpush1.bf16.msra.mxu0 0
      %396 = vmatprep.subr.bf16.mxu0 0
      %397 = vmatpush1.bf16.msra.mxu0 0
      %398 = vmatprep.subr.bf16.mxu0 0
      %399 = vmatpush1.bf16.msra.mxu0 0
      %400 = vmatprep.subr.bf16.mxu0 0
      %401 = vmatpush1.bf16.msra.mxu0 0
      %402 = vmatprep.subr.bf16.mxu0 0
      %403 = vmatpush1.bf16.msra.mxu0 0
      %404 = vmatprep.subr.bf16.mxu0 0
      %405 = vmatpush1.bf16.msra.mxu0 0
      %406 = vmatprep.subr.bf16.mxu0 0
      %407 = vmatpush1.bf16.msra.mxu0 0
      %408 = vmatprep.subr.bf16.mxu0 0
      %409 = vmatpush1.bf16.msra.mxu0 0
      %410 = vmatprep.subr.bf16.mxu0 0
      %411 = vmatpush1.bf16.msra.mxu0 0
      %412 = vmatprep.mubr.bf16.mxu0 0
      %413 = vmatmul.mubr.bf16.gmra.mrb[0].mxu0 %v374
      %v414 = vpop.f32.mrb[0].mxu0
      %v415 = vadd.f32 0.0, %v414
      %v416 = vpop.f32.mrb[0].mxu0
      %v417 = vpop.f32.mrb[0].mxu0
      %v418 = vpop.f32.mrb[0].mxu0
      %419 = vdwg.mxu0
      %v421 = vunpack.c.l.b16 %v308
      %v422 = vpack.c.b16 %v421, %v421
      %423 = vrot.lane.b32.xlu0 %v422, 96
      %v424 = vpop.permute.xlu0 %423
      %v426 = vunpack.c.l.b16 %v309
      %v427 = vpack.c.b16 %v426, %v426
      %428 = vrot.lane.b32.xlu0 %v427, 96
      %v429 = vpop.permute.xlu0 %428
      %v431 = vsel %vm311, %v424, 0
      %v434 = vsel %vm311, %v429, 0
      %436 = vmatprep.subr.bf16.mxu0 0
      %437 = vmatpush1.bf16.xpose.msra.mxu0 %v434
      %438 = vmatprep.subr.bf16.mxu0 0
      %439 = vmatpush1.bf16.xpose.msra.mxu0 0
      %440 = vmatprep.subr.bf16.mxu0 0
      %441 = vmatpush1.bf16.xpose.msra.mxu0 0
      %442 = vmatprep.subr.bf16.mxu0 0
      %443 = vmatpush1.bf16.xpose.msra.mxu0 0
      %444 = vmatprep.subr.bf16.mxu0 0
      %445 = vmatpush1.bf16.xpose.msra.mxu0 0
      %446 = vmatprep.subr.bf16.mxu0 0
      %447 = vmatpush1.bf16.xpose.msra.mxu0 0
      %448 = vmatprep.subr.bf16.mxu0 0
      %449 = vmatpush1.bf16.xpose.msra.mxu0 0
      %450 = vmatprep.subr.bf16.mxu0 0
      %451 = vmatpush1.bf16.xpose.msra.mxu0 0
      %452 = vmatprep.subr.bf16.mxu0 0
      %453 = vmatpush1.bf16.xpose.msra.mxu0 0
      %454 = vmatprep.subr.bf16.mxu0 0
      %455 = vmatpush1.bf16.xpose.msra.mxu0 0
      %456 = vmatprep.subr.bf16.mxu0 0
      %457 = vmatpush1.bf16.xpose.msra.mxu0 0
      %458 = vmatprep.subr.bf16.mxu0 0
      %459 = vmatpush1.bf16.xpose.msra.mxu0 0
      %460 = vmatprep.subr.bf16.mxu0 0
      %461 = vmatpush1.bf16.xpose.msra.mxu0 0
      %462 = vmatprep.subr.bf16.mxu0 0
      %463 = vmatpush1.bf16.xpose.msra.mxu0 0
      %464 = vmatprep.subr.bf16.mxu0 0
      %465 = vmatpush1.bf16.xpose.msra.mxu0 0
      %466 = vmatprep.subr.bf16.mxu0 0
      %467 = vmatpush1.bf16.xpose.msra.mxu0 0
      %468 = vmatprep.mubr.bf16.mxu0 0
      %469 = vmatmul.mubr.bf16.gmra.mrb[0].mxu0 %v431
      %v470 = vpop.f32.mrb[0].mxu0
      %v471 = vadd.f32 0.0, %v470
      %v472 = vpop.f32.mrb[0].mxu0
      %v473 = vpop.f32.mrb[0].mxu0
      %v474 = vpop.f32.mrb[0].mxu0
      %475 = vdwg.mxu0
      %v476 = vmul.f32 %v471, 0.17677669
      %v477 = vsel %vm307, -1e+18, %v476
      %v478 = vsel %vm360, %v477, -inf
      %479 = vmax.xlane.f32.xlu0 %v478
      %v480 = vpop.xlane.xlu0 %479
      %v481 = vsub.f32 %v477, %v480
      %v482 = vmul.f32 %v481, 1.442695
      %v483 = vpow.pop %v482
      %v484 = vsel %vm360, %v483, 0.0
      %485 = vadd.xlane.f32.xlu0 %v484
      %v486 = vpop.xlane.xlu0 %485
      %v487 = vrcp.pop %v486
      %v488 = vmul.f32 %v483, %v487
      %v489 = vpack.c.bf16 %v488, %v488
      %v491 = vunpack.c.l.b16 %v310
      %v492 = vpack.c.b16 %v491, %v491
      %493 = vrot.lane.b32.xlu0 %v492, 96
      %v494 = vpop.permute.xlu0 %493
      %v496 = vsel %vm360, %v489, 0
      %v499 = vsel %vm376, %v494, 0
      %501 = vmatprep.subr.bf16.mxu0 0
      %502 = vmatpush1.bf16.msra.mxu0 %v499
      %503 = vmatprep.subr.bf16.mxu0 0
      %504 = vmatpush1.bf16.msra.mxu0 0
      %505 = vmatprep.subr.bf16.mxu0 0
      %506 = vmatpush1.bf16.msra.mxu0 0
      %507 = vmatprep.subr.bf16.mxu0 0
      %508 = vmatpush1.bf16.msra.mxu0 0
      %509 = vmatprep.subr.bf16.mxu0 0
      %510 = vmatpush1.bf16.msra.mxu0 0
      %511 = vmatprep.subr.bf16.mxu0 0
      %512 = vmatpush1.bf16.msra.mxu0 0
      %513 = vmatprep.subr.bf16.mxu0 0
      %514 = vmatpush1.bf16.msra.mxu0 0
      %515 = vmatprep.subr.bf16.mxu0 0
      %516 = vmatpush1.bf16.msra.mxu0 0
      %517 = vmatprep.subr.bf16.mxu0 0
      %518 = vmatpush1.bf16.msra.mxu0 0
      %519 = vmatprep.subr.bf16.mxu0 0
      %520 = vmatpush1.bf16.msra.mxu0 0
      %521 = vmatprep.subr.bf16.mxu0 0
      %522 = vmatpush1.bf16.msra.mxu0 0
      %523 = vmatprep.subr.bf16.mxu0 0
      %524 = vmatpush1.bf16.msra.mxu0 0
      %525 = vmatprep.subr.bf16.mxu0 0
      %526 = vmatpush1.bf16.msra.mxu0 0
      %527 = vmatprep.subr.bf16.mxu0 0
      %528 = vmatpush1.bf16.msra.mxu0 0
      %529 = vmatprep.subr.bf16.mxu0 0
      %530 = vmatpush1.bf16.msra.mxu0 0
      %531 = vmatprep.subr.bf16.mxu0 0
      %532 = vmatpush1.bf16.msra.mxu0 0
      %533 = vmatprep.mubr.bf16.mxu0 0
      %534 = vmatmul.mubr.bf16.gmra.mrb[0].mxu0 %v496
      %v535 = vpop.f32.mrb[0].mxu0
      %v536 = vadd.f32 0.0, %v535
      %v537 = vpop.f32.mrb[0].mxu0
      %v538 = vpop.f32.mrb[0].mxu0
      %v539 = vpop.f32.mrb[0].mxu0
      %540 = vdwg.mxu0
      %541 = vrot.lane.b32.xlu0 %v422, 64
      %v542 = vpop.permute.xlu0 %541
      %543 = vrot.lane.b32.xlu0 %v427, 64
      %v544 = vpop.permute.xlu0 %543
      %v546 = vsel %vm311, %v542, 0
      %v549 = vsel %vm311, %v544, 0
      %551 = vmatprep.subr.bf16.mxu0 0
      %552 = vmatpush1.bf16.xpose.msra.mxu0 %v549
      %553 = vmatprep.subr.bf16.mxu0 0
      %554 = vmatpush1.bf16.xpose.msra.mxu0 0
      %555 = vmatprep.subr.bf16.mxu0 0
      %556 = vmatpush1.bf16.xpose.msra.mxu0 0
      %557 = vmatprep.subr.bf16.mxu0 0
      %558 = vmatpush1.bf16.xpose.msra.mxu0 0
      %559 = vmatprep.subr.bf16.mxu0 0
      %560 = vmatpush1.bf16.xpose.msra.mxu0 0
      %561 = vmatprep.subr.bf16.mxu0 0
      %562 = vmatpush1.bf16.xpose.msra.mxu0 0
      %563 = vmatprep.subr.bf16.mxu0 0
      %564 = vmatpush1.bf16.xpose.msra.mxu0 0
      %565 = vmatprep.subr.bf16.mxu0 0
      %566 = vmatpush1.bf16.xpose.msra.mxu0 0
      %567 = vmatprep.subr.bf16.mxu0 0
      %568 = vmatpush1.bf16.xpose.msra.mxu0 0
      %569 = vmatprep.subr.bf16.mxu0 0
      %570 = vmatpush1.bf16.xpose.msra.mxu0 0
      %571 = vmatprep.subr.bf16.mxu0 0
      %572 = vmatpush1.bf16.xpose.msra.mxu0 0
      %573 = vmatprep.subr.bf16.mxu0 0
      %574 = vmatpush1.bf16.xpose.msra.mxu0 0
      %575 = vmatprep.subr.bf16.mxu0 0
      %576 = vmatpush1.bf16.xpose.msra.mxu0 0
      %577 = vmatprep.subr.bf16.mxu0 0
      %578 = vmatpush1.bf16.xpose.msra.mxu0 0
      %579 = vmatprep.subr.bf16.mxu0 0
      %580 = vmatpush1.bf16.xpose.msra.mxu0 0
      %581 = vmatprep.subr.bf16.mxu0 0
      %582 = vmatpush1.bf16.xpose.msra.mxu0 0
      %583 = vmatprep.mubr.bf16.mxu0 0
      %584 = vmatmul.mubr.bf16.gmra.mrb[0].mxu0 %v546
      %v585 = vpop.f32.mrb[0].mxu0
      %v586 = vadd.f32 0.0, %v585
      %v587 = vpop.f32.mrb[0].mxu0
      %v588 = vpop.f32.mrb[0].mxu0
      %v589 = vpop.f32.mrb[0].mxu0
      %590 = vdwg.mxu0
      %v591 = vmul.f32 %v586, 0.17677669
      %v592 = vsel %vm307, -1e+18, %v591
      %v593 = vsel %vm360, %v592, -inf
      %594 = vmax.xlane.f32.xlu0 %v593
      %v595 = vpop.xlane.xlu0 %594
      %v596 = vsub.f32 %v592, %v595
      %v597 = vmul.f32 %v596, 1.442695
      %v598 = vpow.pop %v597
      %v599 = vsel %vm360, %v598, 0.0
      %600 = vadd.xlane.f32.xlu0 %v599
      %v601 = vpop.xlane.xlu0 %600
      %v602 = vrcp.pop %v601
      %v603 = vmul.f32 %v598, %v602
      %v604 = vpack.c.bf16 %v603, %v603
      %605 = vrot.lane.b32.xlu0 %v492, 64
      %v606 = vpop.permute.xlu0 %605
      %v608 = vsel %vm360, %v604, 0
      %v611 = vsel %vm376, %v606, 0
      %613 = vmatprep.subr.bf16.mxu0 0
      %614 = vmatpush1.bf16.msra.mxu0 %v611
      %615 = vmatprep.subr.bf16.mxu0 0
      %616 = vmatpush1.bf16.msra.mxu0 0
      %617 = vmatprep.subr.bf16.mxu0 0
      %618 = vmatpush1.bf16.msra.mxu0 0
      %619 = vmatprep.subr.bf16.mxu0 0
      %620 = vmatpush1.bf16.msra.mxu0 0
      %621 = vmatprep.subr.bf16.mxu0 0
      %622 = vmatpush1.bf16.msra.mxu0 0
      %623 = vmatprep.subr.bf16.mxu0 0
      %624 = vmatpush1.bf16.msra.mxu0 0
      %625 = vmatprep.subr.bf16.mxu0 0
      %626 = vmatpush1.bf16.msra.mxu0 0
      %627 = vmatprep.subr.bf16.mxu0 0
      %628 = vmatpush1.bf16.msra.mxu0 0
      %629 = vmatprep.subr.bf16.mxu0 0
      %630 = vmatpush1.bf16.msra.mxu0 0
      %631 = vmatprep.subr.bf16.mxu0 0
      %632 = vmatpush1.bf16.msra.mxu0 0
      %633 = vmatprep.subr.bf16.mxu0 0
      %634 = vmatpush1.bf16.msra.mxu0 0
      %635 = vmatprep.subr.bf16.mxu0 0
      %636 = vmatpush1.bf16.msra.mxu0 0
      %637 = vmatprep.subr.bf16.mxu0 0
      %638 = vmatpush1.bf16.msra.mxu0 0
      %639 = vmatprep.subr.bf16.mxu0 0
      %640 = vmatpush1.bf16.msra.mxu0 0
      %641 = vmatprep.subr.bf16.mxu0 0
      %642 = vmatpush1.bf16.msra.mxu0 0
      %643 = vmatprep.subr.bf16.mxu0 0
      %644 = vmatpush1.bf16.msra.mxu0 0
      %645 = vmatprep.mubr.bf16.mxu0 0
      %646 = vmatmul.mubr.bf16.gmra.mrb[0].mxu0 %v608
      %v647 = vpop.f32.mrb[0].mxu0
      %v648 = vadd.f32 0.0, %v647
      %v649 = vpop.f32.mrb[0].mxu0
      %v650 = vpop.f32.mrb[0].mxu0
      %v651 = vpop.f32.mrb[0].mxu0
      %652 = vdwg.mxu0
      %653 = vrot.lane.b32.xlu0 %v422, 32
      %v654 = vpop.permute.xlu0 %653
      %655 = vrot.lane.b32.xlu0 %v427, 32
      %v656 = vpop.permute.xlu0 %655
      %v658 = vsel %vm311, %v654, 0
      %v661 = vsel %vm311, %v656, 0
      %663 = vmatprep.subr.bf16.mxu0 0
      %664 = vmatpush1.bf16.xpose.msra.mxu0 %v661
      %665 = vmatprep.subr.bf16.mxu0 0
      %666 = vmatpush1.bf16.xpose.msra.mxu0 0
      %667 = vmatprep.subr.bf16.mxu0 0
      %668 = vmatpush1.bf16.xpose.msra.mxu0 0
      %669 = vmatprep.subr.bf16.mxu0 0
      %670 = vmatpush1.bf16.xpose.msra.mxu0 0
      %671 = vmatprep.subr.bf16.mxu0 0
      %672 = vmatpush1.bf16.xpose.msra.mxu0 0
      %673 = vmatprep.subr.bf16.mxu0 0
      %674 = vmatpush1.bf16.xpose.msra.mxu0 0
      %675 = vmatprep.subr.bf16.mxu0 0
      %676 = vmatpush1.bf16.xpose.msra.mxu0 0
      %677 = vmatprep.subr.bf16.mxu0 0
      %678 = vmatpush1.bf16.xpose.msra.mxu0 0
      %679 = vmatprep.subr.bf16.mxu0 0
      %680 = vmatpush1.bf16.xpose.msra.mxu0 0
      %681 = vmatprep.subr.bf16.mxu0 0
      %682 = vmatpush1.bf16.xpose.msra.mxu0 0
      %683 = vmatprep.subr.bf16.mxu0 0
      %684 = vmatpush1.bf16.xpose.msra.mxu0 0
      %685 = vmatprep.subr.bf16.mxu0 0
      %686 = vmatpush1.bf16.xpose.msra.mxu0 0
      %687 = vmatprep.subr.bf16.mxu0 0
      %688 = vmatpush1.bf16.xpose.msra.mxu0 0
      %689 = vmatprep.subr.bf16.mxu0 0
      %690 = vmatpush1.bf16.xpose.msra.mxu0 0
      %691 = vmatprep.subr.bf16.mxu0 0
      %692 = vmatpush1.bf16.xpose.msra.mxu0 0
      %693 = vmatprep.subr.bf16.mxu0 0
      %694 = vmatpush1.bf16.xpose.msra.mxu0 0
      %695 = vmatprep.mubr.bf16.mxu0 0
      %696 = vmatmul.mubr.bf16.gmra.mrb[0].mxu0 %v658
      %v697 = vpop.f32.mrb[0].mxu0
      %v698 = vadd.f32 0.0, %v697
      %v699 = vpop.f32.mrb[0].mxu0
      %v700 = vpop.f32.mrb[0].mxu0
      %v701 = vpop.f32.mrb[0].mxu0
      %702 = vdwg.mxu0
      %v703 = vmul.f32 %v698, 0.17677669
      %v704 = vsel %vm307, -1e+18, %v703
      %v705 = vsel %vm360, %v704, -inf
      %706 = vmax.xlane.f32.xlu0 %v705
      %v707 = vpop.xlane.xlu0 %706
      %v708 = vsub.f32 %v704, %v707
      %v709 = vmul.f32 %v708, 1.442695
      %v710 = vpow.pop %v709
      %v711 = vsel %vm360, %v710, 0.0
      %712 = vadd.xlane.f32.xlu0 %v711
      %v713 = vpop.xlane.xlu0 %712
      %v714 = vrcp.pop %v713
      %v715 = vmul.f32 %v710, %v714
      %v716 = vpack.c.bf16 %v715, %v715
      %717 = vrot.lane.b32.xlu0 %v492, 32
      %v718 = vpop.permute.xlu0 %717
      %v720 = vsel %vm360, %v716, 0
      %v723 = vsel %vm376, %v718, 0
      %725 = vmatprep.subr.bf16.mxu0 0
      %726 = vmatpush1.bf16.msra.mxu0 %v723
      %727 = vmatprep.subr.bf16.mxu0 0
      %728 = vmatpush1.bf16.msra.mxu0 0
      %729 = vmatprep.subr.bf16.mxu0 0
      %730 = vmatpush1.bf16.msra.mxu0 0
      %731 = vmatprep.subr.bf16.mxu0 0
      %732 = vmatpush1.bf16.msra.mxu0 0
      %733 = vmatprep.subr.bf16.mxu0 0
      %734 = vmatpush1.bf16.msra.mxu0 0
      %735 = vmatprep.subr.bf16.mxu0 0
      %736 = vmatpush1.bf16.msra.mxu0 0
      %737 = vmatprep.subr.bf16.mxu0 0
      %738 = vmatpush1.bf16.msra.mxu0 0
      %739 = vmatprep.subr.bf16.mxu0 0
      %740 = vmatpush1.bf16.msra.mxu0 0
      %741 = vmatprep.subr.bf16.mxu0 0
      %742 = vmatpush1.bf16.msra.mxu0 0
      %743 = vmatprep.subr.bf16.mxu0 0
      %744 = vmatpush1.bf16.msra.mxu0 0
      %745 = vmatprep.subr.bf16.mxu0 0
      %746 = vmatpush1.bf16.msra.mxu0 0
      %747 = vmatprep.subr.bf16.mxu0 0
      %748 = vmatpush1.bf16.msra.mxu0 0
      %749 = vmatprep.subr.bf16.mxu0 0
      %750 = vmatpush1.bf16.msra.mxu0 0
      %751 = vmatprep.subr.bf16.mxu0 0
      %752 = vmatpush1.bf16.msra.mxu0 0
      %753 = vmatprep.subr.bf16.mxu0 0
      %754 = vmatpush1.bf16.msra.mxu0 0
      %755 = vmatprep.subr.bf16.mxu0 0
      %756 = vmatpush1.bf16.msra.mxu0 0
      %757 = vmatprep.mubr.bf16.mxu0 0
      %758 = vmatmul.mubr.bf16.gmra.mrb[0].mxu0 %v720
      %v759 = vpop.f32.mrb[0].mxu0
      %v760 = vadd.f32 0.0, %v759
      %v761 = vpop.f32.mrb[0].mxu0
      %v762 = vpop.f32.mrb[0].mxu0
      %v763 = vpop.f32.mrb[0].mxu0
      %764 = vdwg.mxu0
      %766 = vrot.lane.b32.xlu0 %v536, 32
      %v767 = vpop.permute.xlu0 %766
      %770 = vrot.lane.b32.xlu0 %v648, 64
      %v771 = vpop.permute.xlu0 %770
      %774 = vrot.lane.b32.xlu0 %v760, 96
      %v775 = vpop.permute.xlu0 %774
      %v777 = vsel %vm311, %v415, %v767
      %vm778 = vcmask 523264
      %v779 = vsel %vm778, %v777, %v771
      %vm780 = vcmask 785408
      %v781 = vsel %vm780, %v779, %v775
      %v782 = vpack.c.bf16 %v781, %v781
      %783 = vst [vmem:[%s289] sm:$0xf] %v782
      %p784 = scmp.lt.s32.totalorder %s19, 1
      %s785 = scalar_select %p784, %s19, 1
      %p786 = scmp.lt.s32.totalorder %s20, 0
      %s787 = scalar_select %p786, %s20, 0
      %s788 = sadd.s32 %s787, %s785
      %s789 = smul.addr %s788, 4
      %s790 = scalar_lea.vmem %s4, %s789
      // Predicated region
      $region37: #{transformer_decoder_forward.18} parent=35 // pred_check
        %p791 = pneg %p153
      $region38: #{transformer_decoder_forward.18} parent=35 // pred_check_branch
        %793 = sbr.rel (%p791) target = $region40
      $region39: #{transformer_decoder_forward.18} parent=35 // pred_region
        _
      $region40: #{transformer_decoder_forward.18} parent=35 // pred_fallthru
        _
    $region36: #{transformer_decoder_forward.18} parent=5 // pred_fallthru
      _
    %p794 = scmp.le.s32.totalorder 2, %s10
    // Predicated region
    $region41: #{transformer_decoder_forward.18} parent=5 // pred_check
      %p795 = pneg %p794
    $region42: #{transformer_decoder_forward.18} parent=5 // pred_check_branch
      %797 = sbr.rel (%p795) target = $region44
    $region43: #{transformer_decoder_forward.18} parent=5 // pred_region
      %s798 = ssub.s32 %s10, 2
      // Predicated region
      $region45: #{transformer_decoder_forward.18} parent=43 // pred_check
        %p799 = pneg %p159
      $region46: #{transformer_decoder_forward.18} parent=43 // pred_check_branch
        %801 = sbr.rel (%p799) target = $region48
      $region47: #{transformer_decoder_forward.18} parent=43 // pred_region
        %p802 = scmp.lt.s32.totalorder %s21, 1
        %s803 = scalar_select %p802, %s21, 1
        %p804 = scmp.lt.s32.totalorder %s22, 0
        %s805 = scalar_select %p804, %s22, 0
        %s806 = sadd.s32 %s805, %s803
        %s807 = smul.addr %s806, 4
        %s808 = scalar_lea.vmem %s4, %s807
      $region48: #{transformer_decoder_forward.18} parent=43 // pred_fallthru
        _
    $region44: #{transformer_decoder_forward.18} parent=5 // pred_fallthru
      _
  $region6: #{transformer_decoder_forward.18} parent=0 // loop_footer
    %s14 = sadd.s32 1, %s10
  $region7: #{transformer_decoder_forward.18} parent=0 // loop_footer_branch
    %9 = sbr.rel target = $region3
  $region8: #{transformer_decoder_forward.18} parent=0 // loop_exit
    _

// kernel: transformer_decoder_forward.21
$region0: #{transformer_decoder_forward.21}
  #allocation0 [shape = 'u32[]', space=smem, size = 0x4, offset = 0x4, fixed_abs, tag = 'smem constant byte address 0x4 - core index']
  #allocation1 [shape = 'u32[144,128]{1,0:T(1,128)}', space=vmem, size = 0x12000, scoped, tag = 'internal scratch']
  #allocation2 [shape = 'f32[16,128]{1,0:T(8,128)}', space=vmem, size = 0x2000, scoped, tag = 'scratch operand']
  %s0 = inlined_call_operand.vmem [shape: bf16[16,128], index: 0, kind: input, shape index: {}]
  %s1 = inlined_call_operand.vmem [shape: bf16[128,128], index: 1, kind: input, shape index: {}]
  %s2 = inlined_call_operand.vmem [shape: f32[1,128], index: 2, kind: input, shape index: {}]
  %s3 = inlined_call_operand.vmem [shape: f32[1,128], index: 3, kind: input, shape index: {}]
  %s4 = inlined_call_operand.vmem [shape: f32[1,128], index: 4, kind: input, shape index: {}]
  %s5 = inlined_call_operand.vmem [shape: bf16[16,128], index: 5, kind: output, shape index: {}]
  %s6 = sld [smem:[#allocation0]]
  $region30: #{transformer_decoder_forward.21} parent=0
    _
  %s8 = ssub.s32 1, %s6
  %s9 = scalar_select 0, %s8, %s6
  // Predicated region
  $region2: #{transformer_decoder_forward.21} parent=0 // pred_check
    _
  $region3: #{transformer_decoder_forward.21} parent=0 // pred_check_branch
    %11 = sbr.rel (0) target = $region5
  $region4: #{transformer_decoder_forward.21} parent=0 // pred_region
    _
  $region5: #{transformer_decoder_forward.21} parent=0 // pred_fallthru
    _
  // Predicated region
  $region6: #{transformer_decoder_forward.21} parent=0 // pred_check
    _
  $region7: #{transformer_decoder_forward.21} parent=0 // pred_check_branch
    %13 = sbr.rel (0) target = $region9
  $region8: #{transformer_decoder_forward.21} parent=0 // pred_region
    _
  $region9: #{transformer_decoder_forward.21} parent=0 // pred_fallthru
    _
  // Predicated region
  $region10: #{transformer_decoder_forward.21} parent=0 // pred_check
    _
  $region11: #{transformer_decoder_forward.21} parent=0 // pred_check_branch
    %15 = sbr.rel (0) target = $region13
  $region12: #{transformer_decoder_forward.21} parent=0 // pred_region
    _
  $region13: #{transformer_decoder_forward.21} parent=0 // pred_fallthru
    _
  // Predicated region
  $region14: #{transformer_decoder_forward.21} parent=0 // pred_check
    _
  $region15: #{transformer_decoder_forward.21} parent=0 // pred_check_branch
    %17 = sbr.rel (0) target = $region17
  $region16: #{transformer_decoder_forward.21} parent=0 // pred_region
    _
  $region17: #{transformer_decoder_forward.21} parent=0 // pred_fallthru
    _
  // Predicated region
  $region18: #{transformer_decoder_forward.21} parent=0 // pred_check
    _
  $region19: #{transformer_decoder_forward.21} parent=0 // pred_check_branch
    %19 = sbr.rel (0) target = $region21
  $region20: #{transformer_decoder_forward.21} parent=0 // pred_region
    _
  $region21: #{transformer_decoder_forward.21} parent=0 // pred_fallthru
    _
  %v21 = vld [vmem:[%s0] sm:$0xf]
  %v22 = vld [vmem:[%s0 + $0x4] sm:$0xf]
  %v23 = vunpack.c.l.bf16 %v21
  %v24 = vunpack.c.l.bf16 %v22
  %25 = vadd.xlane.f32.xlu0 %v23
  %v26 = vpop.xlane.xlu0 %25
  %27 = vadd.xlane.f32.xlu0 %v24
  %v28 = vpop.xlane.xlu0 %27
  %v29 = vrcp.pop 128.0
  %v30 = vmul.f32 %v26, %v29
  %v31 = vmul.f32 %v28, %v29
  %v32 = vsub.f32 %v23, %v30
  %v33 = vsub.f32 %v24, %v31
  %v34 = vmul.f32 %v32, %v32
  %v35 = vmul.f32 %v33, %v33
  %36 = vadd.xlane.f32.xlu0 %v34
  %v37 = vpop.xlane.xlu0 %36
  %38 = vadd.xlane.f32.xlu0 %v35
  %v39 = vpop.xlane.xlu0 %38
  %v40 = vmul.f32 %v37, 0.007874016
  %v41 = vmul.f32 %v39, 0.007874016
  %v42 = vrsqrt.pop %v40
  %v43 = vmul.f32 %v40, %v42
  %vm44 = vcmp.eq.f32.partialorder %v40, inf
  %v45 = vsel %vm44, %v40, %v43
  %vm46 = vcmp.eq.f32.partialorder %v40, 0.0
  %v47 = vand.u32 %v40, 2147483648
  %v48 = vsel %vm46, %v47, %v45
  %v49 = vrsqrt.pop %v41
  %v50 = vmul.f32 %v41, %v49
  %vm51 = vcmp.eq.f32.partialorder %v41, inf
  %v52 = vsel %vm51, %v41, %v50
  %vm53 = vcmp.eq.f32.partialorder %v41, 0.0
  %v54 = vand.u32 %v41, 2147483648
  %v55 = vsel %vm53, %v54, %v52
  %v56 = vadd.f32 %v48, 1e-06
  %v57 = vadd.f32 %v55, 1e-06
  %v58 = vrcp.pop %v56
  %v59 = vrcp.pop %v57
  %v60 = vld [vmem:[%s3] sm:$0x1]
  %v62 = vlaneseq
  %v63 = vshrl.u32 %v62, 7
  %v64 = vsub.s32 0, %v63
  %v65 = vrot.slane %v60, %v64
  %v67 = vmul.f32 %v65, %v32
  %v68 = vmul.f32 %v65, %v33
  %v69 = vmul.f32 %v67, %v58
  %v70 = vmul.f32 %v68, %v59
  %v71 = vld [vmem:[%s4] sm:$0x1]
  %v73 = vlaneseq
  %v74 = vshrl.u32 %v73, 7
  %v75 = vsub.s32 0, %v74
  %v76 = vrot.slane %v71, %v75
  %v78 = vadd.f32 %v69, %v76
  %v79 = vadd.f32 %v70, %v76
  %v80 = vpack.c.bf16 %v79, %v78
  %v81 = vld [vmem:[%s1] sm:$0xf]
  %v82 = vld [vmem:[%s1 + $0x4] sm:$0xf]
  %v83 = vld [vmem:[%s1 + $0x8] sm:$0xf]
  %v84 = vld [vmem:[%s1 + $0xc] sm:$0xf]
  %v85 = vld [vmem:[%s1 + $0x10] sm:$0xf]
  %v86 = vld [vmem:[%s1 + $0x14] sm:$0xf]
  %v87 = vld [vmem:[%s1 + $0x18] sm:$0xf]
  %v88 = vld [vmem:[%s1 + $0x1c] sm:$0xf]
  %v89 = vld [vmem:[%s1 + $0x20] sm:$0xf]
  %v90 = vld [vmem:[%s1 + $0x24] sm:$0xf]
  %v91 = vld [vmem:[%s1 + $0x28] sm:$0xf]
  %v92 = vld [vmem:[%s1 + $0x2c] sm:$0xf]
  %v93 = vld [vmem:[%s1 + $0x30] sm:$0xf]
  %v94 = vld [vmem:[%s1 + $0x34] sm:$0xf]
  %v95 = vld [vmem:[%s1 + $0x38] sm:$0xf]
  %v96 = vld [vmem:[%s1 + $0x3c] sm:$0xf]
  %v97 = vld [vmem:[%s2] sm:$0x1]
  %v99 = vlaneseq
  %v100 = vshrl.u32 %v99, 7
  %v101 = vsub.s32 0, %v100
  %v102 = vrot.slane %v97, %v101
  %v120 = vunpack.c.l.b16 %v81
  %v121 = vunpack.c.l.b16 %v82
  %v122 = vunpack.c.l.b16 %v83
  %v123 = vunpack.c.l.b16 %v84
  %v124 = vunpack.c.l.b16 %v85
  %v125 = vunpack.c.l.b16 %v86
  %v126 = vunpack.c.l.b16 %v87
  %v127 = vunpack.c.l.b16 %v88
  %v128 = vunpack.c.l.b16 %v89
  %v129 = vunpack.c.l.b16 %v90
  %v130 = vunpack.c.l.b16 %v91
  %v131 = vunpack.c.l.b16 %v92
  %v132 = vunpack.c.l.b16 %v93
  %v133 = vunpack.c.l.b16 %v94
  %v134 = vunpack.c.l.b16 %v95
  %v135 = vunpack.c.l.b16 %v96
  %v136 = vpack.c.b16 %v121, %v120
  %v137 = vpack.c.b16 %v123, %v122
  %v138 = vpack.c.b16 %v125, %v124
  %v139 = vpack.c.b16 %v127, %v126
  %v140 = vpack.c.b16 %v129, %v128
  %v141 = vpack.c.b16 %v131, %v130
  %v142 = vpack.c.b16 %v133, %v132
  %v143 = vpack.c.b16 %v135, %v134
  %152 = vmatprep.subr.bf16.mxu0 0
  %153 = vmatpush1.bf16.msra.mxu0 %v136
  %154 = vmatprep.subr.bf16.mxu0 0
  %155 = vmatpush1.bf16.msra.mxu0 %v137
  %156 = vmatprep.subr.bf16.mxu0 0
  %157 = vmatpush1.bf16.msra.mxu0 %v138
  %158 = vmatprep.subr.bf16.mxu0 0
  %159 = vmatpush1.bf16.msra.mxu0 %v139
  %160 = vmatprep.subr.bf16.mxu0 0
  %161 = vmatpush1.bf16.msra.mxu0 %v140
  %162 = vmatprep.subr.bf16.mxu0 0
  %163 = vmatpush1.bf16.msra.mxu0 %v141
  %164 = vmatprep.subr.bf16.mxu0 0
  %165 = vmatpush1.bf16.msra.mxu0 %v142
  %166 = vmatprep.subr.bf16.mxu0 0
  %167 = vmatpush1.bf16.msra.mxu0 %v143
  %168 = vmatprep.subr.bf16.mxu0 0
  %169 = vmatpush1.bf16.msra.mxu0 0
  %170 = vmatprep.subr.bf16.mxu0 0
  %171 = vmatpush1.bf16.msra.mxu0 0
  %172 = vmatprep.subr.bf16.mxu0 0
  %173 = vmatpush1.bf16.msra.mxu0 0
  %174 = vmatprep.subr.bf16.mxu0 0
  %175 = vmatpush1.bf16.msra.mxu0 0
  %176 = vmatprep.subr.bf16.mxu0 0
  %177 = vmatpush1.bf16.msra.mxu0 0
  %178 = vmatprep.subr.bf16.mxu0 0
  %179 = vmatpush1.bf16.msra.mxu0 0
  %180 = vmatprep.subr.bf16.mxu0 0
  %181 = vmatpush1.bf16.msra.mxu0 0
  %182 = vmatprep.subr.bf16.mxu0 0
  %183 = vmatpush1.bf16.msra.mxu0 0
  %184 = vmatprep.mubr.bf16.mxu0 0
  %185 = vmatmul.mubr.bf16.gmra.mrb[0].mxu0 %v80
  %v186 = vpop.f32.mrb[0].mxu0
  %v187 = vadd.f32 %v102, %v186
  %v188 = vpop.f32.mrb[0].mxu0
  %v189 = vpop.f32.mrb[0].mxu0
  %v190 = vadd.f32 %v102, %v189
  %v191 = vpop.f32.mrb[0].mxu0
  %192 = vdwg.mxu0
  %v193 = vpack.c.bf16 %v190, %v187
  %v195 = vunpack.c.l.b16 %v193
  %v196 = vunpack.c.h.b16 %v193
  %v197 = vpack.c.b16 %v195, %v195
  %v198 = vpack.c.b16 %v196, %v196
  %201 = vst [vmem:[%s5] sm:$0xf] %v197
  %202 = vst [vmem:[%s5 + $0x4] sm:$0xf] %v198
  // Predicated region
  $region22: #{transformer_decoder_forward.21} parent=0 // pred_check
    _
  $region23: #{transformer_decoder_forward.21} parent=0 // pred_check_branch
    %204 = sbr.rel (0) target = $region25
  $region24: #{transformer_decoder_forward.21} parent=0 // pred_region
    _
  $region25: #{transformer_decoder_forward.21} parent=0 // pred_fallthru
    _
  // Predicated region
  $region26: #{transformer_decoder_forward.21} parent=0 // pred_check
    _
  $region27: #{transformer_decoder_forward.21} parent=0 // pred_check_branch
    %206 = sbr.rel (0) target = $region29
  $region28: #{transformer_decoder_forward.21} parent=0 // pred_region
    _
  $region29: #{transformer_decoder_forward.21} parent=0 // pred_fallthru
    _

// kernel: transformer_decoder_forward.20
$region0: #{transformer_decoder_forward.20}
  #allocation0 [shape = 'u32[]', space=smem, size = 0x4, offset = 0x4, fixed_abs, tag = 'smem constant byte address 0x4 - core index']
  #allocation1 [shape = 'u32[144,128]{1,0:T(1,128)}', space=vmem, size = 0x12000, scoped, tag = 'internal scratch']
  #allocation2 [shape = 'f32[16,256]{1,0:T(8,128)}', space=vmem, size = 0x4000, scoped, tag = 'scratch operand']
  %s0 = inlined_call_operand.vmem [shape: bf16[16,128], index: 0, kind: input, shape index: {}]
  %s1 = inlined_call_operand.vmem [shape: bf16[128,256], index: 1, kind: input, shape index: {}]
  %s2 = inlined_call_operand.vmem [shape: f32[1,256], index: 2, kind: input, shape index: {}]
  %s3 = inlined_call_operand.vmem [shape: bf16[16,256], index: 3, kind: output, shape index: {}]
  %s4 = sld [smem:[#allocation0]]
  $region22: #{transformer_decoder_forward.20} parent=0
    _
  %s6 = ssub.s32 1, %s4
  %s7 = scalar_select 0, %s6, %s4
  // Predicated region
  $region2: #{transformer_decoder_forward.20} parent=0 // pred_check
    _
  $region3: #{transformer_decoder_forward.20} parent=0 // pred_check_branch
    %9 = sbr.rel (0) target = $region5
  $region4: #{transformer_decoder_forward.20} parent=0 // pred_region
    _
  $region5: #{transformer_decoder_forward.20} parent=0 // pred_fallthru
    _
  // Predicated region
  $region6: #{transformer_decoder_forward.20} parent=0 // pred_check
    _
  $region7: #{transformer_decoder_forward.20} parent=0 // pred_check_branch
    %11 = sbr.rel (0) target = $region9
  $region8: #{transformer_decoder_forward.20} parent=0 // pred_region
    _
  $region9: #{transformer_decoder_forward.20} parent=0 // pred_fallthru
    _
  // Predicated region
  $region10: #{transformer_decoder_forward.20} parent=0 // pred_check
    _
  $region11: #{transformer_decoder_forward.20} parent=0 // pred_check_branch
    %13 = sbr.rel (0) target = $region13
  $region12: #{transformer_decoder_forward.20} parent=0 // pred_region
    _
  $region13: #{transformer_decoder_forward.20} parent=0 // pred_fallthru
    _
  %v15 = vld [vmem:[%s0] sm:$0xf]
  %v16 = vld [vmem:[%s0 + $0x4] sm:$0xf]
  %v17 = vld [vmem:[%s1] sm:$0xff]
  %v18 = vld [vmem:[%s1 + $0x8] sm:$0xff]
  %v19 = vld [vmem:[%s1 + $0x10] sm:$0xff]
  %v20 = vld [vmem:[%s1 + $0x18] sm:$0xff]
  %v21 = vld [vmem:[%s1 + $0x20] sm:$0xff]
  %v22 = vld [vmem:[%s1 + $0x28] sm:$0xff]
  %v23 = vld [vmem:[%s1 + $0x30] sm:$0xff]
  %v24 = vld [vmem:[%s1 + $0x38] sm:$0xff]
  %v25 = vld [vmem:[%s1 + $0x40] sm:$0xff]
  %v26 = vld [vmem:[%s1 + $0x48] sm:$0xff]
  %v27 = vld [vmem:[%s1 + $0x50] sm:$0xff]
  %v28 = vld [vmem:[%s1 + $0x58] sm:$0xff]
  %v29 = vld [vmem:[%s1 + $0x60] sm:$0xff]
  %v30 = vld [vmem:[%s1 + $0x68] sm:$0xff]
  %v31 = vld [vmem:[%s1 + $0x70] sm:$0xff]
  %v32 = vld [vmem:[%s1 + $0x78] sm:$0xff]
  %v33 = vld [vmem:[%s2] sm:$0x3]
  %v35 = vlaneseq
  %v36 = vshrl.u32 %v35, 7
  %v37 = vsub.s32 0, %v36
  %v38 = vrot.slane %v33, %v37
  %v39 = vlaneseq
  %v40 = vshrl.u32 %v39, 7
  %v41 = vsub.s32 1, %v40
  %v42 = vrot.slane %v33, %v41
  %v47 = vunpack.c.l.b16 %v15
  %v48 = vunpack.c.l.b16 %v16
  %v49 = vpack.c.b16 %v48, %v47
  %v67 = vunpack.c.l.b16 %v17
  %v68 = vunpack.c.h.b16 %v17
  %v69 = vunpack.c.l.b16 %v18
  %v70 = vunpack.c.h.b16 %v18
  %v71 = vunpack.c.l.b16 %v19
  %v72 = vunpack.c.h.b16 %v19
  %v73 = vunpack.c.l.b16 %v20
  %v74 = vunpack.c.h.b16 %v20
  %v75 = vunpack.c.l.b16 %v21
  %v76 = vunpack.c.h.b16 %v21
  %v77 = vunpack.c.l.b16 %v22
  %v78 = vunpack.c.h.b16 %v22
  %v79 = vunpack.c.l.b16 %v23
  %v80 = vunpack.c.h.b16 %v23
  %v81 = vunpack.c.l.b16 %v24
  %v82 = vunpack.c.h.b16 %v24
  %v83 = vunpack.c.l.b16 %v25
  %v84 = vunpack.c.h.b16 %v25
  %v85 = vunpack.c.l.b16 %v26
  %v86 = vunpack.c.h.b16 %v26
  %v87 = vunpack.c.l.b16 %v27
  %v88 = vunpack.c.h.b16 %v27
  %v89 = vunpack.c.l.b16 %v28
  %v90 = vunpack.c.h.b16 %v28
  %v91 = vunpack.c.l.b16 %v29
  %v92 = vunpack.c.h.b16 %v29
  %v93 = vunpack.c.l.b16 %v30
  %v94 = vunpack.c.h.b16 %v30
  %v95 = vunpack.c.l.b16 %v31
  %v96 = vunpack.c.h.b16 %v31
  %v97 = vunpack.c.l.b16 %v32
  %v98 = vunpack.c.h.b16 %v32
  %v99 = vpack.c.b16 %v69, %v67
  %v100 = vpack.c.b16 %v70, %v68
  %v101 = vpack.c.b16 %v73, %v71
  %v102 = vpack.c.b16 %v74, %v72
  %v103 = vpack.c.b16 %v77, %v75
  %v104 = vpack.c.b16 %v78, %v76
  %v105 = vpack.c.b16 %v81, %v79
  %v106 = vpack.c.b16 %v82, %v80
  %v107 = vpack.c.b16 %v85, %v83
  %v108 = vpack.c.b16 %v86, %v84
  %v109 = vpack.c.b16 %v89, %v87
  %v110 = vpack.c.b16 %v90, %v88
  %v111 = vpack.c.b16 %v93, %v91
  %v112 = vpack.c.b16 %v94, %v92
  %v113 = vpack.c.b16 %v97, %v95
  %v114 = vpack.c.b16 %v98, %v96
  %131 = vmatprep.subr.bf16.mxu0 %v100
  %132 = vmatpush1.bf16.msra.mxu0 %v99
  %133 = vmatprep.subr.bf16.mxu0 %v102
  %134 = vmatpush1.bf16.msra.mxu0 %v101
  %135 = vmatprep.subr.bf16.mxu0 %v104
  %136 = vmatpush1.bf16.msra.mxu0 %v103
  %137 = vmatprep.subr.bf16.mxu0 %v106
  %138 = vmatpush1.bf16.msra.mxu0 %v105
  %139 = vmatprep.subr.bf16.mxu0 %v108
  %140 = vmatpush1.bf16.msra.mxu0 %v107
  %141 = vmatprep.subr.bf16.mxu0 %v110
  %142 = vmatpush1.bf16.msra.mxu0 %v109
  %143 = vmatprep.subr.bf16.mxu0 %v112
  %144 = vmatpush1.bf16.msra.mxu0 %v111
  %145 = vmatprep.subr.bf16.mxu0 %v114
  %146 = vmatpush1.bf16.msra.mxu0 %v113
  %147 = vmatprep.subr.bf16.mxu0 0
  %148 = vmatpush1.bf16.msra.mxu0 0
  %149 = vmatprep.subr.bf16.mxu0 0
  %150 = vmatpush1.bf16.msra.mxu0 0
  %151 = vmatprep.subr.bf16.mxu0 0
  %152 = vmatpush1.bf16.msra.mxu0 0
  %153 = vmatprep.subr.bf16.mxu0 0
  %154 = vmatpush1.bf16.msra.mxu0 0
  %155 = vmatprep.subr.bf16.mxu0 0
  %156 = vmatpush1.bf16.msra.mxu0 0
  %157 = vmatprep.subr.bf16.mxu0 0
  %158 = vmatpush1.bf16.msra.mxu0 0
  %159 = vmatprep.subr.bf16.mxu0 0
  %160 = vmatpush1.bf16.msra.mxu0 0
  %161 = vmatprep.subr.bf16.mxu0 0
  %162 = vmatpush1.bf16.msra.mxu0 0
  %163 = vmatprep.mubr.bf16.mxu0 0
  %164 = vmatmul.mubr.bf16.gmra.mrb[0].mxu0 %v49
  %v165 = vpop.f32.mrb[0].mxu0
  %v166 = vadd.f32 %v38, %v165
  %v167 = vpop.f32.mrb[0].mxu0
  %v168 = vadd.f32 %v42, %v167
  %v169 = vpop.f32.mrb[0].mxu0
  %v170 = vadd.f32 %v38, %v169
  %v171 = vpop.f32.mrb[0].mxu0
  %v172 = vadd.f32 %v42, %v171
  %173 = vdwg.mxu0
  %v174 = vpack.c.bf16 %v170, %v166
  %v175 = vpack.c.bf16 %v172, %v168
  %v178 = vunpack.c.l.b16 %v174
  %v179 = vunpack.c.l.b16 %v175
  %v180 = vunpack.c.h.b16 %v174
  %v181 = vunpack.c.h.b16 %v175
  %v182 = vpack.c.b16 %v179, %v178
  %v183 = vpack.c.b16 %v181, %v180
  %186 = vst [vmem:[%s3] sm:$0xff] %v182
  %187 = vst [vmem:[%s3 + $0x8] sm:$0xff] %v183
  // Predicated region
  $region14: #{transformer_decoder_forward.20} parent=0 // pred_check
    _
  $region15: #{transformer_decoder_forward.20} parent=0 // pred_check_branch
    %189 = sbr.rel (0) target = $region17
  $region16: #{transformer_decoder_forward.20} parent=0 // pred_region
    _
  $region17: #{transformer_decoder_forward.20} parent=0 // pred_fallthru
    _
  // Predicated region
  $region18: #{transformer_decoder_forward.20} parent=0 // pred_check
    _
  $region19: #{transformer_decoder_forward.20} parent=0 // pred_check_branch
    %191 = sbr.rel (0) target = $region21
  $region20: #{transformer_decoder_forward.20} parent=0 // pred_region
    _
  $region21: #{transformer_decoder_forward.20} parent=0 // pred_fallthru
    _

// kernel: transformer_decoder_forward.33
$region0: #{transformer_decoder_forward.33}
  #allocation0 [shape = 'u32[]', space=smem, size = 0x4, offset = 0x4, fixed_abs, tag = 'smem constant byte address 0x4 - core index']
  #allocation1 [shape = 'u32[144,128]{1,0:T(1,128)}', space=vmem, size = 0x12000, scoped, tag = 'internal scratch']
  %s0 = inlined_call_operand.vmem [shape: bf16[16,128], index: 0, kind: input, shape index: {}]
  %s1 = inlined_call_operand.vmem [shape: f32[1,128], index: 1, kind: input, shape index: {}]
  %s2 = inlined_call_operand.vmem [shape: f32[1,128], index: 2, kind: input, shape index: {}]
  %s3 = inlined_call_operand.vmem [shape: f32[16,128], index: 3, kind: output, shape index: {}]
  %s4 = sld [smem:[#allocation0]]
  $region22: #{transformer_decoder_forward.33} parent=0
    _
  %s6 = ssub.s32 1, %s4
  %s7 = scalar_select 0, %s6, %s4
  // Predicated region
  $region2: #{transformer_decoder_forward.33} parent=0 // pred_check
    _
  $region3: #{transformer_decoder_forward.33} parent=0 // pred_check_branch
    %9 = sbr.rel (0) target = $region5
  $region4: #{transformer_decoder_forward.33} parent=0 // pred_region
    _
  $region5: #{transformer_decoder_forward.33} parent=0 // pred_fallthru
    _
  // Predicated region
  $region6: #{transformer_decoder_forward.33} parent=0 // pred_check
    _
  $region7: #{transformer_decoder_forward.33} parent=0 // pred_check_branch
    %11 = sbr.rel (0) target = $region9
  $region8: #{transformer_decoder_forward.33} parent=0 // pred_region
    _
  $region9: #{transformer_decoder_forward.33} parent=0 // pred_fallthru
    _
  // Predicated region
  $region10: #{transformer_decoder_forward.33} parent=0 // pred_check
    _
  $region11: #{transformer_decoder_forward.33} parent=0 // pred_check_branch
    %13 = sbr.rel (0) target = $region13
  $region12: #{transformer_decoder_forward.33} parent=0 // pred_region
    _
  $region13: #{transformer_decoder_forward.33} parent=0 // pred_fallthru
    _
  %v14 = vld [vmem:[%s0] sm:$0xf]
  %v15 = vld [vmem:[%s0 + $0x4] sm:$0xf]
  %v16 = vunpack.c.l.bf16 %v14
  %v17 = vunpack.c.l.bf16 %v15
  %18 = vadd.xlane.f32.xlu0 %v16
  %v19 = vpop.xlane.xlu0 %18
  %20 = vadd.xlane.f32.xlu0 %v17
  %v21 = vpop.xlane.xlu0 %20
  %v22 = vrcp.pop 128.0
  %v23 = vmul.f32 %v19, %v22
  %v24 = vmul.f32 %v21, %v22
  %v25 = vsub.f32 %v16, %v23
  %v26 = vsub.f32 %v17, %v24
  %v27 = vmul.f32 %v25, %v25
  %v28 = vmul.f32 %v26, %v26
  %29 = vadd.xlane.f32.xlu0 %v27
  %v30 = vpop.xlane.xlu0 %29
  %31 = vadd.xlane.f32.xlu0 %v28
  %v32 = vpop.xlane.xlu0 %31
  %v33 = vmul.f32 %v30, 0.007874016
  %v34 = vmul.f32 %v32, 0.007874016
  %v35 = vrsqrt.pop %v33
  %v36 = vmul.f32 %v33, %v35
  %vm37 = vcmp.eq.f32.partialorder %v33, inf
  %v38 = vsel %vm37, %v33, %v36
  %vm39 = vcmp.eq.f32.partialorder %v33, 0.0
  %v40 = vand.u32 %v33, 2147483648
  %v41 = vsel %vm39, %v40, %v38
  %v42 = vrsqrt.pop %v34
  %v43 = vmul.f32 %v34, %v42
  %vm44 = vcmp.eq.f32.partialorder %v34, inf
  %v45 = vsel %vm44, %v34, %v43
  %vm46 = vcmp.eq.f32.partialorder %v34, 0.0
  %v47 = vand.u32 %v34, 2147483648
  %v48 = vsel %vm46, %v47, %v45
  %v49 = vadd.f32 %v41, 1e-06
  %v50 = vadd.f32 %v48, 1e-06
  %v51 = vrcp.pop %v49
  %v52 = vrcp.pop %v50
  %v53 = vld [vmem:[%s1] sm:$0x1]
  %v55 = vlaneseq
  %v56 = vshrl.u32 %v55, 7
  %v57 = vsub.s32 0, %v56
  %v58 = vrot.slane %v53, %v57
  %v60 = vmul.f32 %v58, %v25
  %v61 = vmul.f32 %v58, %v26
  %v62 = vmul.f32 %v60, %v51
  %v63 = vmul.f32 %v61, %v52
  %v64 = vld [vmem:[%s2] sm:$0x1]
  %v66 = vlaneseq
  %v67 = vshrl.u32 %v66, 7
  %v68 = vsub.s32 0, %v67
  %v69 = vrot.slane %v64, %v68
  %v71 = vadd.f32 %v62, %v69
  %v72 = vadd.f32 %v63, %v69
  %73 = vst [vmem:[%s3] sm:$0xff] %v71
  %74 = vst [vmem:[%s3 + $0x8] sm:$0xff] %v72
  // Predicated region
  $region14: #{transformer_decoder_forward.33} parent=0 // pred_check
    _
  $region15: #{transformer_decoder_forward.33} parent=0 // pred_check_branch
    %76 = sbr.rel (0) target = $region17
  $region16: #{transformer_decoder_forward.33} parent=0 // pred_region
    _
  $region17: #{transformer_decoder_forward.33} parent=0 // pred_fallthru
    _
  // Predicated region
  $region18: #{transformer_decoder_forward.33} parent=0 // pred_check
    _
  $region19: #{transformer_decoder_forward.33} parent=0 // pred_check_branch
    %78 = sbr.rel (0) target = $region21
  $region20: #{transformer_decoder_forward.33} parent=0 // pred_region
    _
  $region21: #{transformer_decoder_forward.33} parent=0 // pred_fallthru
    _

// kernel: transformer_decoder_forward.22
$region0: #{transformer_decoder_forward.22}
  #allocation0 [shape = 'u32[]', space=smem, size = 0x4, offset = 0x4, fixed_abs, tag = 'smem constant byte address 0x4 - core index']
  #allocation1 [shape = 'u32[144,128]{1,0:T(1,128)}', space=vmem, size = 0x12000, scoped, tag = 'internal scratch']
  %s0 = inlined_call_operand.vmem [shape: bf16[2,8,128], index: 0, kind: input, shape index: {}]
  %s1 = inlined_call_operand.vmem [shape: bf16[2,8,256], index: 1, kind: input, shape index: {}, may-alias: {1,2}]
  %s2 = inlined_call_operand.vmem [shape: bf16[2,8,256], index: 2, kind: input, shape index: {}, may-alias: {1,2}]
  %s3 = inlined_call_operand.vmem [shape: f32[2,1,8], index: 3, kind: input, shape index: {}]
  %s4 = inlined_call_operand.vmem [shape: bf16[2,8,128], index: 4, kind: output, shape index: {0}]
  %s5 = inlined_call_operand.hbm [shape: f32[2,8,8], index: 5, kind: output, shape index: {1}]
  %6 = xla_tuple %s4, %s5
  %s7 = sld [smem:[#allocation0]]
  $region57: #{transformer_decoder_forward.22} parent=0
    _
  %s9 = ssub.s32 1, %s7
  %s10 = scalar_select 0, %s9, %s7
  $region1: #{transformer_decoder_forward.22} parent=0
    #allocation2 [shape = 'u8[8192]{0}', space=vmem, size = 0x2000, scoped, tag = 'output window, operand 1']
    #allocation3 [shape = 's32[2]{0}', space=sflag, size = 0x8, scoped, tag = 'scoped memory for transformer_decoder_forward.22']
    %11 = vsyncpa [#allocation3], 0
    %s12 = scalar_lea.sflag [#allocation3], 1
    %13 = vsyncpa %s12, 0
    loop: start=0, step=1, limit=4
    $region2: #{transformer_decoder_forward.22} parent=1 // loop_pre_header
      _
    $region3: #{transformer_decoder_forward.22} parent=1 // loop_header
      %s15 = sphi 0, %s19
      %p16 = scmp.ge.s32.totalorder %s15, 4
      %s22 = sphi 0, %s34
      %s23 = sphi 0, %s30
      %s24 = sphi 0, %s22
      %s25 = sphi 0, %s23
      %s26 = sphi 0, %s24
      %s27 = sphi 0, %s25
      %s39 = sphi 0, %s41
      %s42 = sphi 0, %s39
      %s43 = sphi 0, %s42
      %s59 = sphi 0, %s43
      %s65 = sphi 0, %s67
      %s68 = sphi 0, %s65
      %s69 = sphi 0, %s68
      %s85 = sphi 0, %s69
      %s91 = sphi 0, %s93
      %s94 = sphi 0, %s91
      %s95 = sphi 0, %s94
      %s111 = sphi 0, %s95
      %s117 = sphi 0, %s119
      %s120 = sphi 0, %s117
      %s121 = sphi 0, %s120
      %s137 = sphi 0, %s121
      %s145 = sphi 0, %s147
      %s148 = sphi 0, %s145
      %s149 = sphi 0, %s148
      %s165 = sphi 0, %s149
      %s173 = sphi 0, %s175
      %s176 = sphi 0, %s173
      %s177 = sphi 0, %s176
      %s193 = sphi 0, %s177
    $region4: #{transformer_decoder_forward.22} parent=1 // loop_header_branch
      %18 = sbr.rel (%p16) target = $region8
    $region5: #{transformer_decoder_forward.22} parent=1 // loop_body
      %s20 = ssub.s32 %s15, 1
      %s21 = ssub.s32 %s15, 2
      %s28 = sadd.s32 1, %s23
      %p29 = scmp.ge.s32.totalorder %s28, 1
      %s30 = scalar_select %p29, 0, %s28
      %s31 = sadd.s32 1, %s22
      %s32 = scalar_select %p29, %s31, %s22
      %p33 = scmp.ge.s32.totalorder %s32, 2
      %s34 = scalar_select %p33, 0, %s32
      %s35 = ssub.s32 %s22, %s34
      %s36 = ssub.s32 %s23, %s30
      %s37 = sor.u32 %s35, %s36
      %p38 = scmp.eq.s32.totalorder %s37, 0
      %s40 = sadd.s32 %s39, 1
      %s41 = scalar_select %p38, %s39, %s40
      %p44 = pneg %p38
      %p45 = scmp.eq.s32.totalorder %s15, 1
      %p46 = por %p44, %p45
      %p47 = scmp.ne.s32.totalorder %s39, %s42
      %p48 = scmp.eq.s32.totalorder %s15, 0
      %p49 = por %p47, %p48
      %p50 = scmp.ne.s32.totalorder %s39, %s42
      %p51 = scmp.eq.s32.totalorder %s20, 1
      %p52 = por %p50, %p51
      %p53 = scmp.ne.s32.totalorder %s42, %s43
      %p54 = scmp.eq.s32.totalorder %s20, 0
      %p55 = por %p53, %p54
      %p56 = scmp.ne.s32.totalorder %s42, %s43
      %p57 = scmp.eq.s32.totalorder %s21, 1
      %p58 = por %p56, %p57
      %p60 = scmp.ne.s32.totalorder %s43, %s59
      %p61 = scmp.eq.s32.totalorder %s21, 0
      %p62 = por %p60, %p61
      %s63 = ssub.s32 %s22, %s34
      %p64 = scmp.eq.s32.totalorder %s63, 0
      %s66 = sadd.s32 %s65, 1
      %s67 = scalar_select %p64, %s65, %s66
      %p70 = pneg %p64
      %p71 = scmp.eq.s32.totalorder %s15, 1
      %p72 = por %p70, %p71
      %p73 = scmp.ne.s32.totalorder %s65, %s68
      %p74 = scmp.eq.s32.totalorder %s15, 0
      %p75 = por %p73, %p74
      %p76 = scmp.ne.s32.totalorder %s65, %s68
      %p77 = scmp.eq.s32.totalorder %s20, 1
      %p78 = por %p76, %p77
      %p79 = scmp.ne.s32.totalorder %s68, %s69
      %p80 = scmp.eq.s32.totalorder %s20, 0
      %p81 = por %p79, %p80
      %p82 = scmp.ne.s32.totalorder %s68, %s69
      %p83 = scmp.eq.s32.totalorder %s21, 1
      %p84 = por %p82, %p83
      %p86 = scmp.ne.s32.totalorder %s69, %s85
      %p87 = scmp.eq.s32.totalorder %s21, 0
      %p88 = por %p86, %p87
      %s89 = ssub.s32 %s22, %s34
      %p90 = scmp.eq.s32.totalorder %s89, 0
      %s92 = sadd.s32 %s91, 1
      %s93 = scalar_select %p90, %s91, %s92
      %p96 = pneg %p90
      %p97 = scmp.eq.s32.totalorder %s15, 1
      %p98 = por %p96, %p97
      %p99 = scmp.ne.s32.totalorder %s91, %s94
      %p100 = scmp.eq.s32.totalorder %s15, 0
      %p101 = por %p99, %p100
      %p102 = scmp.ne.s32.totalorder %s91, %s94
      %p103 = scmp.eq.s32.totalorder %s20, 1
      %p104 = por %p102, %p103
      %p105 = scmp.ne.s32.totalorder %s94, %s95
      %p106 = scmp.eq.s32.totalorder %s20, 0
      %p107 = por %p105, %p106
      %p108 = scmp.ne.s32.totalorder %s94, %s95
      %p109 = scmp.eq.s32.totalorder %s21, 1
      %p110 = por %p108, %p109
      %p112 = scmp.ne.s32.totalorder %s95, %s111
      %p113 = scmp.eq.s32.totalorder %s21, 0
      %p114 = por %p112, %p113
      %s115 = ssub.s32 %s22, %s34
      %p116 = scmp.eq.s32.totalorder %s115, 0
      %s118 = sadd.s32 %s117, 1
      %s119 = scalar_select %p116, %s117, %s118
      %p122 = pneg %p116
      %p123 = scmp.eq.s32.totalorder %s15, 1
      %p124 = por %p122, %p123
      %p125 = scmp.ne.s32.totalorder %s117, %s120
      %p126 = scmp.eq.s32.totalorder %s15, 0
      %p127 = por %p125, %p126
      %p128 = scmp.ne.s32.totalorder %s117, %s120
      %p129 = scmp.eq.s32.totalorder %s20, 1
      %p130 = por %p128, %p129
      %p131 = scmp.ne.s32.totalorder %s120, %s121
      %p132 = scmp.eq.s32.totalorder %s20, 0
      %p133 = por %p131, %p132
      %p134 = scmp.ne.s32.totalorder %s120, %s121
      %p135 = scmp.eq.s32.totalorder %s21, 1
      %p136 = por %p134, %p135
      %p138 = scmp.ne.s32.totalorder %s121, %s137
      %p139 = scmp.eq.s32.totalorder %s21, 0
      %p140 = por %p138, %p139
      %s141 = ssub.s32 %s22, %s34
      %s142 = ssub.s32 %s23, %s30
      %s143 = sor.u32 %s141, %s142
      %p144 = scmp.eq.s32.totalorder %s143, 0
      %s146 = sadd.s32 %s145, 1
      %s147 = scalar_select %p144, %s145, %s146
      %p150 = pneg %p144
      %p151 = scmp.eq.s32.totalorder %s15, 1
      %p152 = por %p150, %p151
      %p153 = scmp.ne.s32.totalorder %s145, %s148
      %p154 = scmp.eq.s32.totalorder %s15, 0
      %p155 = por %p153, %p154
      %p156 = scmp.ne.s32.totalorder %s145, %s148
      %p157 = scmp.eq.s32.totalorder %s20, 1
      %p158 = por %p156, %p157
      %p159 = scmp.ne.s32.totalorder %s148, %s149
      %p160 = scmp.eq.s32.totalorder %s20, 0
      %p161 = por %p159, %p160
      %p162 = scmp.ne.s32.totalorder %s148, %s149
      %p163 = scmp.eq.s32.totalorder %s21, 1
      %p164 = por %p162, %p163
      %p166 = scmp.ne.s32.totalorder %s149, %s165
      %p167 = scmp.eq.s32.totalorder %s21, 0
      %p168 = por %p166, %p167
      %s169 = ssub.s32 %s22, %s34
      %s170 = ssub.s32 %s23, %s30
      %s171 = sor.u32 %s169, %s170
      %p172 = scmp.eq.s32.totalorder %s171, 0
      %s174 = sadd.s32 %s173, 1
      %s175 = scalar_select %p172, %s173, %s174
      %p178 = pneg %p172
      %p179 = scmp.eq.s32.totalorder %s15, 1
      %p180 = por %p178, %p179
      %p181 = scmp.ne.s32.totalorder %s173, %s176
      %p182 = scmp.eq.s32.totalorder %s15, 0
      %p183 = por %p181, %p182
      %p184 = scmp.ne.s32.totalorder %s173, %s176
      %p185 = scmp.eq.s32.totalorder %s20, 1
      %p186 = por %p184, %p185
      %p187 = scmp.ne.s32.totalorder %s176, %s177
      %p188 = scmp.eq.s32.totalorder %s20, 0
      %p189 = por %p187, %p188
      %p190 = scmp.ne.s32.totalorder %s176, %s177
      %p191 = scmp.eq.s32.totalorder %s21, 1
      %p192 = por %p190, %p191
      %p194 = scmp.ne.s32.totalorder %s177, %s193
      %p195 = scmp.eq.s32.totalorder %s21, 0
      %p196 = por %p194, %p195
      %p197 = scmp.le.s32.totalorder 1, %s15
      %p198 = scmp.lt.s32.totalorder %s15, 3
      %p199 = pnand %p197, %p198
      %p200 = pneg %p199
      // Predicated region
      $region9: #{transformer_decoder_forward.22} parent=5 // pred_check
        _
      $region10: #{transformer_decoder_forward.22} parent=5 // pred_check_branch
        %202 = sbr.rel (%p199) target = $region12
      $region11: #{transformer_decoder_forward.22} parent=5 // pred_region
        %s203 = ssub.s32 %s15, 1
      $region12: #{transformer_decoder_forward.22} parent=5 // pred_fallthru
        _
      %p204 = scmp.lt.s32.totalorder %s15, 2
      // Predicated region
      $region13: #{transformer_decoder_forward.22} parent=5 // pred_check
        %p205 = pneg %p204
      $region14: #{transformer_decoder_forward.22} parent=5 // pred_check_branch
        %207 = sbr.rel (%p205) target = $region16
      $region15: #{transformer_decoder_forward.22} parent=5 // pred_region
        // Predicated region
        $region17: #{transformer_decoder_forward.22} parent=15 // pred_check
          %p208 = pneg %p49
        $region18: #{transformer_decoder_forward.22} parent=15 // pred_check_branch
          %210 = sbr.rel (%p208) target = $region20
        $region19: #{transformer_decoder_forward.22} parent=15 // pred_region
          %p211 = scmp.lt.s32.totalorder %s22, 1
          %s212 = scalar_select %p211, %s22, 1
          %p213 = scmp.lt.s32.totalorder %s23, 0
          %s214 = scalar_select %p213, %s23, 0
          %s215 = sadd.s32 %s214, %s212
          %s216 = smul.addr %s215, 4
          %s217 = scalar_lea.vmem %s0, %s216
        $region20: #{transformer_decoder_forward.22} parent=15 // pred_fallthru
          _
        // Predicated region
        $region21: #{transformer_decoder_forward.22} parent=15 // pred_check
          %p218 = pneg %p75
        $region22: #{transformer_decoder_forward.22} parent=15 // pred_check_branch
          %220 = sbr.rel (%p218) target = $region24
        $region23: #{transformer_decoder_forward.22} parent=15 // pred_region
          %p221 = scmp.lt.s32.totalorder %s22, 1
          %s222 = scalar_select %p221, %s22, 1
          %s223 = smul.addr %s222, 2
          %s224 = smul.addr %s223, 4
          %s225 = scalar_lea.vmem %s1, %s224
        $region24: #{transformer_decoder_forward.22} parent=15 // pred_fallthru
          _
        // Predicated region
        $region25: #{transformer_decoder_forward.22} parent=15 // pred_check
          %p226 = pneg %p101
        $region26: #{transformer_decoder_forward.22} parent=15 // pred_check_branch
          %228 = sbr.rel (%p226) target = $region28
        $region27: #{transformer_decoder_forward.22} parent=15 // pred_region
          %p229 = scmp.lt.s32.totalorder %s22, 1
          %s230 = scalar_select %p229, %s22, 1
          %s231 = smul.addr %s230, 2
          %s232 = sadd.s32 1, %s231
          %s233 = smul.addr %s232, 4
          %s234 = scalar_lea.vmem %s2, %s233
        $region28: #{transformer_decoder_forward.22} parent=15 // pred_fallthru
          _
        // Predicated region
        $region29: #{transformer_decoder_forward.22} parent=15 // pred_check
          %p235 = pneg %p127
        $region30: #{transformer_decoder_forward.22} parent=15 // pred_check_branch
          %237 = sbr.rel (%p235) target = $region32
        $region31: #{transformer_decoder_forward.22} parent=15 // pred_region
          %p238 = scmp.lt.s32.totalorder %s22, 1
          %s239 = scalar_select %p238, %s22, 1
          %s240 = scalar_lea.vmem %s3, %s239
        $region32: #{transformer_decoder_forward.22} parent=15 // pred_fallthru
          _
      $region16: #{transformer_decoder_forward.22} parent=5 // pred_fallthru
        _
      %p241 = scmp.le.s32.totalorder 1, %s15
      %p242 = scmp.lt.s32.totalorder %s15, 3
      %p243 = pnand %p241, %p242
      %p244 = pneg %p243
      // Predicated region
      $region33: #{transformer_decoder_forward.22} parent=5 // pred_check
        _
      $region34: #{transformer_decoder_forward.22} parent=5 // pred_check_branch
        %246 = sbr.rel (%p243) target = $region36
      $region35: #{transformer_decoder_forward.22} parent=5 // pred_region
        %s247 = ssub.s32 %s15, 1
        %p248 = scmp.lt.s32.totalorder %s24, 1
        %s249 = scalar_select %p248, %s24, 1
        %p250 = scmp.lt.s32.totalorder %s25, 0
        %s251 = scalar_select %p250, %s25, 0
        %s252 = sadd.s32 %s251, %s249
        %s253 = smul.addr %s252, 4
        %s254 = scalar_lea.vmem %s0, %s253
        %p255 = pneg %p55
        %p256 = pneg %p52
        %p257 = scmp.lt.s32.totalorder %s24, 1
        %s258 = scalar_select %p257, %s24, 1
        %s259 = smul.addr %s258, 2
        %s260 = smul.addr %s259, 4
        %s261 = scalar_lea.vmem %s1, %s260
        %p262 = pneg %p81
        %p263 = pneg %p78
        %p264 = scmp.lt.s32.totalorder %s24, 1
        %s265 = scalar_select %p264, %s24, 1
        %s266 = smul.addr %s265, 2
        %s267 = sadd.s32 1, %s266
        %s268 = smul.addr %s267, 4
        %s269 = scalar_lea.vmem %s2, %s268
        %p270 = pneg %p107
        %p271 = pneg %p104
        %p272 = scmp.lt.s32.totalorder %s24, 1
        %s273 = scalar_select %p272, %s24, 1
        %s274 = scalar_lea.vmem %s3, %s273
        %p275 = pneg %p133
        %p276 = pneg %p130
        %p277 = pneg %p161
        %p278 = pneg %p158
        %p279 = scmp.lt.s32.totalorder %s24, 1
        %s280 = scalar_select %p279, %s24, 1
        %p281 = scmp.lt.s32.totalorder %s25, 0
        %s282 = scalar_select %p281, %s25, 0
        %s283 = sadd.s32 %s282, %s280
        %s284 = smul.addr %s283, 4
        %s285 = scalar_lea.vmem %s4, %s284
        %p286 = pneg %p189
        %p287 = pneg %p186
        %s288 = sand.u32 %s176, 1
        %s289 = scalar_lea.sflag [#allocation3], %s288
        %s290 = sand.u32 %s176, 1
        %s291 = smul.addr %s290, 8
        %s292 = scalar_lea.vmem [#allocation2], %s291
        %p293 = scmp.lt.s32.totalorder %s24, 1
        %s294 = scalar_select %p293, %s24, 1
        %p295 = scmp.lt.s32.totalorder %s25, 0
        %s296 = scalar_select %p295, %s25, 0
        %s297 = sadd.s32 %s296, %s294
        %s298 = smul.addr %s297, 4
        %s299 = scalar_lea.vmem %s0, %s298
        %p300 = scmp.lt.s32.totalorder %s24, 1
        %s301 = scalar_select %p300, %s24, 1
        %s302 = smul.addr %s301, 2
        %s303 = smul.addr %s302, 4
        %s304 = scalar_lea.vmem %s1, %s303
        %p305 = scmp.lt.s32.totalorder %s24, 1
        %s306 = scalar_select %p305, %s24, 1
        %s307 = smul.addr %s306, 2
        %s308 = sadd.s32 1, %s307
        %s309 = smul.addr %s308, 4
        %s310 = scalar_lea.vmem %s2, %s309
        %p311 = scmp.lt.s32.totalorder %s24, 1
        %s312 = scalar_select %p311, %s24, 1
        %s313 = scalar_lea.vmem %s3, %s312
        %p314 = scmp.lt.s32.totalorder %s24, 1
        %s315 = scalar_select %p314, %s24, 1
        %p316 = scmp.lt.s32.totalorder %s25, 0
        %s317 = scalar_select %p316, %s25, 0
        %s318 = sadd.s32 %s317, %s315
        %s319 = smul.addr %s318, 4
        %s320 = scalar_lea.vmem %s4, %s319
        %v322 = vld [vmem:[%s313] sm:$0x1]
        %vm323 = vcmp.gt.f32.partialorder %v322, 0.0
        %v324 = vsel %vm323, 1, 0
        %v325 = vlaneseq
        %v326 = vshrl.u32 %v325, 7
        %v327 = vsub.s32 0, %v326
        %v328 = vrot.slane %v324, %v327
        %vm329 = vcmp.eq.s32.totalorder %v328, 1
        %v330 = vld [vmem:[%s299] sm:$0xf]
        %v331 = vld [vmem:[%s304] sm:$0xf]
        %v332 = vld [vmem:[%s310] sm:$0xf]
        %vm333 = vcmask 261120
        %v335 = vsel %vm333, %v330, 0
        %v338 = vsel %vm333, %v331, 0
        %340 = vmatprep.subr.bf16.mxu0 0
        %341 = vmatpush1.bf16.xpose.msra.mxu0 %v338
        %342 = vmatprep.subr.bf16.mxu0 0
        %343 = vmatpush1.bf16.xpose.msra.mxu0 0
        %344 = vmatprep.subr.bf16.mxu0 0
        %345 = vmatpush1.bf16.xpose.msra.mxu0 0
        %346 = vmatprep.subr.bf16.mxu0 0
        %347 = vmatpush1.bf16.xpose.msra.mxu0 0
        %348 = vmatprep.subr.bf16.mxu0 0
        %349 = vmatpush1.bf16.xpose.msra.mxu0 0
        %350 = vmatprep.subr.bf16.mxu0 0
        %351 = vmatpush1.bf16.xpose.msra.mxu0 0
        %352 = vmatprep.subr.bf16.mxu0 0
        %353 = vmatpush1.bf16.xpose.msra.mxu0 0
        %354 = vmatprep.subr.bf16.mxu0 0
        %355 = vmatpush1.bf16.xpose.msra.mxu0 0
        %356 = vmatprep.subr.bf16.mxu0 0
        %357 = vmatpush1.bf16.xpose.msra.mxu0 0
        %358 = vmatprep.subr.bf16.mxu0 0
        %359 = vmatpush1.bf16.xpose.msra.mxu0 0
        %360 = vmatprep.subr.bf16.mxu0 0
        %361 = vmatpush1.bf16.xpose.msra.mxu0 0
        %362 = vmatprep.subr.bf16.mxu0 0
        %363 = vmatpush1.bf16.xpose.msra.mxu0 0
        %364 = vmatprep.subr.bf16.mxu0 0
        %365 = vmatpush1.bf16.xpose.msra.mxu0 0
        %366 = vmatprep.subr.bf16.mxu0 0
        %367 = vmatpush1.bf16.xpose.msra.mxu0 0
        %368 = vmatprep.subr.bf16.mxu0 0
        %369 = vmatpush1.bf16.xpose.msra.mxu0 0
        %370 = vmatprep.subr.bf16.mxu0 0
        %371 = vmatpush1.bf16.xpose.msra.mxu0 0
        %372 = vmatprep.mubr.bf16.mxu0 0
        %373 = vmatmul.mubr.bf16.gmra.mrb[0].mxu0 %v335
        %v374 = vpop.f32.mrb[0].mxu0
        %v375 = vadd.f32 0.0, %v374
        %v376 = vpop.f32.mrb[0].mxu0
        %v377 = vpop.f32.mrb[0].mxu0
        %v378 = vpop.f32.mrb[0].mxu0
        %379 = vdwg.mxu0
        %v380 = vmul.f32 %v375, 0.17677669
        %v381 = vsel %vm329, -1e+18, %v380
        %vm382 = vcmask 64512
        %v383 = vsel %vm382, %v381, -inf
        %384 = vmax.xlane.f32.xlu0 %v383
        %v385 = vpop.xlane.xlu0 %384
        %v386 = vsub.f32 %v381, %v385
        %v387 = vmul.f32 %v386, 1.442695
        %v388 = vpow.pop %v387
        %v389 = vsel %vm382, %v388, 0.0
        %390 = vadd.xlane.f32.xlu0 %v389
        %v391 = vpop.xlane.xlu0 %390
        %v392 = vrcp.pop %v391
        %v393 = vmul.f32 %v388, %v392
        %394 = vst.msk [vmem:[%s292] sm:$0xff] %vm382, %v393
        %v395 = vpack.c.bf16 %v393, %v393
        %v397 = vsel %vm382, %v395, 0
        %vm399 = vcmask 1043456
        %v401 = vsel %vm399, %v332, 0
        %403 = vmatprep.subr.bf16.mxu0 0
        %404 = vmatpush1.bf16.msra.mxu0 %v401
        %405 = vmatprep.subr.bf16.mxu0 0
        %406 = vmatpush1.bf16.msra.mxu0 0
        %407 = vmatprep.subr.bf16.mxu0 0
        %408 = vmatpush1.bf16.msra.mxu0 0
        %409 = vmatprep.subr.bf16.mxu0 0
        %410 = vmatpush1.bf16.msra.mxu0 0
        %411 = vmatprep.subr.bf16.mxu0 0
        %412 = vmatpush1.bf16.msra.mxu0 0
        %413 = vmatprep.subr.bf16.mxu0 0
        %414 = vmatpush1.bf16.msra.mxu0 0
        %415 = vmatprep.subr.bf16.mxu0 0
        %416 = vmatpush1.bf16.msra.mxu0 0
        %417 = vmatprep.subr.bf16.mxu0 0
        %418 = vmatpush1.bf16.msra.mxu0 0
        %419 = vmatprep.subr.bf16.mxu0 0
        %420 = vmatpush1.bf16.msra.mxu0 0
        %421 = vmatprep.subr.bf16.mxu0 0
        %422 = vmatpush1.bf16.msra.mxu0 0
        %423 = vmatprep.subr.bf16.mxu0 0
        %424 = vmatpush1.bf16.msra.mxu0 0
        %425 = vmatprep.subr.bf16.mxu0 0
        %426 = vmatpush1.bf16.msra.mxu0 0
        %427 = vmatprep.subr.bf16.mxu0 0
        %428 = vmatpush1.bf16.msra.mxu0 0
        %429 = vmatprep.subr.bf16.mxu0 0
        %430 = vmatpush1.bf16.msra.mxu0 0
        %431 = vmatprep.subr.bf16.mxu0 0
        %432 = vmatpush1.bf16.msra.mxu0 0
        %433 = vmatprep.subr.bf16.mxu0 0
        %434 = vmatpush1.bf16.msra.mxu0 0
        %435 = vmatprep.mubr.bf16.mxu0 0
        %436 = vmatmul.mubr.bf16.gmra.mrb[0].mxu0 %v397
        %v437 = vpop.f32.mrb[0].mxu0
        %v438 = vadd.f32 0.0, %v437
        %v439 = vpop.f32.mrb[0].mxu0
        %v440 = vpop.f32.mrb[0].mxu0
        %v441 = vpop.f32.mrb[0].mxu0
        %442 = vdwg.mxu0
        %v444 = vunpack.c.l.b16 %v330
        %v445 = vpack.c.b16 %v444, %v444
        %446 = vrot.lane.b32.xlu0 %v445, 96
        %v447 = vpop.permute.xlu0 %446
        %v449 = vunpack.c.l.b16 %v331
        %v450 = vpack.c.b16 %v449, %v449
        %451 = vrot.lane.b32.xlu0 %v450, 96
        %v452 = vpop.permute.xlu0 %451
        %v454 = vsel %vm333, %v447, 0
        %v457 = vsel %vm333, %v452, 0
        %459 = vmatprep.subr.bf16.mxu0 0
        %460 = vmatpush1.bf16.xpose.msra.mxu0 %v457
        %461 = vmatprep.subr.bf16.mxu0 0
        %462 = vmatpush1.bf16.xpose.msra.mxu0 0
        %463 = vmatprep.subr.bf16.mxu0 0
        %464 = vmatpush1.bf16.xpose.msra.mxu0 0
        %465 = vmatprep.subr.bf16.mxu0 0
        %466 = vmatpush1.bf16.xpose.msra.mxu0 0
        %467 = vmatprep.subr.bf16.mxu0 0
        %468 = vmatpush1.bf16.xpose.msra.mxu0 0
        %469 = vmatprep.subr.bf16.mxu0 0
        %470 = vmatpush1.bf16.xpose.msra.mxu0 0
        %471 = vmatprep.subr.bf16.mxu0 0
        %472 = vmatpush1.bf16.xpose.msra.mxu0 0
        %473 = vmatprep.subr.bf16.mxu0 0
        %474 = vmatpush1.bf16.xpose.msra.mxu0 0
        %475 = vmatprep.subr.bf16.mxu0 0
        %476 = vmatpush1.bf16.xpose.msra.mxu0 0
        %477 = vmatprep.subr.bf16.mxu0 0
        %478 = vmatpush1.bf16.xpose.msra.mxu0 0
        %479 = vmatprep.subr.bf16.mxu0 0
        %480 = vmatpush1.bf16.xpose.msra.mxu0 0
        %481 = vmatprep.subr.bf16.mxu0 0
        %482 = vmatpush1.bf16.xpose.msra.mxu0 0
        %483 = vmatprep.subr.bf16.mxu0 0
        %484 = vmatpush1.bf16.xpose.msra.mxu0 0
        %485 = vmatprep.subr.bf16.mxu0 0
        %486 = vmatpush1.bf16.xpose.msra.mxu0 0
        %487 = vmatprep.subr.bf16.mxu0 0
        %488 = vmatpush1.bf16.xpose.msra.mxu0 0
        %489 = vmatprep.subr.bf16.mxu0 0
        %490 = vmatpush1.bf16.xpose.msra.mxu0 0
        %491 = vmatprep.mubr.bf16.mxu0 0
        %492 = vmatmul.mubr.bf16.gmra.mrb[0].mxu0 %v454
        %v493 = vpop.f32.mrb[0].mxu0
        %v494 = vadd.f32 0.0, %v493
        %v495 = vpop.f32.mrb[0].mxu0
        %v496 = vpop.f32.mrb[0].mxu0
        %v497 = vpop.f32.mrb[0].mxu0
        %498 = vdwg.mxu0
        %v499 = vmul.f32 %v494, 0.17677669
        %v500 = vsel %vm329, -1e+18, %v499
        %v501 = vsel %vm382, %v500, -inf
        %502 = vmax.xlane.f32.xlu0 %v501
        %v503 = vpop.xlane.xlu0 %502
        %v504 = vsub.f32 %v500, %v503
        %v505 = vmul.f32 %v504, 1.442695
        %v506 = vpow.pop %v505
        %v507 = vsel %vm382, %v506, 0.0
        %508 = vadd.xlane.f32.xlu0 %v507
        %v509 = vpop.xlane.xlu0 %508
        %v510 = vrcp.pop %v509
        %v511 = vmul.f32 %v506, %v510
        %v512 = vpack.c.bf16 %v511, %v511
        %v514 = vunpack.c.l.b16 %v332
        %v515 = vpack.c.b16 %v514, %v514
        %516 = vrot.lane.b32.xlu0 %v515, 96
        %v517 = vpop.permute.xlu0 %516
        %v519 = vsel %vm382, %v512, 0
        %v522 = vsel %vm399, %v517, 0
        %524 = vmatprep.subr.bf16.mxu0 0
        %525 = vmatpush1.bf16.msra.mxu0 %v522
        %526 = vmatprep.subr.bf16.mxu0 0
        %527 = vmatpush1.bf16.msra.mxu0 0
        %528 = vmatprep.subr.bf16.mxu0 0
        %529 = vmatpush1.bf16.msra.mxu0 0
        %530 = vmatprep.subr.bf16.mxu0 0
        %531 = vmatpush1.bf16.msra.mxu0 0
        %532 = vmatprep.subr.bf16.mxu0 0
        %533 = vmatpush1.bf16.msra.mxu0 0
        %534 = vmatprep.subr.bf16.mxu0 0
        %535 = vmatpush1.bf16.msra.mxu0 0
        %536 = vmatprep.subr.bf16.mxu0 0
        %537 = vmatpush1.bf16.msra.mxu0 0
        %538 = vmatprep.subr.bf16.mxu0 0
        %539 = vmatpush1.bf16.msra.mxu0 0
        %540 = vmatprep.subr.bf16.mxu0 0
        %541 = vmatpush1.bf16.msra.mxu0 0
        %542 = vmatprep.subr.bf16.mxu0 0
        %543 = vmatpush1.bf16.msra.mxu0 0
        %544 = vmatprep.subr.bf16.mxu0 0
        %545 = vmatpush1.bf16.msra.mxu0 0
        %546 = vmatprep.subr.bf16.mxu0 0
        %547 = vmatpush1.bf16.msra.mxu0 0
        %548 = vmatprep.subr.bf16.mxu0 0
        %549 = vmatpush1.bf16.msra.mxu0 0
        %550 = vmatprep.subr.bf16.mxu0 0
        %551 = vmatpush1.bf16.msra.mxu0 0
        %552 = vmatprep.subr.bf16.mxu0 0
        %553 = vmatpush1.bf16.msra.mxu0 0
        %554 = vmatprep.subr.bf16.mxu0 0
        %555 = vmatpush1.bf16.msra.mxu0 0
        %556 = vmatprep.mubr.bf16.mxu0 0
        %557 = vmatmul.mubr.bf16.gmra.mrb[0].mxu0 %v519
        %v558 = vpop.f32.mrb[0].mxu0
        %v559 = vadd.f32 0.0, %v558
        %v560 = vpop.f32.mrb[0].mxu0
        %v561 = vpop.f32.mrb[0].mxu0
        %v562 = vpop.f32.mrb[0].mxu0
        %563 = vdwg.mxu0
        %564 = vrot.lane.b32.xlu0 %v445, 64
        %v565 = vpop.permute.xlu0 %564
        %566 = vrot.lane.b32.xlu0 %v450, 64
        %v567 = vpop.permute.xlu0 %566
        %v569 = vsel %vm333, %v565, 0
        %v572 = vsel %vm333, %v567, 0
        %574 = vmatprep.subr.bf16.mxu0 0
        %575 = vmatpush1.bf16.xpose.msra.mxu0 %v572
        %576 = vmatprep.subr.bf16.mxu0 0
        %577 = vmatpush1.bf16.xpose.msra.mxu0 0
        %578 = vmatprep.subr.bf16.mxu0 0
        %579 = vmatpush1.bf16.xpose.msra.mxu0 0
        %580 = vmatprep.subr.bf16.mxu0 0
        %581 = vmatpush1.bf16.xpose.msra.mxu0 0
        %582 = vmatprep.subr.bf16.mxu0 0
        %583 = vmatpush1.bf16.xpose.msra.mxu0 0
        %584 = vmatprep.subr.bf16.mxu0 0
        %585 = vmatpush1.bf16.xpose.msra.mxu0 0
        %586 = vmatprep.subr.bf16.mxu0 0
        %587 = vmatpush1.bf16.xpose.msra.mxu0 0
        %588 = vmatprep.subr.bf16.mxu0 0
        %589 = vmatpush1.bf16.xpose.msra.mxu0 0
        %590 = vmatprep.subr.bf16.mxu0 0
        %591 = vmatpush1.bf16.xpose.msra.mxu0 0
        %592 = vmatprep.subr.bf16.mxu0 0
        %593 = vmatpush1.bf16.xpose.msra.mxu0 0
        %594 = vmatprep.subr.bf16.mxu0 0
        %595 = vmatpush1.bf16.xpose.msra.mxu0 0
        %596 = vmatprep.subr.bf16.mxu0 0
        %597 = vmatpush1.bf16.xpose.msra.mxu0 0
        %598 = vmatprep.subr.bf16.mxu0 0
        %599 = vmatpush1.bf16.xpose.msra.mxu0 0
        %600 = vmatprep.subr.bf16.mxu0 0
        %601 = vmatpush1.bf16.xpose.msra.mxu0 0
        %602 = vmatprep.subr.bf16.mxu0 0
        %603 = vmatpush1.bf16.xpose.msra.mxu0 0
        %604 = vmatprep.subr.bf16.mxu0 0
        %605 = vmatpush1.bf16.xpose.msra.mxu0 0
        %606 = vmatprep.mubr.bf16.mxu0 0
        %607 = vmatmul.mubr.bf16.gmra.mrb[0].mxu0 %v569
        %v608 = vpop.f32.mrb[0].mxu0
        %v609 = vadd.f32 0.0, %v608
        %v610 = vpop.f32.mrb[0].mxu0
        %v611 = vpop.f32.mrb[0].mxu0
        %v612 = vpop.f32.mrb[0].mxu0
        %613 = vdwg.mxu0
        %v614 = vmul.f32 %v609, 0.17677669
        %v615 = vsel %vm329, -1e+18, %v614
        %v616 = vsel %vm382, %v615, -inf
        %617 = vmax.xlane.f32.xlu0 %v616
        %v618 = vpop.xlane.xlu0 %617
        %v619 = vsub.f32 %v615, %v618
        %v620 = vmul.f32 %v619, 1.442695
        %v621 = vpow.pop %v620
        %v622 = vsel %vm382, %v621, 0.0
        %623 = vadd.xlane.f32.xlu0 %v622
        %v624 = vpop.xlane.xlu0 %623
        %v625 = vrcp.pop %v624
        %v626 = vmul.f32 %v621, %v625
        %v627 = vpack.c.bf16 %v626, %v626
        %628 = vrot.lane.b32.xlu0 %v515, 64
        %v629 = vpop.permute.xlu0 %628
        %v631 = vsel %vm382, %v627, 0
        %v634 = vsel %vm399, %v629, 0
        %636 = vmatprep.subr.bf16.mxu0 0
        %637 = vmatpush1.bf16.msra.mxu0 %v634
        %638 = vmatprep.subr.bf16.mxu0 0
        %639 = vmatpush1.bf16.msra.mxu0 0
        %640 = vmatprep.subr.bf16.mxu0 0
        %641 = vmatpush1.bf16.msra.mxu0 0
        %642 = vmatprep.subr.bf16.mxu0 0
        %643 = vmatpush1.bf16.msra.mxu0 0
        %644 = vmatprep.subr.bf16.mxu0 0
        %645 = vmatpush1.bf16.msra.mxu0 0
        %646 = vmatprep.subr.bf16.mxu0 0
        %647 = vmatpush1.bf16.msra.mxu0 0
        %648 = vmatprep.subr.bf16.mxu0 0
        %649 = vmatpush1.bf16.msra.mxu0 0
        %650 = vmatprep.subr.bf16.mxu0 0
        %651 = vmatpush1.bf16.msra.mxu0 0
        %652 = vmatprep.subr.bf16.mxu0 0
        %653 = vmatpush1.bf16.msra.mxu0 0
        %654 = vmatprep.subr.bf16.mxu0 0
        %655 = vmatpush1.bf16.msra.mxu0 0
        %656 = vmatprep.subr.bf16.mxu0 0
        %657 = vmatpush1.bf16.msra.mxu0 0
        %658 = vmatprep.subr.bf16.mxu0 0
        %659 = vmatpush1.bf16.msra.mxu0 0
        %660 = vmatprep.subr.bf16.mxu0 0
        %661 = vmatpush1.bf16.msra.mxu0 0
        %662 = vmatprep.subr.bf16.mxu0 0
        %663 = vmatpush1.bf16.msra.mxu0 0
        %664 = vmatprep.subr.bf16.mxu0 0
        %665 = vmatpush1.bf16.msra.mxu0 0
        %666 = vmatprep.subr.bf16.mxu0 0
        %667 = vmatpush1.bf16.msra.mxu0 0
        %668 = vmatprep.mubr.bf16.mxu0 0
        %669 = vmatmul.mubr.bf16.gmra.mrb[0].mxu0 %v631
        %v670 = vpop.f32.mrb[0].mxu0
        %v671 = vadd.f32 0.0, %v670
        %v672 = vpop.f32.mrb[0].mxu0
        %v673 = vpop.f32.mrb[0].mxu0
        %v674 = vpop.f32.mrb[0].mxu0
        %675 = vdwg.mxu0
        %676 = vrot.lane.b32.xlu0 %v445, 32
        %v677 = vpop.permute.xlu0 %676
        %678 = vrot.lane.b32.xlu0 %v450, 32
        %v679 = vpop.permute.xlu0 %678
        %v681 = vsel %vm333, %v677, 0
        %v684 = vsel %vm333, %v679, 0
        %686 = vmatprep.subr.bf16.mxu0 0
        %687 = vmatpush1.bf16.xpose.msra.mxu0 %v684
        %688 = vmatprep.subr.bf16.mxu0 0
        %689 = vmatpush1.bf16.xpose.msra.mxu0 0
        %690 = vmatprep.subr.bf16.mxu0 0
        %691 = vmatpush1.bf16.xpose.msra.mxu0 0
        %692 = vmatprep.subr.bf16.mxu0 0
        %693 = vmatpush1.bf16.xpose.msra.mxu0 0
        %694 = vmatprep.subr.bf16.mxu0 0
        %695 = vmatpush1.bf16.xpose.msra.mxu0 0
        %696 = vmatprep.subr.bf16.mxu0 0
        %697 = vmatpush1.bf16.xpose.msra.mxu0 0
        %698 = vmatprep.subr.bf16.mxu0 0
        %699 = vmatpush1.bf16.xpose.msra.mxu0 0
        %700 = vmatprep.subr.bf16.mxu0 0
        %701 = vmatpush1.bf16.xpose.msra.mxu0 0
        %702 = vmatprep.subr.bf16.mxu0 0
        %703 = vmatpush1.bf16.xpose.msra.mxu0 0
        %704 = vmatprep.subr.bf16.mxu0 0
        %705 = vmatpush1.bf16.xpose.msra.mxu0 0
        %706 = vmatprep.subr.bf16.mxu0 0
        %707 = vmatpush1.bf16.xpose.msra.mxu0 0
        %708 = vmatprep.subr.bf16.mxu0 0
        %709 = vmatpush1.bf16.xpose.msra.mxu0 0
        %710 = vmatprep.subr.bf16.mxu0 0
        %711 = vmatpush1.bf16.xpose.msra.mxu0 0
        %712 = vmatprep.subr.bf16.mxu0 0
        %713 = vmatpush1.bf16.xpose.msra.mxu0 0
        %714 = vmatprep.subr.bf16.mxu0 0
        %715 = vmatpush1.bf16.xpose.msra.mxu0 0
        %716 = vmatprep.subr.bf16.mxu0 0
        %717 = vmatpush1.bf16.xpose.msra.mxu0 0
        %718 = vmatprep.mubr.bf16.mxu0 0
        %719 = vmatmul.mubr.bf16.gmra.mrb[0].mxu0 %v681
        %v720 = vpop.f32.mrb[0].mxu0
        %v721 = vadd.f32 0.0, %v720
        %v722 = vpop.f32.mrb[0].mxu0
        %v723 = vpop.f32.mrb[0].mxu0
        %v724 = vpop.f32.mrb[0].mxu0
        %725 = vdwg.mxu0
        %v726 = vmul.f32 %v721, 0.17677669
        %v727 = vsel %vm329, -1e+18, %v726
        %v728 = vsel %vm382, %v727, -inf
        %729 = vmax.xlane.f32.xlu0 %v728
        %v730 = vpop.xlane.xlu0 %729
        %v731 = vsub.f32 %v727, %v730
        %v732 = vmul.f32 %v731, 1.442695
        %v733 = vpow.pop %v732
        %v734 = vsel %vm382, %v733, 0.0
        %735 = vadd.xlane.f32.xlu0 %v734
        %v736 = vpop.xlane.xlu0 %735
        %v737 = vrcp.pop %v736
        %v738 = vmul.f32 %v733, %v737
        %v739 = vpack.c.bf16 %v738, %v738
        %740 = vrot.lane.b32.xlu0 %v515, 32
        %v741 = vpop.permute.xlu0 %740
        %v743 = vsel %vm382, %v739, 0
        %v746 = vsel %vm399, %v741, 0
        %748 = vmatprep.subr.bf16.mxu0 0
        %749 = vmatpush1.bf16.msra.mxu0 %v746
        %750 = vmatprep.subr.bf16.mxu0 0
        %751 = vmatpush1.bf16.msra.mxu0 0
        %752 = vmatprep.subr.bf16.mxu0 0
        %753 = vmatpush1.bf16.msra.mxu0 0
        %754 = vmatprep.subr.bf16.mxu0 0
        %755 = vmatpush1.bf16.msra.mxu0 0
        %756 = vmatprep.subr.bf16.mxu0 0
        %757 = vmatpush1.bf16.msra.mxu0 0
        %758 = vmatprep.subr.bf16.mxu0 0
        %759 = vmatpush1.bf16.msra.mxu0 0
        %760 = vmatprep.subr.bf16.mxu0 0
        %761 = vmatpush1.bf16.msra.mxu0 0
        %762 = vmatprep.subr.bf16.mxu0 0
        %763 = vmatpush1.bf16.msra.mxu0 0
        %764 = vmatprep.subr.bf16.mxu0 0
        %765 = vmatpush1.bf16.msra.mxu0 0
        %766 = vmatprep.subr.bf16.mxu0 0
        %767 = vmatpush1.bf16.msra.mxu0 0
        %768 = vmatprep.subr.bf16.mxu0 0
        %769 = vmatpush1.bf16.msra.mxu0 0
        %770 = vmatprep.subr.bf16.mxu0 0
        %771 = vmatpush1.bf16.msra.mxu0 0
        %772 = vmatprep.subr.bf16.mxu0 0
        %773 = vmatpush1.bf16.msra.mxu0 0
        %774 = vmatprep.subr.bf16.mxu0 0
        %775 = vmatpush1.bf16.msra.mxu0 0
        %776 = vmatprep.subr.bf16.mxu0 0
        %777 = vmatpush1.bf16.msra.mxu0 0
        %778 = vmatprep.subr.bf16.mxu0 0
        %779 = vmatpush1.bf16.msra.mxu0 0
        %780 = vmatprep.mubr.bf16.mxu0 0
        %781 = vmatmul.mubr.bf16.gmra.mrb[0].mxu0 %v743
        %v782 = vpop.f32.mrb[0].mxu0
        %v783 = vadd.f32 0.0, %v782
        %v784 = vpop.f32.mrb[0].mxu0
        %v785 = vpop.f32.mrb[0].mxu0
        %v786 = vpop.f32.mrb[0].mxu0
        %787 = vdwg.mxu0
        %789 = vrot.lane.b32.xlu0 %v559, 32
        %v790 = vpop.permute.xlu0 %789
        %793 = vrot.lane.b32.xlu0 %v671, 64
        %v794 = vpop.permute.xlu0 %793
        %797 = vrot.lane.b32.xlu0 %v783, 96
        %v798 = vpop.permute.xlu0 %797
        %v800 = vsel %vm333, %v438, %v790
        %vm801 = vcmask 523264
        %v802 = vsel %vm801, %v800, %v794
        %vm803 = vcmask 785408
        %v804 = vsel %vm803, %v802, %v798
        %v805 = vpack.c.bf16 %v804, %v804
        %806 = vst [vmem:[%s320] sm:$0xf] %v805
        %p807 = scmp.lt.s32.totalorder %s24, 1
        %s808 = scalar_select %p807, %s24, 1
        %p809 = scmp.lt.s32.totalorder %s25, 0
        %s810 = scalar_select %p809, %s25, 0
        %s811 = sadd.s32 %s810, %s808
        %s812 = smul.addr %s811, 4
        %s813 = scalar_lea.vmem %s4, %s812
        %s814 = sand.u32 %s176, 1
        %s815 = scalar_lea.sflag [#allocation3], %s814
        %s816 = sand.u32 %s176, 1
        %s817 = smul.addr %s816, 8
        %s818 = scalar_lea.vmem [#allocation2], %s817
        // Predicated region
        $region37: #{transformer_decoder_forward.22} parent=35 // pred_check
          %p819 = pneg %p158
        $region38: #{transformer_decoder_forward.22} parent=35 // pred_check_branch
          %821 = sbr.rel (%p819) target = $region40
        $region39: #{transformer_decoder_forward.22} parent=35 // pred_region
          _
        $region40: #{transformer_decoder_forward.22} parent=35 // pred_fallthru
          _
        // Predicated region
        $region41: #{transformer_decoder_forward.22} parent=35 // pred_check
          %p822 = pneg %p186
        $region42: #{transformer_decoder_forward.22} parent=35 // pred_check_branch
          %824 = sbr.rel (%p822) target = $region44
        $region43: #{transformer_decoder_forward.22} parent=35 // pred_region
          %s826 = ssub.s32 128, 128
          %827 = vsyncadd %s815, %s826
          %s828 = sadd.s32 %s25, %s24
          %s829 = smul.addr %s828, 128
          %s830 = scalar_lea.hbm %s5, %s829
          %s832 = sshll.u32 %s818, 4
          %s833 = int_to_ptr.vmem [resolvable:$true] %s832
          %835 = dma.vmem_to_hbm [thread:$0]  %s833, 128, %s830, %s815
        $region44: #{transformer_decoder_forward.22} parent=35 // pred_fallthru
          _
      $region36: #{transformer_decoder_forward.22} parent=5 // pred_fallthru
        _
      %p836 = scmp.le.s32.totalorder 2, %s15
      // Predicated region
      $region45: #{transformer_decoder_forward.22} parent=5 // pred_check
        %p837 = pneg %p836
      $region46: #{transformer_decoder_forward.22} parent=5 // pred_check_branch
        %839 = sbr.rel (%p837) target = $region48
      $region47: #{transformer_decoder_forward.22} parent=5 // pred_region
        %s840 = ssub.s32 %s15, 2
        // Predicated region
        $region49: #{transformer_decoder_forward.22} parent=47 // pred_check
          %p841 = pneg %p164
        $region50: #{transformer_decoder_forward.22} parent=47 // pred_check_branch
          %843 = sbr.rel (%p841) target = $region52
        $region51: #{transformer_decoder_forward.22} parent=47 // pred_region
          %p844 = scmp.lt.s32.totalorder %s26, 1
          %s845 = scalar_select %p844, %s26, 1
          %p846 = scmp.lt.s32.totalorder %s27, 0
          %s847 = scalar_select %p846, %s27, 0
          %s848 = sadd.s32 %s847, %s845
          %s849 = smul.addr %s848, 4
          %s850 = scalar_lea.vmem %s4, %s849
        $region52: #{transformer_decoder_forward.22} parent=47 // pred_fallthru
          _
        // Predicated region
        $region53: #{transformer_decoder_forward.22} parent=47 // pred_check
          %p851 = pneg %p192
        $region54: #{transformer_decoder_forward.22} parent=47 // pred_check_branch
          %853 = sbr.rel (%p851) target = $region56
        $region55: #{transformer_decoder_forward.22} parent=47 // pred_region
          %s854 = sand.u32 %s177, 1
          %s855 = scalar_lea.sflag [#allocation3], %s854
          %s856 = sand.u32 %s177, 1
          %s857 = smul.addr %s856, 8
          %s858 = scalar_lea.vmem [#allocation2], %s857
          %859 = dma.done %s855, 128
        $region56: #{transformer_decoder_forward.22} parent=47 // pred_fallthru
          _
      $region48: #{transformer_decoder_forward.22} parent=5 // pred_fallthru
        _
    $region6: #{transformer_decoder_forward.22} parent=1 // loop_footer
      %s19 = sadd.s32 1, %s15
    $region7: #{transformer_decoder_forward.22} parent=1 // loop_footer_branch
      %14 = sbr.rel target = $region3
    $region8: #{transformer_decoder_forward.22} parent=1 // loop_exit
      _
    %860 = vsyncpa [#allocation3], 1
    %s861 = scalar_lea.sflag [#allocation3], 1
    %862 = vsyncpa %s861, 1

// kernel: transformer_decoder_forward.24
$region0: #{transformer_decoder_forward.24}
  #allocation0 [shape = 'u32[]', space=smem, size = 0x4, offset = 0x4, fixed_abs, tag = 'smem constant byte address 0x4 - core index']
  #allocation1 [shape = 'u32[144,128]{1,0:T(1,128)}', space=vmem, size = 0x12000, scoped, tag = 'internal scratch']
  #allocation2 [shape = 'f32[16,128]{1,0:T(8,128)}', space=vmem, size = 0x2000, scoped, tag = 'scratch operand']
  #allocation3 [shape = 'bf16[16,128]{1,0:T(16,128)(2,1)}', space=vmem, size = 0x1000, scoped, tag = 'scratch operand']
  %s0 = inlined_call_operand.vmem [shape: bf16[16,128], index: 0, kind: input, shape index: {}, may-alias: {0,7}]
  %s1 = inlined_call_operand.vmem [shape: bf16[128,256], index: 1, kind: input, shape index: {}]
  %s2 = inlined_call_operand.vmem [shape: f32[1,256], index: 2, kind: input, shape index: {}]
  %s3 = inlined_call_operand.vmem [shape: bf16[256,128], index: 3, kind: input, shape index: {}]
  %s4 = inlined_call_operand.vmem [shape: f32[1,128], index: 4, kind: input, shape index: {}]
  %s5 = inlined_call_operand.vmem [shape: f32[1,128], index: 5, kind: input, shape index: {}]
  %s6 = inlined_call_operand.vmem [shape: f32[1,128], index: 6, kind: input, shape index: {}]
  %s7 = inlined_call_operand.vmem [shape: bf16[16,128], index: 7, kind: input, shape index: {}, may-alias: {0,7}]
  %s8 = inlined_call_operand.vmem [shape: bf16[16,128], index: 8, kind: output, shape index: {}]
  %s9 = sld [smem:[#allocation0]]
  $region42: #{transformer_decoder_forward.24} parent=0
    _
  %s11 = ssub.s32 1, %s9
  %s12 = scalar_select 0, %s11, %s9
  // Predicated region
  $region2: #{transformer_decoder_forward.24} parent=0 // pred_check
    _
  $region3: #{transformer_decoder_forward.24} parent=0 // pred_check_branch
    %14 = sbr.rel (0) target = $region5
  $region4: #{transformer_decoder_forward.24} parent=0 // pred_region
    _
  $region5: #{transformer_decoder_forward.24} parent=0 // pred_fallthru
    _
  // Predicated region
  $region6: #{transformer_decoder_forward.24} parent=0 // pred_check
    _
  $region7: #{transformer_decoder_forward.24} parent=0 // pred_check_branch
    %16 = sbr.rel (0) target = $region9
  $region8: #{transformer_decoder_forward.24} parent=0 // pred_region
    _
  $region9: #{transformer_decoder_forward.24} parent=0 // pred_fallthru
    _
  // Predicated region
  $region10: #{transformer_decoder_forward.24} parent=0 // pred_check
    _
  $region11: #{transformer_decoder_forward.24} parent=0 // pred_check_branch
    %18 = sbr.rel (0) target = $region13
  $region12: #{transformer_decoder_forward.24} parent=0 // pred_region
    _
  $region13: #{transformer_decoder_forward.24} parent=0 // pred_fallthru
    _
  // Predicated region
  $region14: #{transformer_decoder_forward.24} parent=0 // pred_check
    _
  $region15: #{transformer_decoder_forward.24} parent=0 // pred_check_branch
    %20 = sbr.rel (0) target = $region17
  $region16: #{transformer_decoder_forward.24} parent=0 // pred_region
    _
  $region17: #{transformer_decoder_forward.24} parent=0 // pred_fallthru
    _
  // Predicated region
  $region18: #{transformer_decoder_forward.24} parent=0 // pred_check
    _
  $region19: #{transformer_decoder_forward.24} parent=0 // pred_check_branch
    %22 = sbr.rel (0) target = $region21
  $region20: #{transformer_decoder_forward.24} parent=0 // pred_region
    _
  $region21: #{transformer_decoder_forward.24} parent=0 // pred_fallthru
    _
  // Predicated region
  $region22: #{transformer_decoder_forward.24} parent=0 // pred_check
    _
  $region23: #{transformer_decoder_forward.24} parent=0 // pred_check_branch
    %24 = sbr.rel (0) target = $region25
  $region24: #{transformer_decoder_forward.24} parent=0 // pred_region
    _
  $region25: #{transformer_decoder_forward.24} parent=0 // pred_fallthru
    _
  // Predicated region
  $region26: #{transformer_decoder_forward.24} parent=0 // pred_check
    _
  $region27: #{transformer_decoder_forward.24} parent=0 // pred_check_branch
    %26 = sbr.rel (0) target = $region29
  $region28: #{transformer_decoder_forward.24} parent=0 // pred_region
    _
  $region29: #{transformer_decoder_forward.24} parent=0 // pred_fallthru
    _
  // Predicated region
  $region30: #{transformer_decoder_forward.24} parent=0 // pred_check
    _
  $region31: #{transformer_decoder_forward.24} parent=0 // pred_check_branch
    %28 = sbr.rel (0) target = $region33
  $region32: #{transformer_decoder_forward.24} parent=0 // pred_region
    _
  $region33: #{transformer_decoder_forward.24} parent=0 // pred_fallthru
    _
  %v30 = vld [vmem:[%s0] sm:$0xf]
  %v31 = vld [vmem:[%s0 + $0x4] sm:$0xf]
  %v32 = vunpack.c.l.bf16 %v30
  %v33 = vunpack.c.l.bf16 %v31
  %34 = vadd.xlane.f32.xlu0 %v32
  %v35 = vpop.xlane.xlu0 %34
  %36 = vadd.xlane.f32.xlu0 %v33
  %v37 = vpop.xlane.xlu0 %36
  %v38 = vrcp.pop 128.0
  %v39 = vmul.f32 %v35, %v38
  %v40 = vmul.f32 %v37, %v38
  %v41 = vsub.f32 %v32, %v39
  %v42 = vsub.f32 %v33, %v40
  %v43 = vmul.f32 %v41, %v41
  %v44 = vmul.f32 %v42, %v42
  %45 = vadd.xlane.f32.xlu0 %v43
  %v46 = vpop.xlane.xlu0 %45
  %47 = vadd.xlane.f32.xlu0 %v44
  %v48 = vpop.xlane.xlu0 %47
  %v49 = vmul.f32 %v46, 0.007874016
  %v50 = vmul.f32 %v48, 0.007874016
  %v51 = vrsqrt.pop %v49
  %v52 = vmul.f32 %v49, %v51
  %vm53 = vcmp.eq.f32.partialorder %v49, inf
  %v54 = vsel %vm53, %v49, %v52
  %vm55 = vcmp.eq.f32.partialorder %v49, 0.0
  %v56 = vand.u32 %v49, 2147483648
  %v57 = vsel %vm55, %v56, %v54
  %v58 = vrsqrt.pop %v50
  %v59 = vmul.f32 %v50, %v58
  %vm60 = vcmp.eq.f32.partialorder %v50, inf
  %v61 = vsel %vm60, %v50, %v59
  %vm62 = vcmp.eq.f32.partialorder %v50, 0.0
  %v63 = vand.u32 %v50, 2147483648
  %v64 = vsel %vm62, %v63, %v61
  %v65 = vadd.f32 %v57, 1e-06
  %v66 = vadd.f32 %v64, 1e-06
  %v67 = vrcp.pop %v65
  %v68 = vrcp.pop %v66
  %v69 = vld [vmem:[%s5] sm:$0x1]
  %v71 = vlaneseq
  %v72 = vshrl.u32 %v71, 7
  %v73 = vsub.s32 0, %v72
  %v74 = vrot.slane %v69, %v73
  %v76 = vmul.f32 %v74, %v41
  %v77 = vmul.f32 %v74, %v42
  %v78 = vmul.f32 %v76, %v67
  %v79 = vmul.f32 %v77, %v68
  %v80 = vld [vmem:[%s6] sm:$0x1]
  %v82 = vlaneseq
  %v83 = vshrl.u32 %v82, 7
  %v84 = vsub.s32 0, %v83
  %v85 = vrot.slane %v80, %v84
  %v87 = vadd.f32 %v78, %v85
  %v88 = vadd.f32 %v79, %v85
  %v89 = vpack.c.bf16 %v88, %v87
  %v90 = vld [vmem:[%s1] sm:$0xff]
  %v91 = vld [vmem:[%s1 + $0x8] sm:$0xff]
  %v92 = vld [vmem:[%s1 + $0x10] sm:$0xff]
  %v93 = vld [vmem:[%s1 + $0x18] sm:$0xff]
  %v94 = vld [vmem:[%s1 + $0x20] sm:$0xff]
  %v95 = vld [vmem:[%s1 + $0x28] sm:$0xff]
  %v96 = vld [vmem:[%s1 + $0x30] sm:$0xff]
  %v97 = vld [vmem:[%s1 + $0x38] sm:$0xff]
  %v98 = vld [vmem:[%s1 + $0x40] sm:$0xff]
  %v99 = vld [vmem:[%s1 + $0x48] sm:$0xff]
  %v100 = vld [vmem:[%s1 + $0x50] sm:$0xff]
  %v101 = vld [vmem:[%s1 + $0x58] sm:$0xff]
  %v102 = vld [vmem:[%s1 + $0x60] sm:$0xff]
  %v103 = vld [vmem:[%s1 + $0x68] sm:$0xff]
  %v104 = vld [vmem:[%s1 + $0x70] sm:$0xff]
  %v105 = vld [vmem:[%s1 + $0x78] sm:$0xff]
  %v106 = vld [vmem:[%s2] sm:$0x3]
  %v108 = vlaneseq
  %v109 = vshrl.u32 %v108, 7
  %v110 = vsub.s32 0, %v109
  %v111 = vrot.slane %v106, %v110
  %v112 = vlaneseq
  %v113 = vshrl.u32 %v112, 7
  %v114 = vsub.s32 1, %v113
  %v115 = vrot.slane %v106, %v114
  %v134 = vunpack.c.l.b16 %v90
  %v135 = vunpack.c.h.b16 %v90
  %v136 = vunpack.c.l.b16 %v91
  %v137 = vunpack.c.h.b16 %v91
  %v138 = vunpack.c.l.b16 %v92
  %v139 = vunpack.c.h.b16 %v92
  %v140 = vunpack.c.l.b16 %v93
  %v141 = vunpack.c.h.b16 %v93
  %v142 = vunpack.c.l.b16 %v94
  %v143 = vunpack.c.h.b16 %v94
  %v144 = vunpack.c.l.b16 %v95
  %v145 = vunpack.c.h.b16 %v95
  %v146 = vunpack.c.l.b16 %v96
  %v147 = vunpack.c.h.b16 %v96
  %v148 = vunpack.c.l.b16 %v97
  %v149 = vunpack.c.h.b16 %v97
  %v150 = vunpack.c.l.b16 %v98
  %v151 = vunpack.c.h.b16 %v98
  %v152 = vunpack.c.l.b16 %v99
  %v153 = vunpack.c.h.b16 %v99
  %v154 = vunpack.c.l.b16 %v100
  %v155 = vunpack.c.h.b16 %v100
  %v156 = vunpack.c.l.b16 %v101
  %v157 = vunpack.c.h.b16 %v101
  %v158 = vunpack.c.l.b16 %v102
  %v159 = vunpack.c.h.b16 %v102
  %v160 = vunpack.c.l.b16 %v103
  %v161 = vunpack.c.h.b16 %v103
  %v162 = vunpack.c.l.b16 %v104
  %v163 = vunpack.c.h.b16 %v104
  %v164 = vunpack.c.l.b16 %v105
  %v165 = vunpack.c.h.b16 %v105
  %v166 = vpack.c.b16 %v136, %v134
  %v167 = vpack.c.b16 %v137, %v135
  %v168 = vpack.c.b16 %v140, %v138
  %v169 = vpack.c.b16 %v141, %v139
  %v170 = vpack.c.b16 %v144, %v142
  %v171 = vpack.c.b16 %v145, %v143
  %v172 = vpack.c.b16 %v148, %v146
  %v173 = vpack.c.b16 %v149, %v147
  %v174 = vpack.c.b16 %v152, %v150
  %v175 = vpack.c.b16 %v153, %v151
  %v176 = vpack.c.b16 %v156, %v154
  %v177 = vpack.c.b16 %v157, %v155
  %v178 = vpack.c.b16 %v160, %v158
  %v179 = vpack.c.b16 %v161, %v159
  %v180 = vpack.c.b16 %v164, %v162
  %v181 = vpack.c.b16 %v165, %v163
  %198 = vmatprep.subr.bf16.mxu0 %v167
  %199 = vmatpush1.bf16.msra.mxu0 %v166
  %200 = vmatprep.subr.bf16.mxu0 %v169
  %201 = vmatpush1.bf16.msra.mxu0 %v168
  %202 = vmatprep.subr.bf16.mxu0 %v171
  %203 = vmatpush1.bf16.msra.mxu0 %v170
  %204 = vmatprep.subr.bf16.mxu0 %v173
  %205 = vmatpush1.bf16.msra.mxu0 %v172
  %206 = vmatprep.subr.bf16.mxu0 %v175
  %207 = vmatpush1.bf16.msra.mxu0 %v174
  %208 = vmatprep.subr.bf16.mxu0 %v177
  %209 = vmatpush1.bf16.msra.mxu0 %v176
  %210 = vmatprep.subr.bf16.mxu0 %v179
  %211 = vmatpush1.bf16.msra.mxu0 %v178
  %212 = vmatprep.subr.bf16.mxu0 %v181
  %213 = vmatpush1.bf16.msra.mxu0 %v180
  %214 = vmatprep.subr.bf16.mxu0 0
  %215 = vmatpush1.bf16.msra.mxu0 0
  %216 = vmatprep.subr.bf16.mxu0 0
  %217 = vmatpush1.bf16.msra.mxu0 0
  %218 = vmatprep.subr.bf16.mxu0 0
  %219 = vmatpush1.bf16.msra.mxu0 0
  %220 = vmatprep.subr.bf16.mxu0 0
  %221 = vmatpush1.bf16.msra.mxu0 0
  %222 = vmatprep.subr.bf16.mxu0 0
  %223 = vmatpush1.bf16.msra.mxu0 0
  %224 = vmatprep.subr.bf16.mxu0 0
  %225 = vmatpush1.bf16.msra.mxu0 0
  %226 = vmatprep.subr.bf16.mxu0 0
  %227 = vmatpush1.bf16.msra.mxu0 0
  %228 = vmatprep.subr.bf16.mxu0 0
  %229 = vmatpush1.bf16.msra.mxu0 0
  %230 = vmatprep.mubr.bf16.mxu0 0
  %231 = vmatmul.mubr.bf16.gmra.mrb[0].mxu0 %v89
  %v232 = vpop.f32.mrb[0].mxu0
  %v233 = vadd.f32 %v111, %v232
  %v234 = vpop.f32.mrb[0].mxu0
  %v235 = vadd.f32 %v115, %v234
  %v236 = vpop.f32.mrb[0].mxu0
  %v237 = vadd.f32 %v111, %v236
  %v238 = vpop.f32.mrb[0].mxu0
  %v239 = vadd.f32 %v115, %v238
  %240 = vdwg.mxu0
  %v241 = vmax.f32 %v233, 0.0
  %v242 = vmax.f32 %v235, 0.0
  %v243 = vmax.f32 %v237, 0.0
  %v244 = vmax.f32 %v239, 0.0
  %v245 = vpack.c.bf16 %v243, %v241
  %v246 = vpack.c.bf16 %v244, %v242
  %v247 = vld [vmem:[%s3] sm:$0xf]
  %v248 = vld [vmem:[%s3 + $0x4] sm:$0xf]
  %v249 = vld [vmem:[%s3 + $0x8] sm:$0xf]
  %v250 = vld [vmem:[%s3 + $0xc] sm:$0xf]
  %v251 = vld [vmem:[%s3 + $0x10] sm:$0xf]
  %v252 = vld [vmem:[%s3 + $0x14] sm:$0xf]
  %v253 = vld [vmem:[%s3 + $0x18] sm:$0xf]
  %v254 = vld [vmem:[%s3 + $0x1c] sm:$0xf]
  %v255 = vld [vmem:[%s3 + $0x20] sm:$0xf]
  %v256 = vld [vmem:[%s3 + $0x24] sm:$0xf]
  %v257 = vld [vmem:[%s3 + $0x28] sm:$0xf]
  %v258 = vld [vmem:[%s3 + $0x2c] sm:$0xf]
  %v259 = vld [vmem:[%s3 + $0x30] sm:$0xf]
  %v260 = vld [vmem:[%s3 + $0x34] sm:$0xf]
  %v261 = vld [vmem:[%s3 + $0x38] sm:$0xf]
  %v262 = vld [vmem:[%s3 + $0x3c] sm:$0xf]
  %v263 = vld [vmem:[%s3 + $0x40] sm:$0xf]
  %v264 = vld [vmem:[%s3 + $0x44] sm:$0xf]
  %v265 = vld [vmem:[%s3 + $0x48] sm:$0xf]
  %v266 = vld [vmem:[%s3 + $0x4c] sm:$0xf]
  %v267 = vld [vmem:[%s3 + $0x50] sm:$0xf]
  %v268 = vld [vmem:[%s3 + $0x54] sm:$0xf]
  %v269 = vld [vmem:[%s3 + $0x58] sm:$0xf]
  %v270 = vld [vmem:[%s3 + $0x5c] sm:$0xf]
  %v271 = vld [vmem:[%s3 + $0x60] sm:$0xf]
  %v272 = vld [vmem:[%s3 + $0x64] sm:$0xf]
  %v273 = vld [vmem:[%s3 + $0x68] sm:$0xf]
  %v274 = vld [vmem:[%s3 + $0x6c] sm:$0xf]
  %v275 = vld [vmem:[%s3 + $0x70] sm:$0xf]
  %v276 = vld [vmem:[%s3 + $0x74] sm:$0xf]
  %v277 = vld [vmem:[%s3 + $0x78] sm:$0xf]
  %v278 = vld [vmem:[%s3 + $0x7c] sm:$0xf]
  %v279 = vld [vmem:[%s4] sm:$0x1]
  %v281 = vlaneseq
  %v282 = vshrl.u32 %v281, 7
  %v283 = vsub.s32 0, %v282
  %v284 = vrot.slane %v279, %v283
  %v318 = vunpack.c.l.b16 %v247
  %v319 = vunpack.c.l.b16 %v248
  %v320 = vunpack.c.l.b16 %v249
  %v321 = vunpack.c.l.b16 %v250
  %v322 = vunpack.c.l.b16 %v251
  %v323 = vunpack.c.l.b16 %v252
  %v324 = vunpack.c.l.b16 %v253
  %v325 = vunpack.c.l.b16 %v254
  %v326 = vunpack.c.l.b16 %v255
  %v327 = vunpack.c.l.b16 %v256
  %v328 = vunpack.c.l.b16 %v257
  %v329 = vunpack.c.l.b16 %v258
  %v330 = vunpack.c.l.b16 %v259
  %v331 = vunpack.c.l.b16 %v260
  %v332 = vunpack.c.l.b16 %v261
  %v333 = vunpack.c.l.b16 %v262
  %v334 = vunpack.c.l.b16 %v263
  %v335 = vunpack.c.l.b16 %v264
  %v336 = vunpack.c.l.b16 %v265
  %v337 = vunpack.c.l.b16 %v266
  %v338 = vunpack.c.l.b16 %v267
  %v339 = vunpack.c.l.b16 %v268
  %v340 = vunpack.c.l.b16 %v269
  %v341 = vunpack.c.l.b16 %v270
  %v342 = vunpack.c.l.b16 %v271
  %v343 = vunpack.c.l.b16 %v272
  %v344 = vunpack.c.l.b16 %v273
  %v345 = vunpack.c.l.b16 %v274
  %v346 = vunpack.c.l.b16 %v275
  %v347 = vunpack.c.l.b16 %v276
  %v348 = vunpack.c.l.b16 %v277
  %v349 = vunpack.c.l.b16 %v278
  %v350 = vpack.c.b16 %v319, %v318
  %v351 = vpack.c.b16 %v321, %v320
  %v352 = vpack.c.b16 %v323, %v322
  %v353 = vpack.c.b16 %v325, %v324
  %v354 = vpack.c.b16 %v327, %v326
  %v355 = vpack.c.b16 %v329, %v328
  %v356 = vpack.c.b16 %v331, %v330
  %v357 = vpack.c.b16 %v333, %v332
  %v358 = vpack.c.b16 %v335, %v334
  %v359 = vpack.c.b16 %v337, %v336
  %v360 = vpack.c.b16 %v339, %v338
  %v361 = vpack.c.b16 %v341, %v340
  %v362 = vpack.c.b16 %v343, %v342
  %v363 = vpack.c.b16 %v345, %v344
  %v364 = vpack.c.b16 %v347, %v346
  %v365 = vpack.c.b16 %v349, %v348
  %382 = vmatprep.subr.bf16.mxu0 0
  %383 = vmatpush1.bf16.msra.mxu0 %v350
  %384 = vmatprep.subr.bf16.mxu0 0
  %385 = vmatpush1.bf16.msra.mxu0 %v351
  %386 = vmatprep.subr.bf16.mxu0 0
  %387 = vmatpush1.bf16.msra.mxu0 %v352
  %388 = vmatprep.subr.bf16.mxu0 0
  %389 = vmatpush1.bf16.msra.mxu0 %v353
  %390 = vmatprep.subr.bf16.mxu0 0
  %391 = vmatpush1.bf16.msra.mxu0 %v354
  %392 = vmatprep.subr.bf16.mxu0 0
  %393 = vmatpush1.bf16.msra.mxu0 %v355
  %394 = vmatprep.subr.bf16.mxu0 0
  %395 = vmatpush1.bf16.msra.mxu0 %v356
  %396 = vmatprep.subr.bf16.mxu0 0
  %397 = vmatpush1.bf16.msra.mxu0 %v357
  %398 = vmatprep.subr.bf16.mxu0 0
  %399 = vmatpush1.bf16.msra.mxu0 %v358
  %400 = vmatprep.subr.bf16.mxu0 0
  %401 = vmatpush1.bf16.msra.mxu0 %v359
  %402 = vmatprep.subr.bf16.mxu0 0
  %403 = vmatpush1.bf16.msra.mxu0 %v360
  %404 = vmatprep.subr.bf16.mxu0 0
  %405 = vmatpush1.bf16.msra.mxu0 %v361
  %406 = vmatprep.subr.bf16.mxu0 0
  %407 = vmatpush1.bf16.msra.mxu0 %v362
  %408 = vmatprep.subr.bf16.mxu0 0
  %409 = vmatpush1.bf16.msra.mxu0 %v363
  %410 = vmatprep.subr.bf16.mxu0 0
  %411 = vmatpush1.bf16.msra.mxu0 %v364
  %412 = vmatprep.subr.bf16.mxu0 0
  %413 = vmatpush1.bf16.msra.mxu0 %v365
  %414 = vmatprep.mubr.bf16.mxu0 %v246
  %415 = vmatmul.mubr.bf16.gmra.mrb[0].mxu0 %v245
  %v416 = vpop.f32.mrb[0].mxu0
  %v417 = vadd.f32 %v284, %v416
  %v418 = vpop.f32.mrb[0].mxu0
  %v419 = vpop.f32.mrb[0].mxu0
  %v420 = vadd.f32 %v284, %v419
  %v421 = vpop.f32.mrb[0].mxu0
  %422 = vdwg.mxu0
  %v423 = vld [vmem:[%s7] sm:$0xf]
  %v424 = vld [vmem:[%s7 + $0x4] sm:$0xf]
  %v425 = vunpack.c.l.bf16 %v423
  %v426 = vunpack.c.l.bf16 %v424
  %v427 = vadd.f32 %v417, %v425
  %v428 = vadd.f32 %v420, %v426
  %v429 = vpack.c.bf16 %v428, %v427
  %v431 = vunpack.c.l.b16 %v429
  %v432 = vunpack.c.h.b16 %v429
  %v433 = vpack.c.b16 %v431, %v431
  %v434 = vpack.c.b16 %v432, %v432
  %437 = vst [vmem:[%s8] sm:$0xf] %v433
  %438 = vst [vmem:[%s8 + $0x4] sm:$0xf] %v434
  // Predicated region
  $region34: #{transformer_decoder_forward.24} parent=0 // pred_check
    _
  $region35: #{transformer_decoder_forward.24} parent=0 // pred_check_branch
    %440 = sbr.rel (0) target = $region37
  $region36: #{transformer_decoder_forward.24} parent=0 // pred_region
    _
  $region37: #{transformer_decoder_forward.24} parent=0 // pred_fallthru
    _
  // Predicated region
  $region38: #{transformer_decoder_forward.24} parent=0 // pred_check
    _
  $region39: #{transformer_decoder_forward.24} parent=0 // pred_check_branch
    %442 = sbr.rel (0) target = $region41
  $region40: #{transformer_decoder_forward.24} parent=0 // pred_region
    _
  $region41: #{transformer_decoder_forward.24} parent=0 // pred_fallthru
    _

</llo_original>
